<compile_context>
chip_gen: v6e
topology: v6e:2x2x1
jax: 0.10.0
libtpu: 0.0.40
codegen_flags: <defaults>
</compile_context>

<pallas_src>
import functools

import jax
import jax.numpy as jnp
from jax import lax
from jax.experimental import pallas as pl
from jax.experimental.pallas import tpu as pltpu

NEG_SLOPE = 0.01      # F.leaky_relu default
BN_EPS = 1e-5         # nn.BatchNorm1d default
NUM_LAYERS = 12
NEFILTERS = 24
FILTER_SIZE = 9
MERGE_FILTER_SIZE = 5


# ----------------------------------------------------------------------------- kernel
def _fused_conv_kernel(*refs, K, pad, hoff, TL, NB, Cin, Cout, nt,
                       preact, has_res, has_sc, tanh_out):
    """Fused (BN-affine -> leaky_relu ->) Conv1d(K, padding=K//2) [+ residual add]
    [+ fused 1x1 shortcut conv] [+ tanh] for one (batch-block, length-tile) grid step.

    refs (in order):
      x (NB, L, Cin) f32, scale (1, Cin), bias (1, Cin), w (K*Cin, Cout) bf16,
      b (1, Cout), [res (NB, TL, Cout)], [wsc (Cin, Cout) bf16, bsc (1, Cout)],
      o (NB, TL, Cout), [osc (NB, TL, Cout)],
      xp scratch (hoff + TL + pad, Cin) f32, [col scratch (TL, K*Cin) bf16]
    """
    i = 0
    x_ref = refs[i]; i += 1
    scale_ref = refs[i]; i += 1
    bias_ref = refs[i]; i += 1
    w_ref = refs[i]; i += 1
    b_ref = refs[i]; i += 1
    res_ref = None
    if has_res:
        res_ref = refs[i]; i += 1
    wsc_ref = bsc_ref = None
    if has_sc:
        wsc_ref = refs[i]; i += 1
        bsc_ref = refs[i]; i += 1
    o_ref = refs[i]; i += 1
    osc_ref = None
    if has_sc:
        osc_ref = refs[i]; i += 1
    xp_ref = refs[i]; i += 1
    col_ref = refs[i] if K > 1 else None

    t = pl.program_id(1)
    start = pl.multiple_of(t * TL, TL)

    # Hoisted loop-invariant loads (JAX does not CSE broadcasts inside unrolled loops).
    scale_v = scale_ref[...] if preact else None      # (1, Cin)
    bias_v = bias_ref[...] if preact else None        # (1, Cin)
    b_v = b_ref[...]                                  # (1, Cout)
    bsc_v = bsc_ref[...] if has_sc else None          # (1, Cout)

    def act(v):
        # Pre-activation stays in f32 (v5e has no bf16 VPU); cast happens at MXU input.
        v = v.astype(jnp.float32)
        if preact:
            v = v * scale_v + bias_v
            v = jnp.where(v >= 0, v, NEG_SLOPE * v)
        return v

    lo = hoff - pad   # first row of the zero-padded window inside xp_ref

    for nb in range(NB):
        # ---- stage 0: pre-activated, zero-padded window [start-pad, start+TL+pad).
        # Main window lands sublane-aligned at row `hoff`.
        xp_ref[hoff:hoff + TL, :] = act(x_ref[nb, pl.ds(start, TL), :])
        if pad > 0:
            zhalo = jnp.zeros((pad, Cin), jnp.float32)
            if nt == 1:
                xp_ref[lo:hoff, :] = zhalo
                xp_ref[hoff + TL:hoff + TL + pad, :] = zhalo
            else:
                @pl.when(t == 0)
                def _():
                    xp_ref[lo:hoff, :] = zhalo

                @pl.when(t > 0)
                def _():
                    # aligned 8-row load, keep the last `pad` rows
                    v = act(x_ref[nb, pl.ds(start - 8, 8), :])
                    xp_ref[lo:hoff, :] = v[8 - pad:, :]

                @pl.when(t == nt - 1)
                def _():
                    xp_ref[hoff + TL:hoff + TL + pad, :] = zhalo

                @pl.when(t < nt - 1)
                def _():
                    v = act(x_ref[nb, pl.ds(start + TL, 8), :])
                    xp_ref[hoff + TL:hoff + TL + pad, :] = v[:pad, :]

        # ---- stage 1: im2col slab (TL, K*Cin) in bf16 -> wide MXU contraction.
        if K > 1:
            for k in range(K):
                col_ref[:, k * Cin:(k + 1) * Cin] = (
                    xp_ref[lo + k:lo + k + TL, :].astype(jnp.bfloat16))
            slab = col_ref[...]
        else:
            slab = xp_ref[...].astype(jnp.bfloat16)   # (TL, Cin), pad == 0

        # ---- stage 2: one bf16 x bf16 -> f32 MXU matmul + fused epilogue.
        acc = jnp.dot(slab, w_ref[...], preferred_element_type=jnp.float32)
        acc = acc + b_v
        if has_res:
            acc = acc + res_ref[nb].astype(jnp.float32)
        if tanh_out:
            acc = jnp.tanh(acc)
        o_ref[nb] = acc.astype(o_ref.dtype)

        # ---- fused 1x1 shortcut conv on the same pre-activated input.
        if has_sc:
            xm = xp_ref[hoff:hoff + TL, :].astype(jnp.bfloat16)
            sc = jnp.dot(xm, wsc_ref[...], preferred_element_type=jnp.float32) + bsc_v
            osc_ref[nb] = sc.astype(osc_ref.dtype)


def fused_preact_conv1d(x, w, b, scale=None, bias=None, residual=None,
                        sc_w=None, sc_b=None, tanh_out=False):
    """x: (N, L, Cin) f32.  w: (K, Cin, Cout), b: (Cout,).
    Optional: folded-BN pre-activation (scale, bias per Cin), residual add (N, L, Cout),
    fused 1x1 shortcut conv (sc_w: (1, Cin, Cout), sc_b: (Cout,)), tanh on the output.
    Returns (N, L, Cout) f32, or (main, shortcut) when sc_w is given."""
    N, L, Cin = x.shape
    K = w.shape[0]
    Cout = w.shape[2]
    pad = K // 2
    hoff = 8 if pad > 0 else 0
    preact = scale is not None
    has_res = residual is not None
    has_sc = sc_w is not None

    # L-tiles of 256 rows (acc <= ~30 vregs); tiny deep layers fold the batch in instead.
    if L >= 256:
        TL, NB = 256, 1
    else:
        TL, NB = L, N
    nt = L // TL
    gn = N // NB

    if scale is None:
        scale = jnp.ones((Cin,), jnp.float32)
        bias = jnp.zeros((Cin,), jnp.float32)

    args = [x.astype(jnp.float32),
            scale.reshape(1, Cin).astype(jnp.float32),
            bias.reshape(1, Cin).astype(jnp.float32),
            w.reshape(K * Cin, Cout).astype(jnp.bfloat16),
            b.reshape(1, Cout).astype(jnp.float32)]
    in_specs = [
        pl.BlockSpec((NB, L, Cin), lambda n, t: (n, 0, 0)),   # full row, fetched once per n
        pl.BlockSpec((1, Cin), lambda n, t: (0, 0)),
        pl.BlockSpec((1, Cin), lambda n, t: (0, 0)),
        pl.BlockSpec((K * Cin, Cout), lambda n, t: (0, 0)),
        pl.BlockSpec((1, Cout), lambda n, t: (0, 0)),
    ]
    if has_res:
        args.append(residual.astype(jnp.float32))
        in_specs.append(pl.BlockSpec((NB, TL, Cout), lambda n, t: (n, t, 0)))
    if has_sc:
        args.append(sc_w.reshape(Cin, Cout).astype(jnp.bfloat16))
        args.append(sc_b.reshape(1, Cout).astype(jnp.float32))
        in_specs.append(pl.BlockSpec((Cin, Cout), lambda n, t: (0, 0)))
        in_specs.append(pl.BlockSpec((1, Cout), lambda n, t: (0, 0)))

    out_shape = [jax.ShapeDtypeStruct((N, L, Cout), jnp.float32)]
    out_specs = [pl.BlockSpec((NB, TL, Cout), lambda n, t: (n, t, 0))]
    if has_sc:
        out_shape.append(jax.ShapeDtypeStruct((N, L, Cout), jnp.float32))
        out_specs.append(pl.BlockSpec((NB, TL, Cout), lambda n, t: (n, t, 0)))

    scratch = [pltpu.VMEM((hoff + TL + pad, Cin), jnp.float32)]
    if K > 1:
        scratch.append(pltpu.VMEM((TL, K * Cin), jnp.bfloat16))

    kernel = functools.partial(
        _fused_conv_kernel, K=K, pad=pad, hoff=hoff, TL=TL, NB=NB, Cin=Cin, Cout=Cout,
        nt=nt, preact=preact, has_res=has_res, has_sc=has_sc, tanh_out=tanh_out)

    outs = pl.pallas_call(
        kernel,
        out_shape=out_shape,
        grid_spec=pltpu.PrefetchScalarGridSpec(
            num_scalar_prefetch=0,
            grid=(gn, nt),
            in_specs=in_specs,
            out_specs=out_specs,
            scratch_shapes=scratch),
        compiler_params=pltpu.CompilerParams(
            dimension_semantics=("parallel", "parallel"),
            vmem_limit_bytes=32 * 1024 * 1024),
    )(*args)
    if has_sc:
        return outs[0], outs[1]
    return outs[0]


# ----------------------------------------------------------------------------- glue ops
def bn_fold(x, gamma, beta, eps=BN_EPS):
    """Training-mode BatchNorm1d batch statistics (mean/var over N and L) folded into a
    per-channel scale/bias that the Pallas kernel applies before its conv."""
    mean = jnp.mean(x, axis=(0, 1))
    var = jnp.mean((x - mean) ** 2, axis=(0, 1))
    scale = gamma / jnp.sqrt(var + eps)
    bias = beta - mean * scale
    return scale, bias


def upsample_linear_x2(x):
    """F.upsample(scale_factor=2, mode='linear', align_corners=False) on (N, L, C)."""
    left = jnp.concatenate([x[:, :1], x[:, :-1]], axis=1)    # x[j-1], edge-clamped
    right = jnp.concatenate([x[:, 1:], x[:, -1:]], axis=1)   # x[j+1], edge-clamped
    even = 0.25 * left + 0.75 * x                            # out[2j]
    odd = 0.75 * x + 0.25 * right                            # out[2j+1]
    out = jnp.stack([even, odd], axis=2)                     # (N, L, 2, C)
    return out.reshape(x.shape[0], 2 * x.shape[1], x.shape[2])


def basic_block_forward(x, p):
    # Pre-activation residual block; shortcut conv and residual add are fused into the
    # conv kernels (shortcut shares conv1's pre-activated input, add rides on conv2).
    s1, b1 = bn_fold(x, p['bn1_gamma'], p['bn1_beta'])
    if 'sc_w' in p:
        h, sc = fused_preact_conv1d(x, p['conv1_w'], p['conv1_b'], scale=s1, bias=b1,
                                    sc_w=p['sc_w'], sc_b=p['sc_b'])
    else:
        h = fused_preact_conv1d(x, p['conv1_w'], p['conv1_b'], scale=s1, bias=b1)
        sc = x
    s2, b2 = bn_fold(h, p['bn2_gamma'], p['bn2_beta'])
    return fused_preact_conv1d(h, p['conv2_w'], p['conv2_b'], scale=s2, bias=b2,
                               residual=sc)


def resv2unetv2_forward(x_ncl, params):
    # x_ncl: (N, 1, L)  (PyTorch NCW)
    x = jnp.transpose(x_ncl, (0, 2, 1)).astype(jnp.float32)   # -> (N, L, 1)
    x = fused_preact_conv1d(x, params['first_w'], params['first_b'])      # self.first
    inp = x
    skips = []
    for i in range(NUM_LAYERS):
        x = basic_block_forward(x, params['enc'][i])                      # encoder[i]
        skips.append(x)
        x = x[:, ::2, :]                                                  # x[:, :, ::2]
    x = basic_block_forward(x, params['mid'])                             # self.middle
    for i in range(NUM_LAYERS):
        x = upsample_linear_x2(x)                                         # F.upsample x2
        x = x + skips[NUM_LAYERS - 1 - i]
        x = basic_block_forward(x, params['dec'][i])                      # decoder[i]
    x = x + inp
    s, b = bn_fold(x, params['outbn_gamma'], params['outbn_beta'])
    y = fused_preact_conv1d(x, params['out_w'], params['out_b'], scale=s, bias=b,
                            tanh_out=True)                                # outbn+lrelu+out+tanh
    return jnp.transpose(y, (0, 2, 1))                                    # back to (N, 1, L)


# ----------------------------------------------------------------------------- params
def _init_conv(key, cin, cout, k):
    bound = 1.0 / (cin * k) ** 0.5
    kw, kb = jax.random.split(key)
    w = jax.random.uniform(kw, (k, cin, cout), jnp.float32, -bound, bound)  # (K, Cin, Cout)
    b = jax.random.uniform(kb, (cout,), jnp.float32, -bound, bound)
    return w, b


def make_block_params(key, cin, cout, k):
    k1, k2, k3 = jax.random.split(key, 3)
    p = {
        'bn1_gamma': jnp.ones((cin,), jnp.float32), 'bn1_beta': jnp.zeros((cin,), jnp.float32),
        'bn2_gamma': jnp.ones((cout,), jnp.float32), 'bn2_beta': jnp.zeros((cout,), jnp.float32),
    }
    p['conv1_w'], p['conv1_b'] = _init_conv(k1, cin, cout, k)
    p['conv2_w'], p['conv2_b'] = _init_conv(k2, cout, cout, k)
    if cin != cout:
        p['sc_w'], p['sc_b'] = _init_conv(k3, cin, cout, 1)
    return p


def init_params(key):
    echannelin = [24] + [(i + 1) * NEFILTERS for i in range(NUM_LAYERS - 1)]
    echannelout = [(i + 1) * NEFILTERS for i in range(NUM_LAYERS)]
    dchannelin = echannelout[::-1]
    dchannelout = echannelin[::-1]
    keys = jax.random.split(key, 2 * NUM_LAYERS + 3)
    params = {}
    params['first_w'], params['first_b'] = _init_conv(keys[0], 1, 24, FILTER_SIZE)
    params['enc'] = [make_block_params(keys[1 + i], echannelin[i], echannelout[i], FILTER_SIZE)
                     for i in range(NUM_LAYERS)]
    params['dec'] = [make_block_params(keys[1 + NUM_LAYERS + i], dchannelin[i], dchannelout[i],
                                       MERGE_FILTER_SIZE)
                     for i in range(NUM_LAYERS)]
    params['mid'] = make_block_params(keys[1 + 2 * NUM_LAYERS], echannelout[-1], echannelout[-1],
                                      FILTER_SIZE)
    params['outbn_gamma'] = jnp.ones((NEFILTERS,), jnp.float32)
    params['outbn_beta'] = jnp.zeros((NEFILTERS,), jnp.float32)
    params['out_w'], params['out_b'] = _init_conv(keys[2 + 2 * NUM_LAYERS], NEFILTERS, 1, 1)
    return params


# ----------------------------------------------------------------------------- main
if __name__ == "__main__":
    key = jax.random.PRNGKey(0)
    pkey, xkey, ckey, rkey = jax.random.split(key, 4)

    # Correctness check of the fused kernel (preact + conv + residual + 1x1 shortcut)
    # against a lax reference built from the same bf16-rounded MXU operands.
    N0, L0, Cin0, Cout0, K0 = 2, 512, 24, 48, 9
    cx = jax.random.normal(ckey, (N0, L0, Cin0), jnp.float32)
    res = jax.random.normal(rkey, (N0, L0, Cout0), jnp.float32)
    cw, cb = _init_conv(jax.random.PRNGKey(42), Cin0, Cout0, K0)
    scw, scb = _init_conv(jax.random.PRNGKey(43), Cin0, Cout0, 1)
    cs = jnp.linspace(0.5, 1.5, Cin0, dtype=jnp.float32)
    cbi = jnp.linspace(-0.2, 0.2, Cin0, dtype=jnp.float32)

    got_h, got_sc = fused_preact_conv1d(cx, cw, cb, scale=cs, bias=cbi,
                                        residual=res, sc_w=scw, sc_b=scb)

    h = cx * cs + cbi
    h = jnp.where(h >= 0, h, NEG_SLOPE * h)
    hb = h.astype(jnp.bfloat16).astype(jnp.float32)
    wb = cw.astype(jnp.bfloat16).astype(jnp.float32)
    want = lax.conv_general_dilated(hb, wb, (1,), [(K0 // 2, K0 // 2)],
                                    dimension_numbers=('NWC', 'WIO', 'NWC'),
                                    precision=lax.Precision.HIGHEST) + cb + res
    want_sc = jnp.einsum('nlc,cd->nld', hb,
                         scw[0].astype(jnp.bfloat16).astype(jnp.float32),
                         precision=lax.Precision.HIGHEST) + scb
    assert jnp.allclose(got_h, want, atol=5e-3, rtol=5e-3), \
        float(jnp.max(jnp.abs(got_h - want)))
    assert jnp.allclose(got_sc, want_sc, atol=5e-3, rtol=5e-3), \
        float(jnp.max(jnp.abs(got_sc - want_sc)))

    # Full model.  L must be divisible by 2**12 so the 12 decimate/upsample stages match.
    N, L = 2, 4096
    params = init_params(pkey)
    x = jax.random.normal(xkey, (N, 1, L), jnp.float32)   # PyTorch-style (N, 1, L) input

    fwd = jax.jit(resv2unetv2_forward)
    y = jax.block_until_ready(fwd(x, params))

    assert y.shape == (N, 1, L), y.shape
    assert bool(jnp.all(jnp.isfinite(y)))
    assert bool(jnp.all(jnp.abs(y) <= 1.0))  # tanh output range
    print("KERNEL_OK")
</pallas_src>

<mosaic_0001>
module attributes {stable_mosaic.version = 11 : i64} {
  func.func @_fused_conv_kernel(%arg0: i32, %arg1: i32, %arg2: memref<1x512x24xf32, #tpu.memory_space<vmem>>, %arg3: memref<1x24xf32, #tpu.memory_space<vmem>>, %arg4: memref<1x24xf32, #tpu.memory_space<vmem>>, %arg5: memref<216x48xbf16, #tpu.memory_space<vmem>>, %arg6: memref<1x48xf32, #tpu.memory_space<vmem>>, %arg7: memref<1x256x48xf32, #tpu.memory_space<vmem>>, %arg8: memref<24x48xbf16, #tpu.memory_space<vmem>>, %arg9: memref<1x48xf32, #tpu.memory_space<vmem>>, %arg10: memref<1x256x48xf32, #tpu.memory_space<vmem>>, %arg11: memref<1x256x48xf32, #tpu.memory_space<vmem>>, %arg12: memref<268x24xf32, #tpu.memory_space<vmem>>, %arg13: memref<256x216xbf16, #tpu.memory_space<vmem>>) attributes {dimension_semantics = [#tpu.dimension_semantics<parallel>, #tpu.dimension_semantics<parallel>], iteration_bounds = array<i64: 2, 2>, scalar_prefetch = 0 : i64, scratch_operands = 2 : i64, tpu.core_type = #tpu.core_type<tc>, window_params = [{transform_indices = @transform_0, window_bounds = array<i64: 1, 512, 24>}, {pipeline_mode = #tpu.pipeline_mode<synchronous>, transform_indices = @transform_1, window_bounds = array<i64: 1, 24>}, {pipeline_mode = #tpu.pipeline_mode<synchronous>, transform_indices = @transform_2, window_bounds = array<i64: 1, 24>}, {pipeline_mode = #tpu.pipeline_mode<synchronous>, transform_indices = @transform_3, window_bounds = array<i64: 216, 48>}, {pipeline_mode = #tpu.pipeline_mode<synchronous>, transform_indices = @transform_4, window_bounds = array<i64: 1, 48>}, {transform_indices = @transform_5, window_bounds = array<i64: 1, 256, 48>}, {pipeline_mode = #tpu.pipeline_mode<synchronous>, transform_indices = @transform_6, window_bounds = array<i64: 24, 48>}, {pipeline_mode = #tpu.pipeline_mode<synchronous>, transform_indices = @transform_7, window_bounds = array<i64: 1, 48>}, {transform_indices = @transform_8, window_bounds = array<i64: 1, 256, 48>}, {transform_indices = @transform_9, window_bounds = array<i64: 1, 256, 48>}]} {
    %c256_i32 = arith.constant 256 : i32
    %0 = arith.muli %arg1, %c256_i32 : i32
    %1 = tpu.assume_multiple %0, 256 : i32
    %c0 = arith.constant 0 : index
    %c0_0 = arith.constant 0 : index
    %2 = vector.load %arg3[%c0, %c0_0] : memref<1x24xf32, #tpu.memory_space<vmem>>, vector<1x24xf32>
    %c0_1 = arith.constant 0 : index
    %c0_2 = arith.constant 0 : index
    %3 = vector.load %arg4[%c0_1, %c0_2] : memref<1x24xf32, #tpu.memory_space<vmem>>, vector<1x24xf32>
    %c0_3 = arith.constant 0 : index
    %c0_4 = arith.constant 0 : index
    %4 = vector.load %arg6[%c0_3, %c0_4] : memref<1x48xf32, #tpu.memory_space<vmem>>, vector<1x48xf32>
    %c0_5 = arith.constant 0 : index
    %c0_6 = arith.constant 0 : index
    %5 = vector.load %arg9[%c0_5, %c0_6] : memref<1x48xf32, #tpu.memory_space<vmem>>, vector<1x48xf32>
    %c0_7 = arith.constant 0 : index
    %6 = arith.index_cast %1 : i32 to index
    %c0_8 = arith.constant 0 : index
    %7 = vector.load %arg2[%c0_7, %6, %c0_8] : memref<1x512x24xf32, #tpu.memory_space<vmem>>, vector<1x256x24xf32>
    %8 = vector.shape_cast %7 : vector<1x256x24xf32> to vector<256x24xf32>
    %9 = vector.broadcast %2 : vector<1x24xf32> to vector<256x24xf32>
    %10 = arith.mulf %8, %9 : vector<256x24xf32>
    %11 = vector.broadcast %3 : vector<1x24xf32> to vector<256x24xf32>
    %12 = arith.addf %10, %11 : vector<256x24xf32>
    %cst = arith.constant 0.000000e+00 : f32
    %13 = vector.broadcast %cst : f32 to vector<256x24xf32>
    %14 = arith.cmpf oge, %12, %13 : vector<256x24xf32>
    %cst_9 = arith.constant 0.00999999977 : f32
    %15 = vector.broadcast %cst_9 : f32 to vector<256x24xf32>
    %16 = arith.mulf %15, %12 : vector<256x24xf32>
    %17 = arith.select %14, %12, %16 : vector<256x24xi1>, vector<256x24xf32>
    %c8 = arith.constant 8 : index
    %c0_10 = arith.constant 0 : index
    %18 = vector.load %arg12[%c8, %c0_10] : memref<268x24xf32, #tpu.memory_space<vmem>>, vector<256x24xf32>
    tpu.vector_store %arg12[%c8, %c0_10], %17 {strides = array<i32>} : memref<268x24xf32, #tpu.memory_space<vmem>>, vector<256x24xf32>,
    %cst_11 = arith.constant 0.000000e+00 : f32
    %19 = vector.broadcast %cst_11 : f32 to vector<4x24xf32>
    %c0_i32 = arith.constant 0 : i32
    %20 = arith.cmpi eq, %arg1, %c0_i32 : i32
    %21 = arith.extui %20 : i1 to i32
    %c0_i32_12 = arith.constant 0 : i32
    %22 = arith.cmpi ne, %21, %c0_i32_12 : i32
    scf.if %22 {
      %c4_57 = arith.constant 4 : index
      %c0_58 = arith.constant 0 : index
      %79 = vector.load %arg12[%c4_57, %c0_58] : memref<268x24xf32, #tpu.memory_space<vmem>>, vector<4x24xf32>
      tpu.vector_store %arg12[%c4_57, %c0_58], %19 {strides = array<i32>} : memref<268x24xf32, #tpu.memory_space<vmem>>, vector<4x24xf32>,
    } else {
    }
    %c0_i32_13 = arith.constant 0 : i32
    %23 = arith.cmpi sgt, %arg1, %c0_i32_13 : i32
    %24 = arith.extui %23 : i1 to i32
    %c0_i32_14 = arith.constant 0 : i32
    %25 = arith.cmpi ne, %24, %c0_i32_14 : i32
    scf.if %25 {
      %c8_i32 = arith.constant 8 : i32
      %79 = arith.subi %1, %c8_i32 : i32
      %c0_57 = arith.constant 0 : index
      %80 = arith.index_cast %79 : i32 to index
      %c0_58 = arith.constant 0 : index
      %81 = vector.load %arg2[%c0_57, %80, %c0_58] : memref<1x512x24xf32, #tpu.memory_space<vmem>>, vector<1x8x24xf32>
      %82 = vector.shape_cast %81 : vector<1x8x24xf32> to vector<8x24xf32>
      %83 = vector.broadcast %2 : vector<1x24xf32> to vector<8x24xf32>
      %84 = arith.mulf %82, %83 : vector<8x24xf32>
      %85 = vector.broadcast %3 : vector<1x24xf32> to vector<8x24xf32>
      %86 = arith.addf %84, %85 : vector<8x24xf32>
      %cst_59 = arith.constant 0.000000e+00 : f32
      %87 = vector.broadcast %cst_59 : f32 to vector<8x24xf32>
      %88 = arith.cmpf oge, %86, %87 : vector<8x24xf32>
      %cst_60 = arith.constant 0.00999999977 : f32
      %89 = vector.broadcast %cst_60 : f32 to vector<8x24xf32>
      %90 = arith.mulf %89, %86 : vector<8x24xf32>
      %91 = arith.select %88, %86, %90 : vector<8x24xi1>, vector<8x24xf32>
      %92 = vector.extract_strided_slice %91 {offsets = [4, 0], sizes = [4, 24], strides = [1, 1]} : vector<8x24xf32> to vector<4x24xf32>
      %c4_61 = arith.constant 4 : index
      %c0_62 = arith.constant 0 : index
      %93 = vector.load %arg12[%c4_61, %c0_62] : memref<268x24xf32, #tpu.memory_space<vmem>>, vector<4x24xf32>
      tpu.vector_store %arg12[%c4_61, %c0_62], %92 {strides = array<i32>} : memref<268x24xf32, #tpu.memory_space<vmem>>, vector<4x24xf32>,
    } else {
    }
    %c1_i32 = arith.constant 1 : i32
    %26 = arith.cmpi eq, %arg1, %c1_i32 : i32
    %27 = arith.extui %26 : i1 to i32
    %c0_i32_15 = arith.constant 0 : i32
    %28 = arith.cmpi ne, %27, %c0_i32_15 : i32
    scf.if %28 {
      %c264 = arith.constant 264 : index
      %c0_57 = arith.constant 0 : index
      %79 = vector.load %arg12[%c264, %c0_57] : memref<268x24xf32, #tpu.memory_space<vmem>>, vector<4x24xf32>
      tpu.vector_store %arg12[%c264, %c0_57], %19 {strides = array<i32>} : memref<268x24xf32, #tpu.memory_space<vmem>>, vector<4x24xf32>,
    } else {
    }
    %c1_i32_16 = arith.constant 1 : i32
    %29 = arith.cmpi slt, %arg1, %c1_i32_16 : i32
    %30 = arith.extui %29 : i1 to i32
    %c0_i32_17 = arith.constant 0 : i32
    %31 = arith.cmpi ne, %30, %c0_i32_17 : i32
    scf.if %31 {
      %c256_i32_57 = arith.constant 256 : i32
      %79 = arith.addi %1, %c256_i32_57 : i32
      %c0_58 = arith.constant 0 : index
      %80 = arith.index_cast %79 : i32 to index
      %c0_59 = arith.constant 0 : index
      %81 = vector.load %arg2[%c0_58, %80, %c0_59] : memref<1x512x24xf32, #tpu.memory_space<vmem>>, vector<1x8x24xf32>
      %82 = vector.shape_cast %81 : vector<1x8x24xf32> to vector<8x24xf32>
      %83 = vector.broadcast %2 : vector<1x24xf32> to vector<8x24xf32>
      %84 = arith.mulf %82, %83 : vector<8x24xf32>
      %85 = vector.broadcast %3 : vector<1x24xf32> to vector<8x24xf32>
      %86 = arith.addf %84, %85 : vector<8x24xf32>
      %cst_60 = arith.constant 0.000000e+00 : f32
      %87 = vector.broadcast %cst_60 : f32 to vector<8x24xf32>
      %88 = arith.cmpf oge, %86, %87 : vector<8x24xf32>
      %cst_61 = arith.constant 0.00999999977 : f32
      %89 = vector.broadcast %cst_61 : f32 to vector<8x24xf32>
      %90 = arith.mulf %89, %86 : vector<8x24xf32>
      %91 = arith.select %88, %86, %90 : vector<8x24xi1>, vector<8x24xf32>
      %92 = vector.extract_strided_slice %91 {offsets = [0, 0], sizes = [4, 24], strides = [1, 1]} : vector<8x24xf32> to vector<4x24xf32>
      %c264 = arith.constant 264 : index
      %c0_62 = arith.constant 0 : index
      %93 = vector.load %arg12[%c264, %c0_62] : memref<268x24xf32, #tpu.memory_space<vmem>>, vector<4x24xf32>
      tpu.vector_store %arg12[%c264, %c0_62], %92 {strides = array<i32>} : memref<268x24xf32, #tpu.memory_space<vmem>>, vector<4x24xf32>,
    } else {
    }
    %c4 = arith.constant 4 : index
    %c0_18 = arith.constant 0 : index
    %32 = vector.load %arg12[%c4, %c0_18] : memref<268x24xf32, #tpu.memory_space<vmem>>, vector<256x24xf32>
    %33 = arith.truncf %32 : vector<256x24xf32> to vector<256x24xbf16>
    %c0_19 = arith.constant 0 : index
    %c0_20 = arith.constant 0 : index
    %34 = vector.load %arg13[%c0_19, %c0_20] : memref<256x216xbf16, #tpu.memory_space<vmem>>, vector<256x24xbf16>
    tpu.vector_store %arg13[%c0_19, %c0_20], %33 {strides = array<i32>} : memref<256x216xbf16, #tpu.memory_space<vmem>>, vector<256x24xbf16>,
    %c5 = arith.constant 5 : index
    %c0_21 = arith.constant 0 : index
    %35 = vector.load %arg12[%c5, %c0_21] : memref<268x24xf32, #tpu.memory_space<vmem>>, vector<256x24xf32>
    %36 = arith.truncf %35 : vector<256x24xf32> to vector<256x24xbf16>
    %c0_22 = arith.constant 0 : index
    %c24 = arith.constant 24 : index
    %37 = vector.load %arg13[%c0_22, %c24] : memref<256x216xbf16, #tpu.memory_space<vmem>>, vector<256x24xbf16>
    tpu.vector_store %arg13[%c0_22, %c24], %36 {strides = array<i32>} : memref<256x216xbf16, #tpu.memory_space<vmem>>, vector<256x24xbf16>,
    %c6 = arith.constant 6 : index
    %c0_23 = arith.constant 0 : index
    %38 = vector.load %arg12[%c6, %c0_23] : memref<268x24xf32, #tpu.memory_space<vmem>>, vector<256x24xf32>
    %39 = arith.truncf %38 : vector<256x24xf32> to vector<256x24xbf16>
    %c0_24 = arith.constant 0 : index
    %c48 = arith.constant 48 : index
    %40 = vector.load %arg13[%c0_24, %c48] : memref<256x216xbf16, #tpu.memory_space<vmem>>, vector<256x24xbf16>
    tpu.vector_store %arg13[%c0_24, %c48], %39 {strides = array<i32>} : memref<256x216xbf16, #tpu.memory_space<vmem>>, vector<256x24xbf16>,
    %c7 = arith.constant 7 : index
    %c0_25 = arith.constant 0 : index
    %41 = vector.load %arg12[%c7, %c0_25] : memref<268x24xf32, #tpu.memory_space<vmem>>, vector<256x24xf32>
    %42 = arith.truncf %41 : vector<256x24xf32> to vector<256x24xbf16>
    %c0_26 = arith.constant 0 : index
    %c72 = arith.constant 72 : index
    %43 = vector.load %arg13[%c0_26, %c72] : memref<256x216xbf16, #tpu.memory_space<vmem>>, vector<256x24xbf16>
    tpu.vector_store %arg13[%c0_26, %c72], %42 {strides = array<i32>} : memref<256x216xbf16, #tpu.memory_space<vmem>>, vector<256x24xbf16>,
    %c8_27 = arith.constant 8 : index
    %c0_28 = arith.constant 0 : index
    %44 = vector.load %arg12[%c8_27, %c0_28] : memref<268x24xf32, #tpu.memory_space<vmem>>, vector<256x24xf32>
    %45 = arith.truncf %44 : vector<256x24xf32> to vector<256x24xbf16>
    %c0_29 = arith.constant 0 : index
    %c96 = arith.constant 96 : index
    %46 = vector.load %arg13[%c0_29, %c96] : memref<256x216xbf16, #tpu.memory_space<vmem>>, vector<256x24xbf16>
    tpu.vector_store %arg13[%c0_29, %c96], %45 {strides = array<i32>} : memref<256x216xbf16, #tpu.memory_space<vmem>>, vector<256x24xbf16>,
    %c9 = arith.constant 9 : index
    %c0_30 = arith.constant 0 : index
    %47 = vector.load %arg12[%c9, %c0_30] : memref<268x24xf32, #tpu.memory_space<vmem>>, vector<256x24xf32>
    %48 = arith.truncf %47 : vector<256x24xf32> to vector<256x24xbf16>
    %c0_31 = arith.constant 0 : index
    %c120 = arith.constant 120 : index
    %49 = vector.load %arg13[%c0_31, %c120] : memref<256x216xbf16, #tpu.memory_space<vmem>>, vector<256x24xbf16>
    tpu.vector_store %arg13[%c0_31, %c120], %48 {strides = array<i32>} : memref<256x216xbf16, #tpu.memory_space<vmem>>, vector<256x24xbf16>,
    %c10 = arith.constant 10 : index
    %c0_32 = arith.constant 0 : index
    %50 = vector.load %arg12[%c10, %c0_32] : memref<268x24xf32, #tpu.memory_space<vmem>>, vector<256x24xf32>
    %51 = arith.truncf %50 : vector<256x24xf32> to vector<256x24xbf16>
    %c0_33 = arith.constant 0 : index
    %c144 = arith.constant 144 : index
    %52 = vector.load %arg13[%c0_33, %c144] : memref<256x216xbf16, #tpu.memory_space<vmem>>, vector<256x24xbf16>
    tpu.vector_store %arg13[%c0_33, %c144], %51 {strides = array<i32>} : memref<256x216xbf16, #tpu.memory_space<vmem>>, vector<256x24xbf16>,
    %c11 = arith.constant 11 : index
    %c0_34 = arith.constant 0 : index
    %53 = vector.load %arg12[%c11, %c0_34] : memref<268x24xf32, #tpu.memory_space<vmem>>, vector<256x24xf32>
    %54 = arith.truncf %53 : vector<256x24xf32> to vector<256x24xbf16>
    %c0_35 = arith.constant 0 : index
    %c168 = arith.constant 168 : index
    %55 = vector.load %arg13[%c0_35, %c168] : memref<256x216xbf16, #tpu.memory_space<vmem>>, vector<256x24xbf16>
    tpu.vector_store %arg13[%c0_35, %c168], %54 {strides = array<i32>} : memref<256x216xbf16, #tpu.memory_space<vmem>>, vector<256x24xbf16>,
    %c12 = arith.constant 12 : index
    %c0_36 = arith.constant 0 : index
    %56 = vector.load %arg12[%c12, %c0_36] : memref<268x24xf32, #tpu.memory_space<vmem>>, vector<256x24xf32>
    %57 = arith.truncf %56 : vector<256x24xf32> to vector<256x24xbf16>
    %c0_37 = arith.constant 0 : index
    %c192 = arith.constant 192 : index
    %58 = vector.load %arg13[%c0_37, %c192] : memref<256x216xbf16, #tpu.memory_space<vmem>>, vector<256x24xbf16>
    tpu.vector_store %arg13[%c0_37, %c192], %57 {strides = array<i32>} : memref<256x216xbf16, #tpu.memory_space<vmem>>, vector<256x24xbf16>,
    %c0_38 = arith.constant 0 : index
    %c0_39 = arith.constant 0 : index
    %59 = vector.load %arg13[%c0_38, %c0_39] : memref<256x216xbf16, #tpu.memory_space<vmem>>, vector<256x216xbf16>
    %c0_40 = arith.constant 0 : index
    %c0_41 = arith.constant 0 : index
    %60 = vector.load %arg5[%c0_40, %c0_41] : memref<216x48xbf16, #tpu.memory_space<vmem>>, vector<216x48xbf16>
    %cst_42 = arith.constant dense<0.000000e+00> : vector<256x48xf32>
    %61 = tpu.matmul %59, %60, %cst_42 {dimension_numbers = #tpu.dot_dimension_numbers<[1], [0], [0], [1], [0, 0, 1, 1], [], []>} : vector<256x216xbf16>, vector<216x48xbf16>, vector<256x48xf32> -> vector<256x48xf32>
    %62 = vector.broadcast %4 : vector<1x48xf32> to vector<256x48xf32>
    %63 = arith.addf %61, %62 : vector<256x48xf32>
    %c0_43 = arith.constant 0 : index
    %c0_44 = arith.constant 0 : index
    %c0_45 = arith.constant 0 : index
    %64 = vector.load %arg7[%c0_43, %c0_44, %c0_45] : memref<1x256x48xf32, #tpu.memory_space<vmem>>, vector<1x256x48xf32>
    %65 = vector.shape_cast %64 : vector<1x256x48xf32> to vector<256x48xf32>
    %66 = arith.addf %63, %65 : vector<256x48xf32>
    %c0_46 = arith.constant 0 : index
    %c0_47 = arith.constant 0 : index
    %c0_48 = arith.constant 0 : index
    %67 = vector.load %arg10[%c0_46, %c0_47, %c0_48] : memref<1x256x48xf32, #tpu.memory_space<vmem>>, vector<1x256x48xf32>
    %68 = vector.shape_cast %67 : vector<1x256x48xf32> to vector<256x48xf32>
    %69 = vector.shape_cast %66 : vector<256x48xf32> to vector<1x256x48xf32>
    tpu.vector_store %arg10[%c0_46, %c0_47, %c0_48], %69 {strides = array<i32>} : memref<1x256x48xf32, #tpu.memory_space<vmem>>, vector<1x256x48xf32>,
    %c8_49 = arith.constant 8 : index
    %c0_50 = arith.constant 0 : index
    %70 = vector.load %arg12[%c8_49, %c0_50] : memref<268x24xf32, #tpu.memory_space<vmem>>, vector<256x24xf32>
    %71 = arith.truncf %70 : vector<256x24xf32> to vector<256x24xbf16>
    %c0_51 = arith.constant 0 : index
    %c0_52 = arith.constant 0 : index
    %72 = vector.load %arg8[%c0_51, %c0_52] : memref<24x48xbf16, #tpu.memory_space<vmem>>, vector<24x48xbf16>
    %cst_53 = arith.constant dense<0.000000e+00> : vector<256x48xf32>
    %73 = tpu.matmul %71, %72, %cst_53 {dimension_numbers = #tpu.dot_dimension_numbers<[1], [0], [0], [1], [0, 0, 1, 1], [], []>} : vector<256x24xbf16>, vector<24x48xbf16>, vector<256x48xf32> -> vector<256x48xf32>
    %74 = vector.broadcast %5 : vector<1x48xf32> to vector<256x48xf32>
    %75 = arith.addf %73, %74 : vector<256x48xf32>
    %c0_54 = arith.constant 0 : index
    %c0_55 = arith.constant 0 : index
    %c0_56 = arith.constant 0 : index
    %76 = vector.load %arg11[%c0_54, %c0_55, %c0_56] : memref<1x256x48xf32, #tpu.memory_space<vmem>>, vector<1x256x48xf32>
    %77 = vector.shape_cast %76 : vector<1x256x48xf32> to vector<256x48xf32>
    %78 = vector.shape_cast %75 : vector<256x48xf32> to vector<1x256x48xf32>
    tpu.vector_store %arg11[%c0_54, %c0_55, %c0_56], %78 {strides = array<i32>} : memref<1x256x48xf32, #tpu.memory_space<vmem>>, vector<1x256x48xf32>,
    return
  }
  func.func @transform_0(%arg0: i32, %arg1: i32) -> (i32, i32, i32) {
    %c0_i32 = arith.constant 0 : i32
    %c0_i32_0 = arith.constant 0 : i32
    %c0_i32_1 = arith.constant 0 : i32
    return %arg0, %c0_i32, %c0_i32_0 : i32, i32, i32
  }
  func.func @transform_1(%arg0: i32, %arg1: i32) -> (i32, i32) {
    %c0_i32 = arith.constant 0 : i32
    %c0_i32_0 = arith.constant 0 : i32
    %c0_i32_1 = arith.constant 0 : i32
    return %c0_i32, %c0_i32_0 : i32, i32
  }
  func.func @transform_2(%arg0: i32, %arg1: i32) -> (i32, i32) {
    %c0_i32 = arith.constant 0 : i32
    %c0_i32_0 = arith.constant 0 : i32
    %c0_i32_1 = arith.constant 0 : i32
    return %c0_i32, %c0_i32_0 : i32, i32
  }
  func.func @transform_3(%arg0: i32, %arg1: i32) -> (i32, i32) {
    %c0_i32 = arith.constant 0 : i32
    %c0_i32_0 = arith.constant 0 : i32
    %c0_i32_1 = arith.constant 0 : i32
    return %c0_i32, %c0_i32_0 : i32, i32
  }
  func.func @transform_4(%arg0: i32, %arg1: i32) -> (i32, i32) {
    %c0_i32 = arith.constant 0 : i32
    %c0_i32_0 = arith.constant 0 : i32
    %c0_i32_1 = arith.constant 0 : i32
    return %c0_i32, %c0_i32_0 : i32, i32
  }
  func.func @transform_5(%arg0: i32, %arg1: i32) -> (i32, i32, i32) {
    %c0_i32 = arith.constant 0 : i32
    %c0_i32_0 = arith.constant 0 : i32
    return %arg0, %arg1, %c0_i32 : i32, i32, i32
  }
  func.func @transform_6(%arg0: i32, %arg1: i32) -> (i32, i32) {
    %c0_i32 = arith.constant 0 : i32
    %c0_i32_0 = arith.constant 0 : i32
    %c0_i32_1 = arith.constant 0 : i32
    return %c0_i32, %c0_i32_0 : i32, i32
  }
  func.func @transform_7(%arg0: i32, %arg1: i32) -> (i32, i32) {
    %c0_i32 = arith.constant 0 : i32
    %c0_i32_0 = arith.constant 0 : i32
    %c0_i32_1 = arith.constant 0 : i32
    return %c0_i32, %c0_i32_0 : i32, i32
  }
  func.func @transform_8(%arg0: i32, %arg1: i32) -> (i32, i32, i32) {
    %c0_i32 = arith.constant 0 : i32
    %c0_i32_0 = arith.constant 0 : i32
    return %arg0, %arg1, %c0_i32 : i32, i32, i32
  }
  func.func @transform_9(%arg0: i32, %arg1: i32) -> (i32, i32, i32) {
    %c0_i32 = arith.constant 0 : i32
    %c0_i32_0 = arith.constant 0 : i32
    return %arg0, %arg1, %c0_i32 : i32, i32, i32
  }
}

</mosaic_0001>

<llo_original>
// kernel: tpu_custom_call.1
$region0: #{tpu_custom_call.1}
  #allocation0 [shape = 'u32[]', space=smem, size = 0x4, offset = 0x4, fixed_abs, tag = 'smem constant byte address 0x4 - core index']
  #allocation1 [shape = 'u32[144,128]{1,0:T(1,128)}', space=vmem, size = 0x12000, scoped, tag = 'internal scratch']
  #allocation2 [shape = 'f32[268,24]{1,0:T(8,128)}', space=vmem, size = 0x22000, scoped, tag = 'scratch operand']
  #allocation3 [shape = 'bf16[256,216]{1,0:T(8,128)(2,1)}', space=vmem, size = 0x20000, scoped, tag = 'scratch operand']
  %s0 = inlined_call_operand.vmem [shape: f32[2,512,24], index: 0, kind: input, shape index: {}]
  %s1 = inlined_call_operand.vmem [shape: f32[1,24], index: 1, kind: input, shape index: {}]
  %s2 = inlined_call_operand.vmem [shape: f32[1,24], index: 2, kind: input, shape index: {}]
  %s3 = inlined_call_operand.vmem [shape: bf16[216,48], index: 3, kind: input, shape index: {}]
  %s4 = inlined_call_operand.vmem [shape: f32[1,48], index: 4, kind: input, shape index: {}]
  %s5 = inlined_call_operand.vmem [shape: f32[2,512,48], index: 5, kind: input, shape index: {}]
  %s6 = inlined_call_operand.vmem [shape: bf16[24,48], index: 6, kind: input, shape index: {}]
  %s7 = inlined_call_operand.vmem [shape: f32[1,48], index: 7, kind: input, shape index: {}]
  %s8 = inlined_call_operand.vmem [shape: f32[2,512,48], index: 8, kind: output, shape index: {0}]
  %s9 = inlined_call_operand.vmem [shape: f32[2,512,48], index: 9, kind: output, shape index: {1}]
  %10 = xla_tuple %s8, %s9
  %s11 = sld [smem:[#allocation0]]
  $region89: #{tpu_custom_call.1} parent=0
    _
  %s13 = ssub.s32 1, %s11
  %s14 = scalar_select 0, %s13, %s11
  loop: start=0, step=1, limit=6
  $region2: #{tpu_custom_call.1} parent=0 // loop_pre_header
    _
  $region3: #{tpu_custom_call.1} parent=0 // loop_header
    %s16 = sphi 0, %s20
    %p17 = scmp.ge.s32.totalorder %s16, 6
    %s23 = sphi 0, %s35
    %s24 = sphi 0, %s31
    %s25 = sphi 0, %s23
    %s26 = sphi 0, %s24
    %s27 = sphi 0, %s25
    %s28 = sphi 0, %s26
    %s38 = sphi 0, %s40
    %s41 = sphi 0, %s38
    %s42 = sphi 0, %s41
    %s58 = sphi 0, %s42
    %s62 = sphi 0, %s62
    %s64 = sphi 0, %s62
    %s65 = sphi 0, %s64
    %s79 = sphi 0, %s65
    %s83 = sphi 0, %s83
    %s85 = sphi 0, %s83
    %s86 = sphi 0, %s85
    %s100 = sphi 0, %s86
    %s104 = sphi 0, %s104
    %s106 = sphi 0, %s104
    %s107 = sphi 0, %s106
    %s121 = sphi 0, %s107
    %s125 = sphi 0, %s125
    %s127 = sphi 0, %s125
    %s128 = sphi 0, %s127
    %s142 = sphi 0, %s128
    %s150 = sphi 0, %s152
    %s153 = sphi 0, %s150
    %s154 = sphi 0, %s153
    %s170 = sphi 0, %s154
    %s174 = sphi 0, %s174
    %s176 = sphi 0, %s174
    %s177 = sphi 0, %s176
    %s191 = sphi 0, %s177
    %s195 = sphi 0, %s195
    %s197 = sphi 0, %s195
    %s198 = sphi 0, %s197
    %s212 = sphi 0, %s198
    %s220 = sphi 0, %s222
    %s223 = sphi 0, %s220
    %s224 = sphi 0, %s223
    %s240 = sphi 0, %s224
    %s248 = sphi 0, %s250
    %s251 = sphi 0, %s248
    %s252 = sphi 0, %s251
    %s268 = sphi 0, %s252
  $region4: #{tpu_custom_call.1} parent=0 // loop_header_branch
    %19 = sbr.rel (%p17) target = $region8
  $region5: #{tpu_custom_call.1} parent=0 // loop_body
    %s21 = ssub.s32 %s16, 1
    %s22 = ssub.s32 %s16, 2
    %s29 = sadd.s32 1, %s24
    %p30 = scmp.ge.s32.totalorder %s29, 2
    %s31 = scalar_select %p30, 0, %s29
    %s32 = sadd.s32 1, %s23
    %s33 = scalar_select %p30, %s32, %s23
    %p34 = scmp.ge.s32.totalorder %s33, 2
    %s35 = scalar_select %p34, 0, %s33
    %s36 = ssub.s32 %s23, %s35
    %p37 = scmp.eq.s32.totalorder %s36, 0
    %s39 = sadd.s32 %s38, 1
    %s40 = scalar_select %p37, %s38, %s39
    %p43 = pneg %p37
    %p44 = scmp.eq.s32.totalorder %s16, 3
    %p45 = por %p43, %p44
    %p46 = scmp.ne.s32.totalorder %s38, %s41
    %p47 = scmp.eq.s32.totalorder %s16, 0
    %p48 = por %p46, %p47
    %p49 = scmp.ne.s32.totalorder %s38, %s41
    %p50 = scmp.eq.s32.totalorder %s21, 3
    %p51 = por %p49, %p50
    %p52 = scmp.ne.s32.totalorder %s41, %s42
    %p53 = scmp.eq.s32.totalorder %s21, 0
    %p54 = por %p52, %p53
    %p55 = scmp.ne.s32.totalorder %s41, %s42
    %p56 = scmp.eq.s32.totalorder %s22, 3
    %p57 = por %p55, %p56
    %p59 = scmp.ne.s32.totalorder %s42, %s58
    %p60 = scmp.eq.s32.totalorder %s22, 0
    %p61 = por %p59, %p60
    %s63 = sadd.s32 %s62, 1
    %p66 = scmp.eq.s32.totalorder %s16, 3
    %p67 = scmp.ne.s32.totalorder %s62, %s64
    %p68 = scmp.eq.s32.totalorder %s16, 0
    %p69 = por %p67, %p68
    %p70 = scmp.ne.s32.totalorder %s62, %s64
    %p71 = scmp.eq.s32.totalorder %s21, 3
    %p72 = por %p70, %p71
    %p73 = scmp.ne.s32.totalorder %s64, %s65
    %p74 = scmp.eq.s32.totalorder %s21, 0
    %p75 = por %p73, %p74
    %p76 = scmp.ne.s32.totalorder %s64, %s65
    %p77 = scmp.eq.s32.totalorder %s22, 3
    %p78 = por %p76, %p77
    %p80 = scmp.ne.s32.totalorder %s65, %s79
    %p81 = scmp.eq.s32.totalorder %s22, 0
    %p82 = por %p80, %p81
    %s84 = sadd.s32 %s83, 1
    %p87 = scmp.eq.s32.totalorder %s16, 3
    %p88 = scmp.ne.s32.totalorder %s83, %s85
    %p89 = scmp.eq.s32.totalorder %s16, 0
    %p90 = por %p88, %p89
    %p91 = scmp.ne.s32.totalorder %s83, %s85
    %p92 = scmp.eq.s32.totalorder %s21, 3
    %p93 = por %p91, %p92
    %p94 = scmp.ne.s32.totalorder %s85, %s86
    %p95 = scmp.eq.s32.totalorder %s21, 0
    %p96 = por %p94, %p95
    %p97 = scmp.ne.s32.totalorder %s85, %s86
    %p98 = scmp.eq.s32.totalorder %s22, 3
    %p99 = por %p97, %p98
    %p101 = scmp.ne.s32.totalorder %s86, %s100
    %p102 = scmp.eq.s32.totalorder %s22, 0
    %p103 = por %p101, %p102
    %s105 = sadd.s32 %s104, 1
    %p108 = scmp.eq.s32.totalorder %s16, 3
    %p109 = scmp.ne.s32.totalorder %s104, %s106
    %p110 = scmp.eq.s32.totalorder %s16, 0
    %p111 = por %p109, %p110
    %p112 = scmp.ne.s32.totalorder %s104, %s106
    %p113 = scmp.eq.s32.totalorder %s21, 3
    %p114 = por %p112, %p113
    %p115 = scmp.ne.s32.totalorder %s106, %s107
    %p116 = scmp.eq.s32.totalorder %s21, 0
    %p117 = por %p115, %p116
    %p118 = scmp.ne.s32.totalorder %s106, %s107
    %p119 = scmp.eq.s32.totalorder %s22, 3
    %p120 = por %p118, %p119
    %p122 = scmp.ne.s32.totalorder %s107, %s121
    %p123 = scmp.eq.s32.totalorder %s22, 0
    %p124 = por %p122, %p123
    %s126 = sadd.s32 %s125, 1
    %p129 = scmp.eq.s32.totalorder %s16, 3
    %p130 = scmp.ne.s32.totalorder %s125, %s127
    %p131 = scmp.eq.s32.totalorder %s16, 0
    %p132 = por %p130, %p131
    %p133 = scmp.ne.s32.totalorder %s125, %s127
    %p134 = scmp.eq.s32.totalorder %s21, 3
    %p135 = por %p133, %p134
    %p136 = scmp.ne.s32.totalorder %s127, %s128
    %p137 = scmp.eq.s32.totalorder %s21, 0
    %p138 = por %p136, %p137
    %p139 = scmp.ne.s32.totalorder %s127, %s128
    %p140 = scmp.eq.s32.totalorder %s22, 3
    %p141 = por %p139, %p140
    %p143 = scmp.ne.s32.totalorder %s128, %s142
    %p144 = scmp.eq.s32.totalorder %s22, 0
    %p145 = por %p143, %p144
    %s146 = ssub.s32 %s23, %s35
    %s147 = ssub.s32 %s24, %s31
    %s148 = sor.u32 %s146, %s147
    %p149 = scmp.eq.s32.totalorder %s148, 0
    %s151 = sadd.s32 %s150, 1
    %s152 = scalar_select %p149, %s150, %s151
    %p155 = pneg %p149
    %p156 = scmp.eq.s32.totalorder %s16, 3
    %p157 = por %p155, %p156
    %p158 = scmp.ne.s32.totalorder %s150, %s153
    %p159 = scmp.eq.s32.totalorder %s16, 0
    %p160 = por %p158, %p159
    %p161 = scmp.ne.s32.totalorder %s150, %s153
    %p162 = scmp.eq.s32.totalorder %s21, 3
    %p163 = por %p161, %p162
    %p164 = scmp.ne.s32.totalorder %s153, %s154
    %p165 = scmp.eq.s32.totalorder %s21, 0
    %p166 = por %p164, %p165
    %p167 = scmp.ne.s32.totalorder %s153, %s154
    %p168 = scmp.eq.s32.totalorder %s22, 3
    %p169 = por %p167, %p168
    %p171 = scmp.ne.s32.totalorder %s154, %s170
    %p172 = scmp.eq.s32.totalorder %s22, 0
    %p173 = por %p171, %p172
    %s175 = sadd.s32 %s174, 1
    %p178 = scmp.eq.s32.totalorder %s16, 3
    %p179 = scmp.ne.s32.totalorder %s174, %s176
    %p180 = scmp.eq.s32.totalorder %s16, 0
    %p181 = por %p179, %p180
    %p182 = scmp.ne.s32.totalorder %s174, %s176
    %p183 = scmp.eq.s32.totalorder %s21, 3
    %p184 = por %p182, %p183
    %p185 = scmp.ne.s32.totalorder %s176, %s177
    %p186 = scmp.eq.s32.totalorder %s21, 0
    %p187 = por %p185, %p186
    %p188 = scmp.ne.s32.totalorder %s176, %s177
    %p189 = scmp.eq.s32.totalorder %s22, 3
    %p190 = por %p188, %p189
    %p192 = scmp.ne.s32.totalorder %s177, %s191
    %p193 = scmp.eq.s32.totalorder %s22, 0
    %p194 = por %p192, %p193
    %s196 = sadd.s32 %s195, 1
    %p199 = scmp.eq.s32.totalorder %s16, 3
    %p200 = scmp.ne.s32.totalorder %s195, %s197
    %p201 = scmp.eq.s32.totalorder %s16, 0
    %p202 = por %p200, %p201
    %p203 = scmp.ne.s32.totalorder %s195, %s197
    %p204 = scmp.eq.s32.totalorder %s21, 3
    %p205 = por %p203, %p204
    %p206 = scmp.ne.s32.totalorder %s197, %s198
    %p207 = scmp.eq.s32.totalorder %s21, 0
    %p208 = por %p206, %p207
    %p209 = scmp.ne.s32.totalorder %s197, %s198
    %p210 = scmp.eq.s32.totalorder %s22, 3
    %p211 = por %p209, %p210
    %p213 = scmp.ne.s32.totalorder %s198, %s212
    %p214 = scmp.eq.s32.totalorder %s22, 0
    %p215 = por %p213, %p214
    %s216 = ssub.s32 %s23, %s35
    %s217 = ssub.s32 %s24, %s31
    %s218 = sor.u32 %s216, %s217
    %p219 = scmp.eq.s32.totalorder %s218, 0
    %s221 = sadd.s32 %s220, 1
    %s222 = scalar_select %p219, %s220, %s221
    %p225 = pneg %p219
    %p226 = scmp.eq.s32.totalorder %s16, 3
    %p227 = por %p225, %p226
    %p228 = scmp.ne.s32.totalorder %s220, %s223
    %p229 = scmp.eq.s32.totalorder %s16, 0
    %p230 = por %p228, %p229
    %p231 = scmp.ne.s32.totalorder %s220, %s223
    %p232 = scmp.eq.s32.totalorder %s21, 3
    %p233 = por %p231, %p232
    %p234 = scmp.ne.s32.totalorder %s223, %s224
    %p235 = scmp.eq.s32.totalorder %s21, 0
    %p236 = por %p234, %p235
    %p237 = scmp.ne.s32.totalorder %s223, %s224
    %p238 = scmp.eq.s32.totalorder %s22, 3
    %p239 = por %p237, %p238
    %p241 = scmp.ne.s32.totalorder %s224, %s240
    %p242 = scmp.eq.s32.totalorder %s22, 0
    %p243 = por %p241, %p242
    %s244 = ssub.s32 %s23, %s35
    %s245 = ssub.s32 %s24, %s31
    %s246 = sor.u32 %s244, %s245
    %p247 = scmp.eq.s32.totalorder %s246, 0
    %s249 = sadd.s32 %s248, 1
    %s250 = scalar_select %p247, %s248, %s249
    %p253 = pneg %p247
    %p254 = scmp.eq.s32.totalorder %s16, 3
    %p255 = por %p253, %p254
    %p256 = scmp.ne.s32.totalorder %s248, %s251
    %p257 = scmp.eq.s32.totalorder %s16, 0
    %p258 = por %p256, %p257
    %p259 = scmp.ne.s32.totalorder %s248, %s251
    %p260 = scmp.eq.s32.totalorder %s21, 3
    %p261 = por %p259, %p260
    %p262 = scmp.ne.s32.totalorder %s251, %s252
    %p263 = scmp.eq.s32.totalorder %s21, 0
    %p264 = por %p262, %p263
    %p265 = scmp.ne.s32.totalorder %s251, %s252
    %p266 = scmp.eq.s32.totalorder %s22, 3
    %p267 = por %p265, %p266
    %p269 = scmp.ne.s32.totalorder %s252, %s268
    %p270 = scmp.eq.s32.totalorder %s22, 0
    %p271 = por %p269, %p270
    %p272 = scmp.le.s32.totalorder 1, %s16
    %p273 = scmp.lt.s32.totalorder %s16, 5
    %p274 = pnand %p272, %p273
    %p275 = pneg %p274
    // Predicated region
    $region9: #{tpu_custom_call.1} parent=5 // pred_check
      _
    $region10: #{tpu_custom_call.1} parent=5 // pred_check_branch
      %277 = sbr.rel (%p274) target = $region12
    $region11: #{tpu_custom_call.1} parent=5 // pred_region
      %s278 = ssub.s32 %s16, 1
      // Predicated region
      $region13: #{tpu_custom_call.1} parent=11 // pred_check
        %p279 = pneg %p75
      $region14: #{tpu_custom_call.1} parent=11 // pred_check_branch
        %281 = sbr.rel (%p279) target = $region16
      $region15: #{tpu_custom_call.1} parent=11 // pred_region
        _
      $region16: #{tpu_custom_call.1} parent=11 // pred_fallthru
        _
      // Predicated region
      $region17: #{tpu_custom_call.1} parent=11 // pred_check
        %p282 = pneg %p96
      $region18: #{tpu_custom_call.1} parent=11 // pred_check_branch
        %284 = sbr.rel (%p282) target = $region20
      $region19: #{tpu_custom_call.1} parent=11 // pred_region
        _
      $region20: #{tpu_custom_call.1} parent=11 // pred_fallthru
        _
      // Predicated region
      $region21: #{tpu_custom_call.1} parent=11 // pred_check
        %p285 = pneg %p117
      $region22: #{tpu_custom_call.1} parent=11 // pred_check_branch
        %287 = sbr.rel (%p285) target = $region24
      $region23: #{tpu_custom_call.1} parent=11 // pred_region
        _
      $region24: #{tpu_custom_call.1} parent=11 // pred_fallthru
        _
      // Predicated region
      $region25: #{tpu_custom_call.1} parent=11 // pred_check
        %p288 = pneg %p138
      $region26: #{tpu_custom_call.1} parent=11 // pred_check_branch
        %290 = sbr.rel (%p288) target = $region28
      $region27: #{tpu_custom_call.1} parent=11 // pred_region
        _
      $region28: #{tpu_custom_call.1} parent=11 // pred_fallthru
        _
      // Predicated region
      $region29: #{tpu_custom_call.1} parent=11 // pred_check
        %p291 = pneg %p187
      $region30: #{tpu_custom_call.1} parent=11 // pred_check_branch
        %293 = sbr.rel (%p291) target = $region32
      $region31: #{tpu_custom_call.1} parent=11 // pred_region
        _
      $region32: #{tpu_custom_call.1} parent=11 // pred_fallthru
        _
      // Predicated region
      $region33: #{tpu_custom_call.1} parent=11 // pred_check
        %p294 = pneg %p208
      $region34: #{tpu_custom_call.1} parent=11 // pred_check_branch
        %296 = sbr.rel (%p294) target = $region36
      $region35: #{tpu_custom_call.1} parent=11 // pred_region
        _
      $region36: #{tpu_custom_call.1} parent=11 // pred_fallthru
        _
    $region12: #{tpu_custom_call.1} parent=5 // pred_fallthru
      _
    %p297 = scmp.lt.s32.totalorder %s16, 4
    // Predicated region
    $region37: #{tpu_custom_call.1} parent=5 // pred_check
      %p298 = pneg %p297
    $region38: #{tpu_custom_call.1} parent=5 // pred_check_branch
      %300 = sbr.rel (%p298) target = $region40
    $region39: #{tpu_custom_call.1} parent=5 // pred_region
      // Predicated region
      $region41: #{tpu_custom_call.1} parent=39 // pred_check
        %p301 = pneg %p48
      $region42: #{tpu_custom_call.1} parent=39 // pred_check_branch
        %303 = sbr.rel (%p301) target = $region44
      $region43: #{tpu_custom_call.1} parent=39 // pred_region
        %p304 = scmp.lt.s32.totalorder %s23, 1
        %s305 = scalar_select %p304, %s23, 1
        %s306 = smul.addr %s305, 64
        %s307 = smul.addr %s306, 8
        %s308 = scalar_lea.vmem %s0, %s307
      $region44: #{tpu_custom_call.1} parent=39 // pred_fallthru
        _
      // Predicated region
      $region45: #{tpu_custom_call.1} parent=39 // pred_check
        %p309 = pneg %p160
      $region46: #{tpu_custom_call.1} parent=39 // pred_check_branch
        %311 = sbr.rel (%p309) target = $region48
      $region47: #{tpu_custom_call.1} parent=39 // pred_region
        %s312 = smul.u32 32, %s24
        %p313 = scmp.lt.s32.totalorder %s23, 1
        %s314 = scalar_select %p313, %s23, 1
        %p315 = scmp.lt.s32.totalorder %s312, 63
        %s316 = scalar_select %p315, %s312, 63
        %s317 = smul.addr %s314, 64
        %s318 = sadd.s32 %s316, %s317
        %s319 = smul.addr %s318, 8
        %s320 = scalar_lea.vmem %s5, %s319
        %s321 = smul.u32 32, %s24
      $region48: #{tpu_custom_call.1} parent=39 // pred_fallthru
        _
    $region40: #{tpu_custom_call.1} parent=5 // pred_fallthru
      _
    %p322 = scmp.le.s32.totalorder 1, %s16
    %p323 = scmp.lt.s32.totalorder %s16, 5
    %p324 = pnand %p322, %p323
    %p325 = pneg %p324
    // Predicated region
    $region49: #{tpu_custom_call.1} parent=5 // pred_check
      _
    $region50: #{tpu_custom_call.1} parent=5 // pred_check_branch
      %327 = sbr.rel (%p324) target = $region52
    $region51: #{tpu_custom_call.1} parent=5 // pred_region
      %s328 = ssub.s32 %s16, 1
      %p329 = scmp.lt.s32.totalorder %s25, 1
      %s330 = scalar_select %p329, %s25, 1
      %s331 = smul.addr %s330, 64
      %s332 = smul.addr %s331, 8
      %s333 = scalar_lea.vmem %s0, %s332
      %p334 = pneg %p54
      %p335 = pneg %p51
      %p336 = pneg %p75
      %p337 = pneg %p72
      %p338 = pneg %p96
      %p339 = pneg %p93
      %p340 = pneg %p117
      %p341 = pneg %p114
      %p342 = pneg %p138
      %p343 = pneg %p135
      %s344 = smul.u32 32, %s26
      %p345 = scmp.lt.s32.totalorder %s25, 1
      %s346 = scalar_select %p345, %s25, 1
      %p347 = scmp.lt.s32.totalorder %s344, 63
      %s348 = scalar_select %p347, %s344, 63
      %s349 = smul.addr %s346, 64
      %s350 = sadd.s32 %s348, %s349
      %s351 = smul.addr %s350, 8
      %s352 = scalar_lea.vmem %s5, %s351
      %p353 = pneg %p166
      %p354 = pneg %p163
      %p355 = pneg %p187
      %p356 = pneg %p184
      %p357 = pneg %p208
      %p358 = pneg %p205
      %p359 = pneg %p236
      %p360 = pneg %p233
      %s361 = smul.u32 32, %s26
      %p362 = scmp.lt.s32.totalorder %s25, 1
      %s363 = scalar_select %p362, %s25, 1
      %p364 = scmp.lt.s32.totalorder %s361, 63
      %s365 = scalar_select %p364, %s361, 63
      %s366 = smul.addr %s363, 64
      %s367 = sadd.s32 %s365, %s366
      %s368 = smul.addr %s367, 8
      %s369 = scalar_lea.vmem %s8, %s368
      %p370 = pneg %p264
      %p371 = pneg %p261
      %s372 = smul.u32 32, %s26
      %p373 = scmp.lt.s32.totalorder %s25, 1
      %s374 = scalar_select %p373, %s25, 1
      %p375 = scmp.lt.s32.totalorder %s372, 63
      %s376 = scalar_select %p375, %s372, 63
      %s377 = smul.addr %s374, 64
      %s378 = sadd.s32 %s376, %s377
      %s379 = smul.addr %s378, 8
      %s380 = scalar_lea.vmem %s9, %s379
      %p381 = scmp.lt.s32.totalorder %s25, 1
      %s382 = scalar_select %p381, %s25, 1
      %s383 = smul.addr %s382, 64
      %s384 = smul.addr %s383, 8
      %s385 = scalar_lea.vmem %s0, %s384
      %s386 = smul.u32 32, %s26
      %p387 = scmp.lt.s32.totalorder %s25, 1
      %s388 = scalar_select %p387, %s25, 1
      %p389 = scmp.lt.s32.totalorder %s386, 63
      %s390 = scalar_select %p389, %s386, 63
      %s391 = smul.addr %s388, 64
      %s392 = sadd.s32 %s390, %s391
      %s393 = smul.addr %s392, 8
      %s394 = scalar_lea.vmem %s5, %s393
      %s395 = smul.u32 32, %s26
      %s396 = smul.u32 32, %s26
      %p397 = scmp.lt.s32.totalorder %s25, 1
      %s398 = scalar_select %p397, %s25, 1
      %p399 = scmp.lt.s32.totalorder %s396, 63
      %s400 = scalar_select %p399, %s396, 63
      %s401 = smul.addr %s398, 64
      %s402 = sadd.s32 %s400, %s401
      %s403 = smul.addr %s402, 8
      %s404 = scalar_lea.vmem %s8, %s403
      %s405 = smul.u32 32, %s26
      %s406 = smul.u32 32, %s26
      %p407 = scmp.lt.s32.totalorder %s25, 1
      %s408 = scalar_select %p407, %s25, 1
      %p409 = scmp.lt.s32.totalorder %s406, 63
      %s410 = scalar_select %p409, %s406, 63
      %s411 = smul.addr %s408, 64
      %s412 = sadd.s32 %s410, %s411
      %s413 = smul.addr %s412, 8
      %s414 = scalar_lea.vmem %s9, %s413
      %s415 = smul.u32 32, %s26
      %s417 = smul.u32 %s26, 256
      %v418 = vld [vmem:[%s1] sm:$0x1]
      %v419 = vld [vmem:[%s2] sm:$0x1]
      %v420 = vld [vmem:[%s4] sm:$0x1]
      %v421 = vld [vmem:[%s7] sm:$0x1]
      %s422 = scalar_lea.vmem %s385, %s417
      %v423 = vld [vmem:[%s422] sm:$0xff]
      %v424 = vld [vmem:[%s422 + $0x8] sm:$0xff]
      %v425 = vld [vmem:[%s422 + $0x10] sm:$0xff]
      %v426 = vld [vmem:[%s422 + $0x18] sm:$0xff]
      %v427 = vld [vmem:[%s422 + $0x20] sm:$0xff]
      %v428 = vld [vmem:[%s422 + $0x28] sm:$0xff]
      %v429 = vld [vmem:[%s422 + $0x30] sm:$0xff]
      %v430 = vld [vmem:[%s422 + $0x38] sm:$0xff]
      %v431 = vld [vmem:[%s422 + $0x40] sm:$0xff]
      %v432 = vld [vmem:[%s422 + $0x48] sm:$0xff]
      %v433 = vld [vmem:[%s422 + $0x50] sm:$0xff]
      %v434 = vld [vmem:[%s422 + $0x58] sm:$0xff]
      %v435 = vld [vmem:[%s422 + $0x60] sm:$0xff]
      %v436 = vld [vmem:[%s422 + $0x68] sm:$0xff]
      %v437 = vld [vmem:[%s422 + $0x70] sm:$0xff]
      %v438 = vld [vmem:[%s422 + $0x78] sm:$0xff]
      %v439 = vld [vmem:[%s422 + $0x80] sm:$0xff]
      %v440 = vld [vmem:[%s422 + $0x88] sm:$0xff]
      %v441 = vld [vmem:[%s422 + $0x90] sm:$0xff]
      %v442 = vld [vmem:[%s422 + $0x98] sm:$0xff]
      %v443 = vld [vmem:[%s422 + $0xa0] sm:$0xff]
      %v444 = vld [vmem:[%s422 + $0xa8] sm:$0xff]
      %v445 = vld [vmem:[%s422 + $0xb0] sm:$0xff]
      %v446 = vld [vmem:[%s422 + $0xb8] sm:$0xff]
      %v447 = vld [vmem:[%s422 + $0xc0] sm:$0xff]
      %v448 = vld [vmem:[%s422 + $0xc8] sm:$0xff]
      %v449 = vld [vmem:[%s422 + $0xd0] sm:$0xff]
      %v450 = vld [vmem:[%s422 + $0xd8] sm:$0xff]
      %v451 = vld [vmem:[%s422 + $0xe0] sm:$0xff]
      %v452 = vld [vmem:[%s422 + $0xe8] sm:$0xff]
      %v453 = vld [vmem:[%s422 + $0xf0] sm:$0xff]
      %v454 = vld [vmem:[%s422 + $0xf8] sm:$0xff]
      %v456 = vlaneseq
      %v457 = vshrl.u32 %v456, 7
      %v458 = vsub.s32 0, %v457
      %v459 = vrot.slane %v418, %v458
      %v461 = vmul.f32 %v423, %v459
      %v462 = vmul.f32 %v424, %v459
      %v463 = vmul.f32 %v425, %v459
      %v464 = vmul.f32 %v426, %v459
      %v465 = vmul.f32 %v427, %v459
      %v466 = vmul.f32 %v428, %v459
      %v467 = vmul.f32 %v429, %v459
      %v468 = vmul.f32 %v430, %v459
      %v469 = vmul.f32 %v431, %v459
      %v470 = vmul.f32 %v432, %v459
      %v471 = vmul.f32 %v433, %v459
      %v472 = vmul.f32 %v434, %v459
      %v473 = vmul.f32 %v435, %v459
      %v474 = vmul.f32 %v436, %v459
      %v475 = vmul.f32 %v437, %v459
      %v476 = vmul.f32 %v438, %v459
      %v477 = vmul.f32 %v439, %v459
      %v478 = vmul.f32 %v440, %v459
      %v479 = vmul.f32 %v441, %v459
      %v480 = vmul.f32 %v442, %v459
      %v481 = vmul.f32 %v443, %v459
      %v482 = vmul.f32 %v444, %v459
      %v483 = vmul.f32 %v445, %v459
      %v484 = vmul.f32 %v446, %v459
      %v485 = vmul.f32 %v447, %v459
      %v486 = vmul.f32 %v448, %v459
      %v487 = vmul.f32 %v449, %v459
      %v488 = vmul.f32 %v450, %v459
      %v489 = vmul.f32 %v451, %v459
      %v490 = vmul.f32 %v452, %v459
      %v491 = vmul.f32 %v453, %v459
      %v492 = vmul.f32 %v454, %v459
      %v494 = vlaneseq
      %v495 = vshrl.u32 %v494, 7
      %v496 = vsub.s32 0, %v495
      %v497 = vrot.slane %v419, %v496
      %v499 = vadd.f32 %v461, %v497
      %v500 = vadd.f32 %v462, %v497
      %v501 = vadd.f32 %v463, %v497
      %v502 = vadd.f32 %v464, %v497
      %v503 = vadd.f32 %v465, %v497
      %v504 = vadd.f32 %v466, %v497
      %v505 = vadd.f32 %v467, %v497
      %v506 = vadd.f32 %v468, %v497
      %v507 = vadd.f32 %v469, %v497
      %v508 = vadd.f32 %v470, %v497
      %v509 = vadd.f32 %v471, %v497
      %v510 = vadd.f32 %v472, %v497
      %v511 = vadd.f32 %v473, %v497
      %v512 = vadd.f32 %v474, %v497
      %v513 = vadd.f32 %v475, %v497
      %v514 = vadd.f32 %v476, %v497
      %v515 = vadd.f32 %v477, %v497
      %v516 = vadd.f32 %v478, %v497
      %v517 = vadd.f32 %v479, %v497
      %v518 = vadd.f32 %v480, %v497
      %v519 = vadd.f32 %v481, %v497
      %v520 = vadd.f32 %v482, %v497
      %v521 = vadd.f32 %v483, %v497
      %v522 = vadd.f32 %v484, %v497
      %v523 = vadd.f32 %v485, %v497
      %v524 = vadd.f32 %v486, %v497
      %v525 = vadd.f32 %v487, %v497
      %v526 = vadd.f32 %v488, %v497
      %v527 = vadd.f32 %v489, %v497
      %v528 = vadd.f32 %v490, %v497
      %v529 = vadd.f32 %v491, %v497
      %v530 = vadd.f32 %v492, %v497
      %vm531 = vcmp.ge.f32.partialorder %v499, 0.0
      %vm532 = vcmp.ge.f32.partialorder %v500, 0.0
      %vm533 = vcmp.ge.f32.partialorder %v501, 0.0
      %vm534 = vcmp.ge.f32.partialorder %v502, 0.0
      %vm535 = vcmp.ge.f32.partialorder %v503, 0.0
      %vm536 = vcmp.ge.f32.partialorder %v504, 0.0
      %vm537 = vcmp.ge.f32.partialorder %v505, 0.0
      %vm538 = vcmp.ge.f32.partialorder %v506, 0.0
      %vm539 = vcmp.ge.f32.partialorder %v507, 0.0
      %vm540 = vcmp.ge.f32.partialorder %v508, 0.0
      %vm541 = vcmp.ge.f32.partialorder %v509, 0.0
      %vm542 = vcmp.ge.f32.partialorder %v510, 0.0
      %vm543 = vcmp.ge.f32.partialorder %v511, 0.0
      %vm544 = vcmp.ge.f32.partialorder %v512, 0.0
      %vm545 = vcmp.ge.f32.partialorder %v513, 0.0
      %vm546 = vcmp.ge.f32.partialorder %v514, 0.0
      %vm547 = vcmp.ge.f32.partialorder %v515, 0.0
      %vm548 = vcmp.ge.f32.partialorder %v516, 0.0
      %vm549 = vcmp.ge.f32.partialorder %v517, 0.0
      %vm550 = vcmp.ge.f32.partialorder %v518, 0.0
      %vm551 = vcmp.ge.f32.partialorder %v519, 0.0
      %vm552 = vcmp.ge.f32.partialorder %v520, 0.0
      %vm553 = vcmp.ge.f32.partialorder %v521, 0.0
      %vm554 = vcmp.ge.f32.partialorder %v522, 0.0
      %vm555 = vcmp.ge.f32.partialorder %v523, 0.0
      %vm556 = vcmp.ge.f32.partialorder %v524, 0.0
      %vm557 = vcmp.ge.f32.partialorder %v525, 0.0
      %vm558 = vcmp.ge.f32.partialorder %v526, 0.0
      %vm559 = vcmp.ge.f32.partialorder %v527, 0.0
      %vm560 = vcmp.ge.f32.partialorder %v528, 0.0
      %vm561 = vcmp.ge.f32.partialorder %v529, 0.0
      %vm562 = vcmp.ge.f32.partialorder %v530, 0.0
      %v563 = vmul.f32 %v499, 0.01
      %v564 = vmul.f32 %v500, 0.01
      %v565 = vmul.f32 %v501, 0.01
      %v566 = vmul.f32 %v502, 0.01
      %v567 = vmul.f32 %v503, 0.01
      %v568 = vmul.f32 %v504, 0.01
      %v569 = vmul.f32 %v505, 0.01
      %v570 = vmul.f32 %v506, 0.01
      %v571 = vmul.f32 %v507, 0.01
      %v572 = vmul.f32 %v508, 0.01
      %v573 = vmul.f32 %v509, 0.01
      %v574 = vmul.f32 %v510, 0.01
      %v575 = vmul.f32 %v511, 0.01
      %v576 = vmul.f32 %v512, 0.01
      %v577 = vmul.f32 %v513, 0.01
      %v578 = vmul.f32 %v514, 0.01
      %v579 = vmul.f32 %v515, 0.01
      %v580 = vmul.f32 %v516, 0.01
      %v581 = vmul.f32 %v517, 0.01
      %v582 = vmul.f32 %v518, 0.01
      %v583 = vmul.f32 %v519, 0.01
      %v584 = vmul.f32 %v520, 0.01
      %v585 = vmul.f32 %v521, 0.01
      %v586 = vmul.f32 %v522, 0.01
      %v587 = vmul.f32 %v523, 0.01
      %v588 = vmul.f32 %v524, 0.01
      %v589 = vmul.f32 %v525, 0.01
      %v590 = vmul.f32 %v526, 0.01
      %v591 = vmul.f32 %v527, 0.01
      %v592 = vmul.f32 %v528, 0.01
      %v593 = vmul.f32 %v529, 0.01
      %v594 = vmul.f32 %v530, 0.01
      %v595 = vsel %vm531, %v499, %v563
      %v596 = vsel %vm532, %v500, %v564
      %v597 = vsel %vm533, %v501, %v565
      %v598 = vsel %vm534, %v502, %v566
      %v599 = vsel %vm535, %v503, %v567
      %v600 = vsel %vm536, %v504, %v568
      %v601 = vsel %vm537, %v505, %v569
      %v602 = vsel %vm538, %v506, %v570
      %v603 = vsel %vm539, %v507, %v571
      %v604 = vsel %vm540, %v508, %v572
      %v605 = vsel %vm541, %v509, %v573
      %v606 = vsel %vm542, %v510, %v574
      %v607 = vsel %vm543, %v511, %v575
      %v608 = vsel %vm544, %v512, %v576
      %v609 = vsel %vm545, %v513, %v577
      %v610 = vsel %vm546, %v514, %v578
      %v611 = vsel %vm547, %v515, %v579
      %v612 = vsel %vm548, %v516, %v580
      %v613 = vsel %vm549, %v517, %v581
      %v614 = vsel %vm550, %v518, %v582
      %v615 = vsel %vm551, %v519, %v583
      %v616 = vsel %vm552, %v520, %v584
      %v617 = vsel %vm553, %v521, %v585
      %v618 = vsel %vm554, %v522, %v586
      %v619 = vsel %vm555, %v523, %v587
      %v620 = vsel %vm556, %v524, %v588
      %v621 = vsel %vm557, %v525, %v589
      %v622 = vsel %vm558, %v526, %v590
      %v623 = vsel %vm559, %v527, %v591
      %v624 = vsel %vm560, %v528, %v592
      %v625 = vsel %vm561, %v529, %v593
      %v626 = vsel %vm562, %v530, %v594
      %vm627 = vcmask 195584
      %628 = vst.msk [vmem:[#allocation2 + $0x8] sm:$0xff] %vm627, %v595
      %629 = vst.msk [vmem:[#allocation2 + $0x10] sm:$0xff] %vm627, %v596
      %630 = vst.msk [vmem:[#allocation2 + $0x18] sm:$0xff] %vm627, %v597
      %631 = vst.msk [vmem:[#allocation2 + $0x20] sm:$0xff] %vm627, %v598
      %632 = vst.msk [vmem:[#allocation2 + $0x28] sm:$0xff] %vm627, %v599
      %633 = vst.msk [vmem:[#allocation2 + $0x30] sm:$0xff] %vm627, %v600
      %634 = vst.msk [vmem:[#allocation2 + $0x38] sm:$0xff] %vm627, %v601
      %635 = vst.msk [vmem:[#allocation2 + $0x40] sm:$0xff] %vm627, %v602
      %636 = vst.msk [vmem:[#allocation2 + $0x48] sm:$0xff] %vm627, %v603
      %637 = vst.msk [vmem:[#allocation2 + $0x50] sm:$0xff] %vm627, %v604
      %638 = vst.msk [vmem:[#allocation2 + $0x58] sm:$0xff] %vm627, %v605
      %639 = vst.msk [vmem:[#allocation2 + $0x60] sm:$0xff] %vm627, %v606
      %640 = vst.msk [vmem:[#allocation2 + $0x68] sm:$0xff] %vm627, %v607
      %641 = vst.msk [vmem:[#allocation2 + $0x70] sm:$0xff] %vm627, %v608
      %642 = vst.msk [vmem:[#allocation2 + $0x78] sm:$0xff] %vm627, %v609
      %643 = vst.msk [vmem:[#allocation2 + $0x80] sm:$0xff] %vm627, %v610
      %644 = vst.msk [vmem:[#allocation2 + $0x88] sm:$0xff] %vm627, %v611
      %645 = vst.msk [vmem:[#allocation2 + $0x90] sm:$0xff] %vm627, %v612
      %646 = vst.msk [vmem:[#allocation2 + $0x98] sm:$0xff] %vm627, %v613
      %647 = vst.msk [vmem:[#allocation2 + $0xa0] sm:$0xff] %vm627, %v614
      %648 = vst.msk [vmem:[#allocation2 + $0xa8] sm:$0xff] %vm627, %v615
      %649 = vst.msk [vmem:[#allocation2 + $0xb0] sm:$0xff] %vm627, %v616
      %650 = vst.msk [vmem:[#allocation2 + $0xb8] sm:$0xff] %vm627, %v617
      %651 = vst.msk [vmem:[#allocation2 + $0xc0] sm:$0xff] %vm627, %v618
      %652 = vst.msk [vmem:[#allocation2 + $0xc8] sm:$0xff] %vm627, %v619
      %653 = vst.msk [vmem:[#allocation2 + $0xd0] sm:$0xff] %vm627, %v620
      %654 = vst.msk [vmem:[#allocation2 + $0xd8] sm:$0xff] %vm627, %v621
      %655 = vst.msk [vmem:[#allocation2 + $0xe0] sm:$0xff] %vm627, %v622
      %656 = vst.msk [vmem:[#allocation2 + $0xe8] sm:$0xff] %vm627, %v623
      %657 = vst.msk [vmem:[#allocation2 + $0xf0] sm:$0xff] %vm627, %v624
      %658 = vst.msk [vmem:[#allocation2 + $0xf8] sm:$0xff] %vm627, %v625
      %659 = vst.msk [vmem:[#allocation2 + $0x100] sm:$0xff] %vm627, %v626
      %p660 = scmp.eq.s32.totalorder %s26, 0
      // Predicated region
      $region53: #{tpu_custom_call.1} parent=51 // pred_check
        %p661 = pneg %p660
      $region54: #{tpu_custom_call.1} parent=51 // pred_check_branch
        %663 = sbr.rel (%p661) target = $region56
      $region55: #{tpu_custom_call.1} parent=51 // pred_region
        %vm664 = vcmask 191488
        %665 = vst.msk [vmem:[#allocation2 + $0x4] sm:$0xf] %vm664, 0.0
      $region56: #{tpu_custom_call.1} parent=51 // pred_fallthru
        _
      %p666 = scmp.gt.s32.totalorder %s26, 0
      // Predicated region
      $region57: #{tpu_custom_call.1} parent=51 // pred_check
        %p667 = pneg %p666
      $region58: #{tpu_custom_call.1} parent=51 // pred_check_branch
        %669 = sbr.rel (%p667) target = $region60
      $region59: #{tpu_custom_call.1} parent=51 // pred_region
        %s670 = ssub.s32 %s417, 8
        %s671 = scalar_lea.vmem %s385, %s670
        %v672 = vld [vmem:[%s671] sm:$0xff]
        %v673 = vmul.f32 %v672, %v459
        %v674 = vadd.f32 %v673, %v497
        %vm675 = vcmp.ge.f32.partialorder %v674, 0.0
        %v676 = vmul.f32 %v674, 0.01
        %v677 = vsel %vm675, %v674, %v676
        %vm678 = vcmask 195588
        %679 = vst.msk [vmem:[#allocation2] sm:$0xf0] %vm678, %v677
      $region60: #{tpu_custom_call.1} parent=51 // pred_fallthru
        _
      %p680 = scmp.eq.s32.totalorder %s26, 1
      // Predicated region
      $region61: #{tpu_custom_call.1} parent=51 // pred_check
        %p681 = pneg %p680
      $region62: #{tpu_custom_call.1} parent=51 // pred_check_branch
        %683 = sbr.rel (%p681) target = $region64
      $region63: #{tpu_custom_call.1} parent=51 // pred_region
        %vm684 = vcmask 191488
        %685 = vst.msk [vmem:[#allocation2 + $0x108] sm:$0xf] %vm684, 0.0
      $region64: #{tpu_custom_call.1} parent=51 // pred_fallthru
        _
      %p686 = scmp.lt.s32.totalorder %s26, 1
      // Predicated region
      $region65: #{tpu_custom_call.1} parent=51 // pred_check
        %p687 = pneg %p686
      $region66: #{tpu_custom_call.1} parent=51 // pred_check_branch
        %689 = sbr.rel (%p687) target = $region68
      $region67: #{tpu_custom_call.1} parent=51 // pred_region
        %s690 = sadd.s32 %s417, 256
        %s691 = scalar_lea.vmem %s385, %s690
        %v692 = vld [vmem:[%s691] sm:$0xff]
        %v693 = vmul.f32 %v692, %v459
        %v694 = vadd.f32 %v693, %v497
        %vm695 = vcmp.ge.f32.partialorder %v694, 0.0
        %v696 = vmul.f32 %v694, 0.01
        %v697 = vsel %vm695, %v694, %v696
        %vm698 = vcmask 191488
        %699 = vst.msk [vmem:[#allocation2 + $0x108] sm:$0xf] %vm698, %v697
      $region68: #{tpu_custom_call.1} parent=51 // pred_fallthru
        _
      %v700 = vld [vmem:[#allocation2 + $0x4] sm:$0xff]
      %v701 = vld [vmem:[#allocation2 + $0xc] sm:$0xff]
      %v702 = vld [vmem:[#allocation2 + $0x14] sm:$0xff]
      %v703 = vld [vmem:[#allocation2 + $0x1c] sm:$0xff]
      %v704 = vld [vmem:[#allocation2 + $0x24] sm:$0xff]
      %v705 = vld [vmem:[#allocation2 + $0x2c] sm:$0xff]
      %v706 = vld [vmem:[#allocation2 + $0x34] sm:$0xff]
      %v707 = vld [vmem:[#allocation2 + $0x3c] sm:$0xff]
      %v708 = vld [vmem:[#allocation2 + $0x44] sm:$0xff]
      %v709 = vld [vmem:[#allocation2 + $0x4c] sm:$0xff]
      %v710 = vld [vmem:[#allocation2 + $0x54] sm:$0xff]
      %v711 = vld [vmem:[#allocation2 + $0x5c] sm:$0xff]
      %v712 = vld [vmem:[#allocation2 + $0x64] sm:$0xff]
      %v713 = vld [vmem:[#allocation2 + $0x6c] sm:$0xff]
      %v714 = vld [vmem:[#allocation2 + $0x74] sm:$0xff]
      %v715 = vld [vmem:[#allocation2 + $0x7c] sm:$0xff]
      %v716 = vld [vmem:[#allocation2 + $0x84] sm:$0xff]
      %v717 = vld [vmem:[#allocation2 + $0x8c] sm:$0xff]
      %v718 = vld [vmem:[#allocation2 + $0x94] sm:$0xff]
      %v719 = vld [vmem:[#allocation2 + $0x9c] sm:$0xff]
      %v720 = vld [vmem:[#allocation2 + $0xa4] sm:$0xff]
      %v721 = vld [vmem:[#allocation2 + $0xac] sm:$0xff]
      %v722 = vld [vmem:[#allocation2 + $0xb4] sm:$0xff]
      %v723 = vld [vmem:[#allocation2 + $0xbc] sm:$0xff]
      %v724 = vld [vmem:[#allocation2 + $0xc4] sm:$0xff]
      %v725 = vld [vmem:[#allocation2 + $0xcc] sm:$0xff]
      %v726 = vld [vmem:[#allocation2 + $0xd4] sm:$0xff]
      %v727 = vld [vmem:[#allocation2 + $0xdc] sm:$0xff]
      %v728 = vld [vmem:[#allocation2 + $0xe4] sm:$0xff]
      %v729 = vld [vmem:[#allocation2 + $0xec] sm:$0xff]
      %v730 = vld [vmem:[#allocation2 + $0xf4] sm:$0xff]
      %v731 = vld [vmem:[#allocation2 + $0xfc] sm:$0xff]
      %v732 = vpack.c.bf16 %v701, %v700
      %v733 = vpack.c.bf16 %v703, %v702
      %v734 = vpack.c.bf16 %v705, %v704
      %v735 = vpack.c.bf16 %v707, %v706
      %v736 = vpack.c.bf16 %v709, %v708
      %v737 = vpack.c.bf16 %v711, %v710
      %v738 = vpack.c.bf16 %v713, %v712
      %v739 = vpack.c.bf16 %v715, %v714
      %v740 = vpack.c.bf16 %v717, %v716
      %v741 = vpack.c.bf16 %v719, %v718
      %v742 = vpack.c.bf16 %v721, %v720
      %v743 = vpack.c.bf16 %v723, %v722
      %v744 = vpack.c.bf16 %v725, %v724
      %v745 = vpack.c.bf16 %v727, %v726
      %v746 = vpack.c.bf16 %v729, %v728
      %v747 = vpack.c.bf16 %v731, %v730
      %v764 = vunpack.c.l.b16 %v732
      %v765 = vunpack.c.h.b16 %v732
      %v766 = vunpack.c.l.b16 %v733
      %v767 = vunpack.c.h.b16 %v733
      %v768 = vunpack.c.l.b16 %v734
      %v769 = vunpack.c.h.b16 %v734
      %v770 = vunpack.c.l.b16 %v735
      %v771 = vunpack.c.h.b16 %v735
      %v772 = vunpack.c.l.b16 %v736
      %v773 = vunpack.c.h.b16 %v736
      %v774 = vunpack.c.l.b16 %v737
      %v775 = vunpack.c.h.b16 %v737
      %v776 = vunpack.c.l.b16 %v738
      %v777 = vunpack.c.h.b16 %v738
      %v778 = vunpack.c.l.b16 %v739
      %v779 = vunpack.c.h.b16 %v739
      %v780 = vunpack.c.l.b16 %v740
      %v781 = vunpack.c.h.b16 %v740
      %v782 = vunpack.c.l.b16 %v741
      %v783 = vunpack.c.h.b16 %v741
      %v784 = vunpack.c.l.b16 %v742
      %v785 = vunpack.c.h.b16 %v742
      %v786 = vunpack.c.l.b16 %v743
      %v787 = vunpack.c.h.b16 %v743
      %v788 = vunpack.c.l.b16 %v744
      %v789 = vunpack.c.h.b16 %v744
      %v790 = vunpack.c.l.b16 %v745
      %v791 = vunpack.c.h.b16 %v745
      %v792 = vunpack.c.l.b16 %v746
      %v793 = vunpack.c.h.b16 %v746
      %v794 = vunpack.c.l.b16 %v747
      %v795 = vunpack.c.h.b16 %v747
      %v796 = vpack.c.b16 %v764, %v764
      %v797 = vpack.c.b16 %v765, %v765
      %v798 = vpack.c.b16 %v766, %v766
      %v799 = vpack.c.b16 %v767, %v767
      %v800 = vpack.c.b16 %v768, %v768
      %v801 = vpack.c.b16 %v769, %v769
      %v802 = vpack.c.b16 %v770, %v770
      %v803 = vpack.c.b16 %v771, %v771
      %v804 = vpack.c.b16 %v772, %v772
      %v805 = vpack.c.b16 %v773, %v773
      %v806 = vpack.c.b16 %v774, %v774
      %v807 = vpack.c.b16 %v775, %v775
      %v808 = vpack.c.b16 %v776, %v776
      %v809 = vpack.c.b16 %v777, %v777
      %v810 = vpack.c.b16 %v778, %v778
      %v811 = vpack.c.b16 %v779, %v779
      %v812 = vpack.c.b16 %v780, %v780
      %v813 = vpack.c.b16 %v781, %v781
      %v814 = vpack.c.b16 %v782, %v782
      %v815 = vpack.c.b16 %v783, %v783
      %v816 = vpack.c.b16 %v784, %v784
      %v817 = vpack.c.b16 %v785, %v785
      %v818 = vpack.c.b16 %v786, %v786
      %v819 = vpack.c.b16 %v787, %v787
      %v820 = vpack.c.b16 %v788, %v788
      %v821 = vpack.c.b16 %v789, %v789
      %v822 = vpack.c.b16 %v790, %v790
      %v823 = vpack.c.b16 %v791, %v791
      %v824 = vpack.c.b16 %v792, %v792
      %v825 = vpack.c.b16 %v793, %v793
      %v826 = vpack.c.b16 %v794, %v794
      %v827 = vpack.c.b16 %v795, %v795
      %vm860 = vcmask 191488
      %861 = vst.msk [vmem:[#allocation3] sm:$0xf] %vm860, %v796
      %862 = vst.msk [vmem:[#allocation3 + $0x8] sm:$0xf] %vm860, %v797
      %863 = vst.msk [vmem:[#allocation3 + $0x10] sm:$0xf] %vm860, %v798
      %864 = vst.msk [vmem:[#allocation3 + $0x18] sm:$0xf] %vm860, %v799
      %865 = vst.msk [vmem:[#allocation3 + $0x20] sm:$0xf] %vm860, %v800
      %866 = vst.msk [vmem:[#allocation3 + $0x28] sm:$0xf] %vm860, %v801
      %867 = vst.msk [vmem:[#allocation3 + $0x30] sm:$0xf] %vm860, %v802
      %868 = vst.msk [vmem:[#allocation3 + $0x38] sm:$0xf] %vm860, %v803
      %869 = vst.msk [vmem:[#allocation3 + $0x40] sm:$0xf] %vm860, %v804
      %870 = vst.msk [vmem:[#allocation3 + $0x48] sm:$0xf] %vm860, %v805
      %871 = vst.msk [vmem:[#allocation3 + $0x50] sm:$0xf] %vm860, %v806
      %872 = vst.msk [vmem:[#allocation3 + $0x58] sm:$0xf] %vm860, %v807
      %873 = vst.msk [vmem:[#allocation3 + $0x60] sm:$0xf] %vm860, %v808
      %874 = vst.msk [vmem:[#allocation3 + $0x68] sm:$0xf] %vm860, %v809
      %875 = vst.msk [vmem:[#allocation3 + $0x70] sm:$0xf] %vm860, %v810
      %876 = vst.msk [vmem:[#allocation3 + $0x78] sm:$0xf] %vm860, %v811
      %877 = vst.msk [vmem:[#allocation3 + $0x80] sm:$0xf] %vm860, %v812
      %878 = vst.msk [vmem:[#allocation3 + $0x88] sm:$0xf] %vm860, %v813
      %879 = vst.msk [vmem:[#allocation3 + $0x90] sm:$0xf] %vm860, %v814
      %880 = vst.msk [vmem:[#allocation3 + $0x98] sm:$0xf] %vm860, %v815
      %881 = vst.msk [vmem:[#allocation3 + $0xa0] sm:$0xf] %vm860, %v816
      %882 = vst.msk [vmem:[#allocation3 + $0xa8] sm:$0xf] %vm860, %v817
      %883 = vst.msk [vmem:[#allocation3 + $0xb0] sm:$0xf] %vm860, %v818
      %884 = vst.msk [vmem:[#allocation3 + $0xb8] sm:$0xf] %vm860, %v819
      %885 = vst.msk [vmem:[#allocation3 + $0xc0] sm:$0xf] %vm860, %v820
      %886 = vst.msk [vmem:[#allocation3 + $0xc8] sm:$0xf] %vm860, %v821
      %887 = vst.msk [vmem:[#allocation3 + $0xd0] sm:$0xf] %vm860, %v822
      %888 = vst.msk [vmem:[#allocation3 + $0xd8] sm:$0xf] %vm860, %v823
      %889 = vst.msk [vmem:[#allocation3 + $0xe0] sm:$0xf] %vm860, %v824
      %890 = vst.msk [vmem:[#allocation3 + $0xe8] sm:$0xf] %vm860, %v825
      %891 = vst.msk [vmem:[#allocation3 + $0xf0] sm:$0xf] %vm860, %v826
      %892 = vst.msk [vmem:[#allocation3 + $0xf8] sm:$0xf] %vm860, %v827
      %v893 = vld [vmem:[#allocation2 + $0x5] sm:$0xff]
      %v894 = vld [vmem:[#allocation2 + $0xd] sm:$0xff]
      %v895 = vld [vmem:[#allocation2 + $0x15] sm:$0xff]
      %v896 = vld [vmem:[#allocation2 + $0x1d] sm:$0xff]
      %v897 = vld [vmem:[#allocation2 + $0x25] sm:$0xff]
      %v898 = vld [vmem:[#allocation2 + $0x2d] sm:$0xff]
      %v899 = vld [vmem:[#allocation2 + $0x35] sm:$0xff]
      %v900 = vld [vmem:[#allocation2 + $0x3d] sm:$0xff]
      %v901 = vld [vmem:[#allocation2 + $0x45] sm:$0xff]
      %v902 = vld [vmem:[#allocation2 + $0x4d] sm:$0xff]
      %v903 = vld [vmem:[#allocation2 + $0x55] sm:$0xff]
      %v904 = vld [vmem:[#allocation2 + $0x5d] sm:$0xff]
      %v905 = vld [vmem:[#allocation2 + $0x65] sm:$0xff]
      %v906 = vld [vmem:[#allocation2 + $0x6d] sm:$0xff]
      %v907 = vld [vmem:[#allocation2 + $0x75] sm:$0xff]
      %v908 = vld [vmem:[#allocation2 + $0x7d] sm:$0xff]
      %v909 = vld [vmem:[#allocation2 + $0x85] sm:$0xff]
      %v910 = vld [vmem:[#allocation2 + $0x8d] sm:$0xff]
      %v911 = vld [vmem:[#allocation2 + $0x95] sm:$0xff]
      %v912 = vld [vmem:[#allocation2 + $0x9d] sm:$0xff]
      %v913 = vld [vmem:[#allocation2 + $0xa5] sm:$0xff]
      %v914 = vld [vmem:[#allocation2 + $0xad] sm:$0xff]
      %v915 = vld [vmem:[#allocation2 + $0xb5] sm:$0xff]
      %v916 = vld [vmem:[#allocation2 + $0xbd] sm:$0xff]
      %v917 = vld [vmem:[#allocation2 + $0xc5] sm:$0xff]
      %v918 = vld [vmem:[#allocation2 + $0xcd] sm:$0xff]
      %v919 = vld [vmem:[#allocation2 + $0xd5] sm:$0xff]
      %v920 = vld [vmem:[#allocation2 + $0xdd] sm:$0xff]
      %v921 = vld [vmem:[#allocation2 + $0xe5] sm:$0xff]
      %v922 = vld [vmem:[#allocation2 + $0xed] sm:$0xff]
      %v923 = vld [vmem:[#allocation2 + $0xf5] sm:$0xff]
      %v924 = vld [vmem:[#allocation2 + $0xfd] sm:$0xff]
      %v925 = vpack.c.bf16 %v894, %v893
      %v926 = vpack.c.bf16 %v896, %v895
      %v927 = vpack.c.bf16 %v898, %v897
      %v928 = vpack.c.bf16 %v900, %v899
      %v929 = vpack.c.bf16 %v902, %v901
      %v930 = vpack.c.bf16 %v904, %v903
      %v931 = vpack.c.bf16 %v906, %v905
      %v932 = vpack.c.bf16 %v908, %v907
      %v933 = vpack.c.bf16 %v910, %v909
      %v934 = vpack.c.bf16 %v912, %v911
      %v935 = vpack.c.bf16 %v914, %v913
      %v936 = vpack.c.bf16 %v916, %v915
      %v937 = vpack.c.bf16 %v918, %v917
      %v938 = vpack.c.bf16 %v920, %v919
      %v939 = vpack.c.bf16 %v922, %v921
      %v940 = vpack.c.bf16 %v924, %v923
      %v957 = vunpack.c.l.b16 %v925
      %v958 = vunpack.c.h.b16 %v925
      %v959 = vunpack.c.l.b16 %v926
      %v960 = vunpack.c.h.b16 %v926
      %v961 = vunpack.c.l.b16 %v927
      %v962 = vunpack.c.h.b16 %v927
      %v963 = vunpack.c.l.b16 %v928
      %v964 = vunpack.c.h.b16 %v928
      %v965 = vunpack.c.l.b16 %v929
      %v966 = vunpack.c.h.b16 %v929
      %v967 = vunpack.c.l.b16 %v930
      %v968 = vunpack.c.h.b16 %v930
      %v969 = vunpack.c.l.b16 %v931
      %v970 = vunpack.c.h.b16 %v931
      %v971 = vunpack.c.l.b16 %v932
      %v972 = vunpack.c.h.b16 %v932
      %v973 = vunpack.c.l.b16 %v933
      %v974 = vunpack.c.h.b16 %v933
      %v975 = vunpack.c.l.b16 %v934
      %v976 = vunpack.c.h.b16 %v934
      %v977 = vunpack.c.l.b16 %v935
      %v978 = vunpack.c.h.b16 %v935
      %v979 = vunpack.c.l.b16 %v936
      %v980 = vunpack.c.h.b16 %v936
      %v981 = vunpack.c.l.b16 %v937
      %v982 = vunpack.c.h.b16 %v937
      %v983 = vunpack.c.l.b16 %v938
      %v984 = vunpack.c.h.b16 %v938
      %v985 = vunpack.c.l.b16 %v939
      %v986 = vunpack.c.h.b16 %v939
      %v987 = vunpack.c.l.b16 %v940
      %v988 = vunpack.c.h.b16 %v940
      %v989 = vpack.c.b16 %v957, %v957
      %v990 = vpack.c.b16 %v958, %v958
      %v991 = vpack.c.b16 %v959, %v959
      %v992 = vpack.c.b16 %v960, %v960
      %v993 = vpack.c.b16 %v961, %v961
      %v994 = vpack.c.b16 %v962, %v962
      %v995 = vpack.c.b16 %v963, %v963
      %v996 = vpack.c.b16 %v964, %v964
      %v997 = vpack.c.b16 %v965, %v965
      %v998 = vpack.c.b16 %v966, %v966
      %v999 = vpack.c.b16 %v967, %v967
      %v1000 = vpack.c.b16 %v968, %v968
      %v1001 = vpack.c.b16 %v969, %v969
      %v1002 = vpack.c.b16 %v970, %v970
      %v1003 = vpack.c.b16 %v971, %v971
      %v1004 = vpack.c.b16 %v972, %v972
      %v1005 = vpack.c.b16 %v973, %v973
      %v1006 = vpack.c.b16 %v974, %v974
      %v1007 = vpack.c.b16 %v975, %v975
      %v1008 = vpack.c.b16 %v976, %v976
      %v1009 = vpack.c.b16 %v977, %v977
      %v1010 = vpack.c.b16 %v978, %v978
      %v1011 = vpack.c.b16 %v979, %v979
      %v1012 = vpack.c.b16 %v980, %v980
      %v1013 = vpack.c.b16 %v981, %v981
      %v1014 = vpack.c.b16 %v982, %v982
      %v1015 = vpack.c.b16 %v983, %v983
      %v1016 = vpack.c.b16 %v984, %v984
      %v1017 = vpack.c.b16 %v985, %v985
      %v1018 = vpack.c.b16 %v986, %v986
      %v1019 = vpack.c.b16 %v987, %v987
      %v1020 = vpack.c.b16 %v988, %v988
      %1021 = vrot.lane.b32.xlu0 %v989, 24
      %v1022 = vpop.permute.xlu0 %1021
      %1023 = vrot.lane.b32.xlu0 %v990, 24
      %v1024 = vpop.permute.xlu0 %1023
      %1025 = vrot.lane.b32.xlu0 %v991, 24
      %v1026 = vpop.permute.xlu0 %1025
      %1027 = vrot.lane.b32.xlu0 %v992, 24
      %v1028 = vpop.permute.xlu0 %1027
      %1029 = vrot.lane.b32.xlu0 %v993, 24
      %v1030 = vpop.permute.xlu0 %1029
      %1031 = vrot.lane.b32.xlu0 %v994, 24
      %v1032 = vpop.permute.xlu0 %1031
      %1033 = vrot.lane.b32.xlu0 %v995, 24
      %v1034 = vpop.permute.xlu0 %1033
      %1035 = vrot.lane.b32.xlu0 %v996, 24
      %v1036 = vpop.permute.xlu0 %1035
      %1037 = vrot.lane.b32.xlu0 %v997, 24
      %v1038 = vpop.permute.xlu0 %1037
      %1039 = vrot.lane.b32.xlu0 %v998, 24
      %v1040 = vpop.permute.xlu0 %1039
      %1041 = vrot.lane.b32.xlu0 %v999, 24
      %v1042 = vpop.permute.xlu0 %1041
      %1043 = vrot.lane.b32.xlu0 %v1000, 24
      %v1044 = vpop.permute.xlu0 %1043
      %1045 = vrot.lane.b32.xlu0 %v1001, 24
      %v1046 = vpop.permute.xlu0 %1045
      %1047 = vrot.lane.b32.xlu0 %v1002, 24
      %v1048 = vpop.permute.xlu0 %1047
      %1049 = vrot.lane.b32.xlu0 %v1003, 24
      %v1050 = vpop.permute.xlu0 %1049
      %1051 = vrot.lane.b32.xlu0 %v1004, 24
      %v1052 = vpop.permute.xlu0 %1051
      %1053 = vrot.lane.b32.xlu0 %v1005, 24
      %v1054 = vpop.permute.xlu0 %1053
      %1055 = vrot.lane.b32.xlu0 %v1006, 24
      %v1056 = vpop.permute.xlu0 %1055
      %1057 = vrot.lane.b32.xlu0 %v1007, 24
      %v1058 = vpop.permute.xlu0 %1057
      %1059 = vrot.lane.b32.xlu0 %v1008, 24
      %v1060 = vpop.permute.xlu0 %1059
      %1061 = vrot.lane.b32.xlu0 %v1009, 24
      %v1062 = vpop.permute.xlu0 %1061
      %1063 = vrot.lane.b32.xlu0 %v1010, 24
      %v1064 = vpop.permute.xlu0 %1063
      %1065 = vrot.lane.b32.xlu0 %v1011, 24
      %v1066 = vpop.permute.xlu0 %1065
      %1067 = vrot.lane.b32.xlu0 %v1012, 24
      %v1068 = vpop.permute.xlu0 %1067
      %1069 = vrot.lane.b32.xlu0 %v1013, 24
      %v1070 = vpop.permute.xlu0 %1069
      %1071 = vrot.lane.b32.xlu0 %v1014, 24
      %v1072 = vpop.permute.xlu0 %1071
      %1073 = vrot.lane.b32.xlu0 %v1015, 24
      %v1074 = vpop.permute.xlu0 %1073
      %1075 = vrot.lane.b32.xlu0 %v1016, 24
      %v1076 = vpop.permute.xlu0 %1075
      %1077 = vrot.lane.b32.xlu0 %v1017, 24
      %v1078 = vpop.permute.xlu0 %1077
      %1079 = vrot.lane.b32.xlu0 %v1018, 24
      %v1080 = vpop.permute.xlu0 %1079
      %1081 = vrot.lane.b32.xlu0 %v1019, 24
      %v1082 = vpop.permute.xlu0 %1081
      %1083 = vrot.lane.b32.xlu0 %v1020, 24
      %v1084 = vpop.permute.xlu0 %1083
      %vm1117 = vcmask 388288
      %1118 = vst.msk [vmem:[#allocation3] sm:$0xf] %vm1117, %v1022
      %1119 = vst.msk [vmem:[#allocation3 + $0x8] sm:$0xf] %vm1117, %v1024
      %1120 = vst.msk [vmem:[#allocation3 + $0x10] sm:$0xf] %vm1117, %v1026
      %1121 = vst.msk [vmem:[#allocation3 + $0x18] sm:$0xf] %vm1117, %v1028
      %1122 = vst.msk [vmem:[#allocation3 + $0x20] sm:$0xf] %vm1117, %v1030
      %1123 = vst.msk [vmem:[#allocation3 + $0x28] sm:$0xf] %vm1117, %v1032
      %1124 = vst.msk [vmem:[#allocation3 + $0x30] sm:$0xf] %vm1117, %v1034
      %1125 = vst.msk [vmem:[#allocation3 + $0x38] sm:$0xf] %vm1117, %v1036
      %1126 = vst.msk [vmem:[#allocation3 + $0x40] sm:$0xf] %vm1117, %v1038
      %1127 = vst.msk [vmem:[#allocation3 + $0x48] sm:$0xf] %vm1117, %v1040
      %1128 = vst.msk [vmem:[#allocation3 + $0x50] sm:$0xf] %vm1117, %v1042
      %1129 = vst.msk [vmem:[#allocation3 + $0x58] sm:$0xf] %vm1117, %v1044
      %1130 = vst.msk [vmem:[#allocation3 + $0x60] sm:$0xf] %vm1117, %v1046
      %1131 = vst.msk [vmem:[#allocation3 + $0x68] sm:$0xf] %vm1117, %v1048
      %1132 = vst.msk [vmem:[#allocation3 + $0x70] sm:$0xf] %vm1117, %v1050
      %1133 = vst.msk [vmem:[#allocation3 + $0x78] sm:$0xf] %vm1117, %v1052
      %1134 = vst.msk [vmem:[#allocation3 + $0x80] sm:$0xf] %vm1117, %v1054
      %1135 = vst.msk [vmem:[#allocation3 + $0x88] sm:$0xf] %vm1117, %v1056
      %1136 = vst.msk [vmem:[#allocation3 + $0x90] sm:$0xf] %vm1117, %v1058
      %1137 = vst.msk [vmem:[#allocation3 + $0x98] sm:$0xf] %vm1117, %v1060
      %1138 = vst.msk [vmem:[#allocation3 + $0xa0] sm:$0xf] %vm1117, %v1062
      %1139 = vst.msk [vmem:[#allocation3 + $0xa8] sm:$0xf] %vm1117, %v1064
      %1140 = vst.msk [vmem:[#allocation3 + $0xb0] sm:$0xf] %vm1117, %v1066
      %1141 = vst.msk [vmem:[#allocation3 + $0xb8] sm:$0xf] %vm1117, %v1068
      %1142 = vst.msk [vmem:[#allocation3 + $0xc0] sm:$0xf] %vm1117, %v1070
      %1143 = vst.msk [vmem:[#allocation3 + $0xc8] sm:$0xf] %vm1117, %v1072
      %1144 = vst.msk [vmem:[#allocation3 + $0xd0] sm:$0xf] %vm1117, %v1074
      %1145 = vst.msk [vmem:[#allocation3 + $0xd8] sm:$0xf] %vm1117, %v1076
      %1146 = vst.msk [vmem:[#allocation3 + $0xe0] sm:$0xf] %vm1117, %v1078
      %1147 = vst.msk [vmem:[#allocation3 + $0xe8] sm:$0xf] %vm1117, %v1080
      %1148 = vst.msk [vmem:[#allocation3 + $0xf0] sm:$0xf] %vm1117, %v1082
      %1149 = vst.msk [vmem:[#allocation3 + $0xf8] sm:$0xf] %vm1117, %v1084
      %v1150 = vld [vmem:[#allocation2 + $0x6] sm:$0xff]
      %v1151 = vld [vmem:[#allocation2 + $0xe] sm:$0xff]
      %v1152 = vld [vmem:[#allocation2 + $0x16] sm:$0xff]
      %v1153 = vld [vmem:[#allocation2 + $0x1e] sm:$0xff]
      %v1154 = vld [vmem:[#allocation2 + $0x26] sm:$0xff]
      %v1155 = vld [vmem:[#allocation2 + $0x2e] sm:$0xff]
      %v1156 = vld [vmem:[#allocation2 + $0x36] sm:$0xff]
      %v1157 = vld [vmem:[#allocation2 + $0x3e] sm:$0xff]
      %v1158 = vld [vmem:[#allocation2 + $0x46] sm:$0xff]
      %v1159 = vld [vmem:[#allocation2 + $0x4e] sm:$0xff]
      %v1160 = vld [vmem:[#allocation2 + $0x56] sm:$0xff]
      %v1161 = vld [vmem:[#allocation2 + $0x5e] sm:$0xff]
      %v1162 = vld [vmem:[#allocation2 + $0x66] sm:$0xff]
      %v1163 = vld [vmem:[#allocation2 + $0x6e] sm:$0xff]
      %v1164 = vld [vmem:[#allocation2 + $0x76] sm:$0xff]
      %v1165 = vld [vmem:[#allocation2 + $0x7e] sm:$0xff]
      %v1166 = vld [vmem:[#allocation2 + $0x86] sm:$0xff]
      %v1167 = vld [vmem:[#allocation2 + $0x8e] sm:$0xff]
      %v1168 = vld [vmem:[#allocation2 + $0x96] sm:$0xff]
      %v1169 = vld [vmem:[#allocation2 + $0x9e] sm:$0xff]
      %v1170 = vld [vmem:[#allocation2 + $0xa6] sm:$0xff]
      %v1171 = vld [vmem:[#allocation2 + $0xae] sm:$0xff]
      %v1172 = vld [vmem:[#allocation2 + $0xb6] sm:$0xff]
      %v1173 = vld [vmem:[#allocation2 + $0xbe] sm:$0xff]
      %v1174 = vld [vmem:[#allocation2 + $0xc6] sm:$0xff]
      %v1175 = vld [vmem:[#allocation2 + $0xce] sm:$0xff]
      %v1176 = vld [vmem:[#allocation2 + $0xd6] sm:$0xff]
      %v1177 = vld [vmem:[#allocation2 + $0xde] sm:$0xff]
      %v1178 = vld [vmem:[#allocation2 + $0xe6] sm:$0xff]
      %v1179 = vld [vmem:[#allocation2 + $0xee] sm:$0xff]
      %v1180 = vld [vmem:[#allocation2 + $0xf6] sm:$0xff]
      %v1181 = vld [vmem:[#allocation2 + $0xfe] sm:$0xff]
      %v1182 = vpack.c.bf16 %v1151, %v1150
      %v1183 = vpack.c.bf16 %v1153, %v1152
      %v1184 = vpack.c.bf16 %v1155, %v1154
      %v1185 = vpack.c.bf16 %v1157, %v1156
      %v1186 = vpack.c.bf16 %v1159, %v1158
      %v1187 = vpack.c.bf16 %v1161, %v1160
      %v1188 = vpack.c.bf16 %v1163, %v1162
      %v1189 = vpack.c.bf16 %v1165, %v1164
      %v1190 = vpack.c.bf16 %v1167, %v1166
      %v1191 = vpack.c.bf16 %v1169, %v1168
      %v1192 = vpack.c.bf16 %v1171, %v1170
      %v1193 = vpack.c.bf16 %v1173, %v1172
      %v1194 = vpack.c.bf16 %v1175, %v1174
      %v1195 = vpack.c.bf16 %v1177, %v1176
      %v1196 = vpack.c.bf16 %v1179, %v1178
      %v1197 = vpack.c.bf16 %v1181, %v1180
      %v1214 = vunpack.c.l.b16 %v1182
      %v1215 = vunpack.c.h.b16 %v1182
      %v1216 = vunpack.c.l.b16 %v1183
      %v1217 = vunpack.c.h.b16 %v1183
      %v1218 = vunpack.c.l.b16 %v1184
      %v1219 = vunpack.c.h.b16 %v1184
      %v1220 = vunpack.c.l.b16 %v1185
      %v1221 = vunpack.c.h.b16 %v1185
      %v1222 = vunpack.c.l.b16 %v1186
      %v1223 = vunpack.c.h.b16 %v1186
      %v1224 = vunpack.c.l.b16 %v1187
      %v1225 = vunpack.c.h.b16 %v1187
      %v1226 = vunpack.c.l.b16 %v1188
      %v1227 = vunpack.c.h.b16 %v1188
      %v1228 = vunpack.c.l.b16 %v1189
      %v1229 = vunpack.c.h.b16 %v1189
      %v1230 = vunpack.c.l.b16 %v1190
      %v1231 = vunpack.c.h.b16 %v1190
      %v1232 = vunpack.c.l.b16 %v1191
      %v1233 = vunpack.c.h.b16 %v1191
      %v1234 = vunpack.c.l.b16 %v1192
      %v1235 = vunpack.c.h.b16 %v1192
      %v1236 = vunpack.c.l.b16 %v1193
      %v1237 = vunpack.c.h.b16 %v1193
      %v1238 = vunpack.c.l.b16 %v1194
      %v1239 = vunpack.c.h.b16 %v1194
      %v1240 = vunpack.c.l.b16 %v1195
      %v1241 = vunpack.c.h.b16 %v1195
      %v1242 = vunpack.c.l.b16 %v1196
      %v1243 = vunpack.c.h.b16 %v1196
      %v1244 = vunpack.c.l.b16 %v1197
      %v1245 = vunpack.c.h.b16 %v1197
      %v1246 = vpack.c.b16 %v1214, %v1214
      %v1247 = vpack.c.b16 %v1215, %v1215
      %v1248 = vpack.c.b16 %v1216, %v1216
      %v1249 = vpack.c.b16 %v1217, %v1217
      %v1250 = vpack.c.b16 %v1218, %v1218
      %v1251 = vpack.c.b16 %v1219, %v1219
      %v1252 = vpack.c.b16 %v1220, %v1220
      %v1253 = vpack.c.b16 %v1221, %v1221
      %v1254 = vpack.c.b16 %v1222, %v1222
      %v1255 = vpack.c.b16 %v1223, %v1223
      %v1256 = vpack.c.b16 %v1224, %v1224
      %v1257 = vpack.c.b16 %v1225, %v1225
      %v1258 = vpack.c.b16 %v1226, %v1226
      %v1259 = vpack.c.b16 %v1227, %v1227
      %v1260 = vpack.c.b16 %v1228, %v1228
      %v1261 = vpack.c.b16 %v1229, %v1229
      %v1262 = vpack.c.b16 %v1230, %v1230
      %v1263 = vpack.c.b16 %v1231, %v1231
      %v1264 = vpack.c.b16 %v1232, %v1232
      %v1265 = vpack.c.b16 %v1233, %v1233
      %v1266 = vpack.c.b16 %v1234, %v1234
      %v1267 = vpack.c.b16 %v1235, %v1235
      %v1268 = vpack.c.b16 %v1236, %v1236
      %v1269 = vpack.c.b16 %v1237, %v1237
      %v1270 = vpack.c.b16 %v1238, %v1238
      %v1271 = vpack.c.b16 %v1239, %v1239
      %v1272 = vpack.c.b16 %v1240, %v1240
      %v1273 = vpack.c.b16 %v1241, %v1241
      %v1274 = vpack.c.b16 %v1242, %v1242
      %v1275 = vpack.c.b16 %v1243, %v1243
      %v1276 = vpack.c.b16 %v1244, %v1244
      %v1277 = vpack.c.b16 %v1245, %v1245
      %1278 = vrot.lane.b32.xlu0 %v1246, 48
      %v1279 = vpop.permute.xlu0 %1278
      %1280 = vrot.lane.b32.xlu0 %v1247, 48
      %v1281 = vpop.permute.xlu0 %1280
      %1282 = vrot.lane.b32.xlu0 %v1248, 48
      %v1283 = vpop.permute.xlu0 %1282
      %1284 = vrot.lane.b32.xlu0 %v1249, 48
      %v1285 = vpop.permute.xlu0 %1284
      %1286 = vrot.lane.b32.xlu0 %v1250, 48
      %v1287 = vpop.permute.xlu0 %1286
      %1288 = vrot.lane.b32.xlu0 %v1251, 48
      %v1289 = vpop.permute.xlu0 %1288
      %1290 = vrot.lane.b32.xlu0 %v1252, 48
      %v1291 = vpop.permute.xlu0 %1290
      %1292 = vrot.lane.b32.xlu0 %v1253, 48
      %v1293 = vpop.permute.xlu0 %1292
      %1294 = vrot.lane.b32.xlu0 %v1254, 48
      %v1295 = vpop.permute.xlu0 %1294
      %1296 = vrot.lane.b32.xlu0 %v1255, 48
      %v1297 = vpop.permute.xlu0 %1296
      %1298 = vrot.lane.b32.xlu0 %v1256, 48
      %v1299 = vpop.permute.xlu0 %1298
      %1300 = vrot.lane.b32.xlu0 %v1257, 48
      %v1301 = vpop.permute.xlu0 %1300
      %1302 = vrot.lane.b32.xlu0 %v1258, 48
      %v1303 = vpop.permute.xlu0 %1302
      %1304 = vrot.lane.b32.xlu0 %v1259, 48
      %v1305 = vpop.permute.xlu0 %1304
      %1306 = vrot.lane.b32.xlu0 %v1260, 48
      %v1307 = vpop.permute.xlu0 %1306
      %1308 = vrot.lane.b32.xlu0 %v1261, 48
      %v1309 = vpop.permute.xlu0 %1308
      %1310 = vrot.lane.b32.xlu0 %v1262, 48
      %v1311 = vpop.permute.xlu0 %1310
      %1312 = vrot.lane.b32.xlu0 %v1263, 48
      %v1313 = vpop.permute.xlu0 %1312
      %1314 = vrot.lane.b32.xlu0 %v1264, 48
      %v1315 = vpop.permute.xlu0 %1314
      %1316 = vrot.lane.b32.xlu0 %v1265, 48
      %v1317 = vpop.permute.xlu0 %1316
      %1318 = vrot.lane.b32.xlu0 %v1266, 48
      %v1319 = vpop.permute.xlu0 %1318
      %1320 = vrot.lane.b32.xlu0 %v1267, 48
      %v1321 = vpop.permute.xlu0 %1320
      %1322 = vrot.lane.b32.xlu0 %v1268, 48
      %v1323 = vpop.permute.xlu0 %1322
      %1324 = vrot.lane.b32.xlu0 %v1269, 48
      %v1325 = vpop.permute.xlu0 %1324
      %1326 = vrot.lane.b32.xlu0 %v1270, 48
      %v1327 = vpop.permute.xlu0 %1326
      %1328 = vrot.lane.b32.xlu0 %v1271, 48
      %v1329 = vpop.permute.xlu0 %1328
      %1330 = vrot.lane.b32.xlu0 %v1272, 48
      %v1331 = vpop.permute.xlu0 %1330
      %1332 = vrot.lane.b32.xlu0 %v1273, 48
      %v1333 = vpop.permute.xlu0 %1332
      %1334 = vrot.lane.b32.xlu0 %v1274, 48
      %v1335 = vpop.permute.xlu0 %1334
      %1336 = vrot.lane.b32.xlu0 %v1275, 48
      %v1337 = vpop.permute.xlu0 %1336
      %1338 = vrot.lane.b32.xlu0 %v1276, 48
      %v1339 = vpop.permute.xlu0 %1338
      %1340 = vrot.lane.b32.xlu0 %v1277, 48
      %v1341 = vpop.permute.xlu0 %1340
      %vm1374 = vcmask 585088
      %1375 = vst.msk [vmem:[#allocation3] sm:$0xf] %vm1374, %v1279
      %1376 = vst.msk [vmem:[#allocation3 + $0x8] sm:$0xf] %vm1374, %v1281
      %1377 = vst.msk [vmem:[#allocation3 + $0x10] sm:$0xf] %vm1374, %v1283
      %1378 = vst.msk [vmem:[#allocation3 + $0x18] sm:$0xf] %vm1374, %v1285
      %1379 = vst.msk [vmem:[#allocation3 + $0x20] sm:$0xf] %vm1374, %v1287
      %1380 = vst.msk [vmem:[#allocation3 + $0x28] sm:$0xf] %vm1374, %v1289
      %1381 = vst.msk [vmem:[#allocation3 + $0x30] sm:$0xf] %vm1374, %v1291
      %1382 = vst.msk [vmem:[#allocation3 + $0x38] sm:$0xf] %vm1374, %v1293
      %1383 = vst.msk [vmem:[#allocation3 + $0x40] sm:$0xf] %vm1374, %v1295
      %1384 = vst.msk [vmem:[#allocation3 + $0x48] sm:$0xf] %vm1374, %v1297
      %1385 = vst.msk [vmem:[#allocation3 + $0x50] sm:$0xf] %vm1374, %v1299
      %1386 = vst.msk [vmem:[#allocation3 + $0x58] sm:$0xf] %vm1374, %v1301
      %1387 = vst.msk [vmem:[#allocation3 + $0x60] sm:$0xf] %vm1374, %v1303
      %1388 = vst.msk [vmem:[#allocation3 + $0x68] sm:$0xf] %vm1374, %v1305
      %1389 = vst.msk [vmem:[#allocation3 + $0x70] sm:$0xf] %vm1374, %v1307
      %1390 = vst.msk [vmem:[#allocation3 + $0x78] sm:$0xf] %vm1374, %v1309
      %1391 = vst.msk [vmem:[#allocation3 + $0x80] sm:$0xf] %vm1374, %v1311
      %1392 = vst.msk [vmem:[#allocation3 + $0x88] sm:$0xf] %vm1374, %v1313
      %1393 = vst.msk [vmem:[#allocation3 + $0x90] sm:$0xf] %vm1374, %v1315
      %1394 = vst.msk [vmem:[#allocation3 + $0x98] sm:$0xf] %vm1374, %v1317
      %1395 = vst.msk [vmem:[#allocation3 + $0xa0] sm:$0xf] %vm1374, %v1319
      %1396 = vst.msk [vmem:[#allocation3 + $0xa8] sm:$0xf] %vm1374, %v1321
      %1397 = vst.msk [vmem:[#allocation3 + $0xb0] sm:$0xf] %vm1374, %v1323
      %1398 = vst.msk [vmem:[#allocation3 + $0xb8] sm:$0xf] %vm1374, %v1325
      %1399 = vst.msk [vmem:[#allocation3 + $0xc0] sm:$0xf] %vm1374, %v1327
      %1400 = vst.msk [vmem:[#allocation3 + $0xc8] sm:$0xf] %vm1374, %v1329
      %1401 = vst.msk [vmem:[#allocation3 + $0xd0] sm:$0xf] %vm1374, %v1331
      %1402 = vst.msk [vmem:[#allocation3 + $0xd8] sm:$0xf] %vm1374, %v1333
      %1403 = vst.msk [vmem:[#allocation3 + $0xe0] sm:$0xf] %vm1374, %v1335
      %1404 = vst.msk [vmem:[#allocation3 + $0xe8] sm:$0xf] %vm1374, %v1337
      %1405 = vst.msk [vmem:[#allocation3 + $0xf0] sm:$0xf] %vm1374, %v1339
      %1406 = vst.msk [vmem:[#allocation3 + $0xf8] sm:$0xf] %vm1374, %v1341
      %v1407 = vld [vmem:[#allocation2 + $0x7] sm:$0xff]
      %v1408 = vld [vmem:[#allocation2 + $0xf] sm:$0xff]
      %v1409 = vld [vmem:[#allocation2 + $0x17] sm:$0xff]
      %v1410 = vld [vmem:[#allocation2 + $0x1f] sm:$0xff]
      %v1411 = vld [vmem:[#allocation2 + $0x27] sm:$0xff]
      %v1412 = vld [vmem:[#allocation2 + $0x2f] sm:$0xff]
      %v1413 = vld [vmem:[#allocation2 + $0x37] sm:$0xff]
      %v1414 = vld [vmem:[#allocation2 + $0x3f] sm:$0xff]
      %v1415 = vld [vmem:[#allocation2 + $0x47] sm:$0xff]
      %v1416 = vld [vmem:[#allocation2 + $0x4f] sm:$0xff]
      %v1417 = vld [vmem:[#allocation2 + $0x57] sm:$0xff]
      %v1418 = vld [vmem:[#allocation2 + $0x5f] sm:$0xff]
      %v1419 = vld [vmem:[#allocation2 + $0x67] sm:$0xff]
      %v1420 = vld [vmem:[#allocation2 + $0x6f] sm:$0xff]
      %v1421 = vld [vmem:[#allocation2 + $0x77] sm:$0xff]
      %v1422 = vld [vmem:[#allocation2 + $0x7f] sm:$0xff]
      %v1423 = vld [vmem:[#allocation2 + $0x87] sm:$0xff]
      %v1424 = vld [vmem:[#allocation2 + $0x8f] sm:$0xff]
      %v1425 = vld [vmem:[#allocation2 + $0x97] sm:$0xff]
      %v1426 = vld [vmem:[#allocation2 + $0x9f] sm:$0xff]
      %v1427 = vld [vmem:[#allocation2 + $0xa7] sm:$0xff]
      %v1428 = vld [vmem:[#allocation2 + $0xaf] sm:$0xff]
      %v1429 = vld [vmem:[#allocation2 + $0xb7] sm:$0xff]
      %v1430 = vld [vmem:[#allocation2 + $0xbf] sm:$0xff]
      %v1431 = vld [vmem:[#allocation2 + $0xc7] sm:$0xff]
      %v1432 = vld [vmem:[#allocation2 + $0xcf] sm:$0xff]
      %v1433 = vld [vmem:[#allocation2 + $0xd7] sm:$0xff]
      %v1434 = vld [vmem:[#allocation2 + $0xdf] sm:$0xff]
      %v1435 = vld [vmem:[#allocation2 + $0xe7] sm:$0xff]
      %v1436 = vld [vmem:[#allocation2 + $0xef] sm:$0xff]
      %v1437 = vld [vmem:[#allocation2 + $0xf7] sm:$0xff]
      %v1438 = vld [vmem:[#allocation2 + $0xff] sm:$0xff]
      %v1439 = vpack.c.bf16 %v1408, %v1407
      %v1440 = vpack.c.bf16 %v1410, %v1409
      %v1441 = vpack.c.bf16 %v1412, %v1411
      %v1442 = vpack.c.bf16 %v1414, %v1413
      %v1443 = vpack.c.bf16 %v1416, %v1415
      %v1444 = vpack.c.bf16 %v1418, %v1417
      %v1445 = vpack.c.bf16 %v1420, %v1419
      %v1446 = vpack.c.bf16 %v1422, %v1421
      %v1447 = vpack.c.bf16 %v1424, %v1423
      %v1448 = vpack.c.bf16 %v1426, %v1425
      %v1449 = vpack.c.bf16 %v1428, %v1427
      %v1450 = vpack.c.bf16 %v1430, %v1429
      %v1451 = vpack.c.bf16 %v1432, %v1431
      %v1452 = vpack.c.bf16 %v1434, %v1433
      %v1453 = vpack.c.bf16 %v1436, %v1435
      %v1454 = vpack.c.bf16 %v1438, %v1437
      %v1471 = vunpack.c.l.b16 %v1439
      %v1472 = vunpack.c.h.b16 %v1439
      %v1473 = vunpack.c.l.b16 %v1440
      %v1474 = vunpack.c.h.b16 %v1440
      %v1475 = vunpack.c.l.b16 %v1441
      %v1476 = vunpack.c.h.b16 %v1441
      %v1477 = vunpack.c.l.b16 %v1442
      %v1478 = vunpack.c.h.b16 %v1442
      %v1479 = vunpack.c.l.b16 %v1443
      %v1480 = vunpack.c.h.b16 %v1443
      %v1481 = vunpack.c.l.b16 %v1444
      %v1482 = vunpack.c.h.b16 %v1444
      %v1483 = vunpack.c.l.b16 %v1445
      %v1484 = vunpack.c.h.b16 %v1445
      %v1485 = vunpack.c.l.b16 %v1446
      %v1486 = vunpack.c.h.b16 %v1446
      %v1487 = vunpack.c.l.b16 %v1447
      %v1488 = vunpack.c.h.b16 %v1447
      %v1489 = vunpack.c.l.b16 %v1448
      %v1490 = vunpack.c.h.b16 %v1448
      %v1491 = vunpack.c.l.b16 %v1449
      %v1492 = vunpack.c.h.b16 %v1449
      %v1493 = vunpack.c.l.b16 %v1450
      %v1494 = vunpack.c.h.b16 %v1450
      %v1495 = vunpack.c.l.b16 %v1451
      %v1496 = vunpack.c.h.b16 %v1451
      %v1497 = vunpack.c.l.b16 %v1452
      %v1498 = vunpack.c.h.b16 %v1452
      %v1499 = vunpack.c.l.b16 %v1453
      %v1500 = vunpack.c.h.b16 %v1453
      %v1501 = vunpack.c.l.b16 %v1454
      %v1502 = vunpack.c.h.b16 %v1454
      %v1503 = vpack.c.b16 %v1471, %v1471
      %v1504 = vpack.c.b16 %v1472, %v1472
      %v1505 = vpack.c.b16 %v1473, %v1473
      %v1506 = vpack.c.b16 %v1474, %v1474
      %v1507 = vpack.c.b16 %v1475, %v1475
      %v1508 = vpack.c.b16 %v1476, %v1476
      %v1509 = vpack.c.b16 %v1477, %v1477
      %v1510 = vpack.c.b16 %v1478, %v1478
      %v1511 = vpack.c.b16 %v1479, %v1479
      %v1512 = vpack.c.b16 %v1480, %v1480
      %v1513 = vpack.c.b16 %v1481, %v1481
      %v1514 = vpack.c.b16 %v1482, %v1482
      %v1515 = vpack.c.b16 %v1483, %v1483
      %v1516 = vpack.c.b16 %v1484, %v1484
      %v1517 = vpack.c.b16 %v1485, %v1485
      %v1518 = vpack.c.b16 %v1486, %v1486
      %v1519 = vpack.c.b16 %v1487, %v1487
      %v1520 = vpack.c.b16 %v1488, %v1488
      %v1521 = vpack.c.b16 %v1489, %v1489
      %v1522 = vpack.c.b16 %v1490, %v1490
      %v1523 = vpack.c.b16 %v1491, %v1491
      %v1524 = vpack.c.b16 %v1492, %v1492
      %v1525 = vpack.c.b16 %v1493, %v1493
      %v1526 = vpack.c.b16 %v1494, %v1494
      %v1527 = vpack.c.b16 %v1495, %v1495
      %v1528 = vpack.c.b16 %v1496, %v1496
      %v1529 = vpack.c.b16 %v1497, %v1497
      %v1530 = vpack.c.b16 %v1498, %v1498
      %v1531 = vpack.c.b16 %v1499, %v1499
      %v1532 = vpack.c.b16 %v1500, %v1500
      %v1533 = vpack.c.b16 %v1501, %v1501
      %v1534 = vpack.c.b16 %v1502, %v1502
      %1535 = vrot.lane.b32.xlu0 %v1503, 72
      %v1536 = vpop.permute.xlu0 %1535
      %1537 = vrot.lane.b32.xlu0 %v1504, 72
      %v1538 = vpop.permute.xlu0 %1537
      %1539 = vrot.lane.b32.xlu0 %v1505, 72
      %v1540 = vpop.permute.xlu0 %1539
      %1541 = vrot.lane.b32.xlu0 %v1506, 72
      %v1542 = vpop.permute.xlu0 %1541
      %1543 = vrot.lane.b32.xlu0 %v1507, 72
      %v1544 = vpop.permute.xlu0 %1543
      %1545 = vrot.lane.b32.xlu0 %v1508, 72
      %v1546 = vpop.permute.xlu0 %1545
      %1547 = vrot.lane.b32.xlu0 %v1509, 72
      %v1548 = vpop.permute.xlu0 %1547
      %1549 = vrot.lane.b32.xlu0 %v1510, 72
      %v1550 = vpop.permute.xlu0 %1549
      %1551 = vrot.lane.b32.xlu0 %v1511, 72
      %v1552 = vpop.permute.xlu0 %1551
      %1553 = vrot.lane.b32.xlu0 %v1512, 72
      %v1554 = vpop.permute.xlu0 %1553
      %1555 = vrot.lane.b32.xlu0 %v1513, 72
      %v1556 = vpop.permute.xlu0 %1555
      %1557 = vrot.lane.b32.xlu0 %v1514, 72
      %v1558 = vpop.permute.xlu0 %1557
      %1559 = vrot.lane.b32.xlu0 %v1515, 72
      %v1560 = vpop.permute.xlu0 %1559
      %1561 = vrot.lane.b32.xlu0 %v1516, 72
      %v1562 = vpop.permute.xlu0 %1561
      %1563 = vrot.lane.b32.xlu0 %v1517, 72
      %v1564 = vpop.permute.xlu0 %1563
      %1565 = vrot.lane.b32.xlu0 %v1518, 72
      %v1566 = vpop.permute.xlu0 %1565
      %1567 = vrot.lane.b32.xlu0 %v1519, 72
      %v1568 = vpop.permute.xlu0 %1567
      %1569 = vrot.lane.b32.xlu0 %v1520, 72
      %v1570 = vpop.permute.xlu0 %1569
      %1571 = vrot.lane.b32.xlu0 %v1521, 72
      %v1572 = vpop.permute.xlu0 %1571
      %1573 = vrot.lane.b32.xlu0 %v1522, 72
      %v1574 = vpop.permute.xlu0 %1573
      %1575 = vrot.lane.b32.xlu0 %v1523, 72
      %v1576 = vpop.permute.xlu0 %1575
      %1577 = vrot.lane.b32.xlu0 %v1524, 72
      %v1578 = vpop.permute.xlu0 %1577
      %1579 = vrot.lane.b32.xlu0 %v1525, 72
      %v1580 = vpop.permute.xlu0 %1579
      %1581 = vrot.lane.b32.xlu0 %v1526, 72
      %v1582 = vpop.permute.xlu0 %1581
      %1583 = vrot.lane.b32.xlu0 %v1527, 72
      %v1584 = vpop.permute.xlu0 %1583
      %1585 = vrot.lane.b32.xlu0 %v1528, 72
      %v1586 = vpop.permute.xlu0 %1585
      %1587 = vrot.lane.b32.xlu0 %v1529, 72
      %v1588 = vpop.permute.xlu0 %1587
      %1589 = vrot.lane.b32.xlu0 %v1530, 72
      %v1590 = vpop.permute.xlu0 %1589
      %1591 = vrot.lane.b32.xlu0 %v1531, 72
      %v1592 = vpop.permute.xlu0 %1591
      %1593 = vrot.lane.b32.xlu0 %v1532, 72
      %v1594 = vpop.permute.xlu0 %1593
      %1595 = vrot.lane.b32.xlu0 %v1533, 72
      %v1596 = vpop.permute.xlu0 %1595
      %1597 = vrot.lane.b32.xlu0 %v1534, 72
      %v1598 = vpop.permute.xlu0 %1597
      %vm1631 = vcmask 781888
      %1632 = vst.msk [vmem:[#allocation3] sm:$0xf] %vm1631, %v1536
      %1633 = vst.msk [vmem:[#allocation3 + $0x8] sm:$0xf] %vm1631, %v1538
      %1634 = vst.msk [vmem:[#allocation3 + $0x10] sm:$0xf] %vm1631, %v1540
      %1635 = vst.msk [vmem:[#allocation3 + $0x18] sm:$0xf] %vm1631, %v1542
      %1636 = vst.msk [vmem:[#allocation3 + $0x20] sm:$0xf] %vm1631, %v1544
      %1637 = vst.msk [vmem:[#allocation3 + $0x28] sm:$0xf] %vm1631, %v1546
      %1638 = vst.msk [vmem:[#allocation3 + $0x30] sm:$0xf] %vm1631, %v1548
      %1639 = vst.msk [vmem:[#allocation3 + $0x38] sm:$0xf] %vm1631, %v1550
      %1640 = vst.msk [vmem:[#allocation3 + $0x40] sm:$0xf] %vm1631, %v1552
      %1641 = vst.msk [vmem:[#allocation3 + $0x48] sm:$0xf] %vm1631, %v1554
      %1642 = vst.msk [vmem:[#allocation3 + $0x50] sm:$0xf] %vm1631, %v1556
      %1643 = vst.msk [vmem:[#allocation3 + $0x58] sm:$0xf] %vm1631, %v1558
      %1644 = vst.msk [vmem:[#allocation3 + $0x60] sm:$0xf] %vm1631, %v1560
      %1645 = vst.msk [vmem:[#allocation3 + $0x68] sm:$0xf] %vm1631, %v1562
      %1646 = vst.msk [vmem:[#allocation3 + $0x70] sm:$0xf] %vm1631, %v1564
      %1647 = vst.msk [vmem:[#allocation3 + $0x78] sm:$0xf] %vm1631, %v1566
      %1648 = vst.msk [vmem:[#allocation3 + $0x80] sm:$0xf] %vm1631, %v1568
      %1649 = vst.msk [vmem:[#allocation3 + $0x88] sm:$0xf] %vm1631, %v1570
      %1650 = vst.msk [vmem:[#allocation3 + $0x90] sm:$0xf] %vm1631, %v1572
      %1651 = vst.msk [vmem:[#allocation3 + $0x98] sm:$0xf] %vm1631, %v1574
      %1652 = vst.msk [vmem:[#allocation3 + $0xa0] sm:$0xf] %vm1631, %v1576
      %1653 = vst.msk [vmem:[#allocation3 + $0xa8] sm:$0xf] %vm1631, %v1578
      %1654 = vst.msk [vmem:[#allocation3 + $0xb0] sm:$0xf] %vm1631, %v1580
      %1655 = vst.msk [vmem:[#allocation3 + $0xb8] sm:$0xf] %vm1631, %v1582
      %1656 = vst.msk [vmem:[#allocation3 + $0xc0] sm:$0xf] %vm1631, %v1584
      %1657 = vst.msk [vmem:[#allocation3 + $0xc8] sm:$0xf] %vm1631, %v1586
      %1658 = vst.msk [vmem:[#allocation3 + $0xd0] sm:$0xf] %vm1631, %v1588
      %1659 = vst.msk [vmem:[#allocation3 + $0xd8] sm:$0xf] %vm1631, %v1590
      %1660 = vst.msk [vmem:[#allocation3 + $0xe0] sm:$0xf] %vm1631, %v1592
      %1661 = vst.msk [vmem:[#allocation3 + $0xe8] sm:$0xf] %vm1631, %v1594
      %1662 = vst.msk [vmem:[#allocation3 + $0xf0] sm:$0xf] %vm1631, %v1596
      %1663 = vst.msk [vmem:[#allocation3 + $0xf8] sm:$0xf] %vm1631, %v1598
      %v1664 = vld [vmem:[#allocation2 + $0x8] sm:$0xff]
      %v1665 = vld [vmem:[#allocation2 + $0x10] sm:$0xff]
      %v1666 = vld [vmem:[#allocation2 + $0x18] sm:$0xff]
      %v1667 = vld [vmem:[#allocation2 + $0x20] sm:$0xff]
      %v1668 = vld [vmem:[#allocation2 + $0x28] sm:$0xff]
      %v1669 = vld [vmem:[#allocation2 + $0x30] sm:$0xff]
      %v1670 = vld [vmem:[#allocation2 + $0x38] sm:$0xff]
      %v1671 = vld [vmem:[#allocation2 + $0x40] sm:$0xff]
      %v1672 = vld [vmem:[#allocation2 + $0x48] sm:$0xff]
      %v1673 = vld [vmem:[#allocation2 + $0x50] sm:$0xff]
      %v1674 = vld [vmem:[#allocation2 + $0x58] sm:$0xff]
      %v1675 = vld [vmem:[#allocation2 + $0x60] sm:$0xff]
      %v1676 = vld [vmem:[#allocation2 + $0x68] sm:$0xff]
      %v1677 = vld [vmem:[#allocation2 + $0x70] sm:$0xff]
      %v1678 = vld [vmem:[#allocation2 + $0x78] sm:$0xff]
      %v1679 = vld [vmem:[#allocation2 + $0x80] sm:$0xff]
      %v1680 = vld [vmem:[#allocation2 + $0x88] sm:$0xff]
      %v1681 = vld [vmem:[#allocation2 + $0x90] sm:$0xff]
      %v1682 = vld [vmem:[#allocation2 + $0x98] sm:$0xff]
      %v1683 = vld [vmem:[#allocation2 + $0xa0] sm:$0xff]
      %v1684 = vld [vmem:[#allocation2 + $0xa8] sm:$0xff]
      %v1685 = vld [vmem:[#allocation2 + $0xb0] sm:$0xff]
      %v1686 = vld [vmem:[#allocation2 + $0xb8] sm:$0xff]
      %v1687 = vld [vmem:[#allocation2 + $0xc0] sm:$0xff]
      %v1688 = vld [vmem:[#allocation2 + $0xc8] sm:$0xff]
      %v1689 = vld [vmem:[#allocation2 + $0xd0] sm:$0xff]
      %v1690 = vld [vmem:[#allocation2 + $0xd8] sm:$0xff]
      %v1691 = vld [vmem:[#allocation2 + $0xe0] sm:$0xff]
      %v1692 = vld [vmem:[#allocation2 + $0xe8] sm:$0xff]
      %v1693 = vld [vmem:[#allocation2 + $0xf0] sm:$0xff]
      %v1694 = vld [vmem:[#allocation2 + $0xf8] sm:$0xff]
      %v1695 = vld [vmem:[#allocation2 + $0x100] sm:$0xff]
      %v1696 = vpack.c.bf16 %v1665, %v1664
      %v1697 = vpack.c.bf16 %v1667, %v1666
      %v1698 = vpack.c.bf16 %v1669, %v1668
      %v1699 = vpack.c.bf16 %v1671, %v1670
      %v1700 = vpack.c.bf16 %v1673, %v1672
      %v1701 = vpack.c.bf16 %v1675, %v1674
      %v1702 = vpack.c.bf16 %v1677, %v1676
      %v1703 = vpack.c.bf16 %v1679, %v1678
      %v1704 = vpack.c.bf16 %v1681, %v1680
      %v1705 = vpack.c.bf16 %v1683, %v1682
      %v1706 = vpack.c.bf16 %v1685, %v1684
      %v1707 = vpack.c.bf16 %v1687, %v1686
      %v1708 = vpack.c.bf16 %v1689, %v1688
      %v1709 = vpack.c.bf16 %v1691, %v1690
      %v1710 = vpack.c.bf16 %v1693, %v1692
      %v1711 = vpack.c.bf16 %v1695, %v1694
      %v1728 = vunpack.c.l.b16 %v1696
      %v1729 = vunpack.c.h.b16 %v1696
      %v1730 = vunpack.c.l.b16 %v1697
      %v1731 = vunpack.c.h.b16 %v1697
      %v1732 = vunpack.c.l.b16 %v1698
      %v1733 = vunpack.c.h.b16 %v1698
      %v1734 = vunpack.c.l.b16 %v1699
      %v1735 = vunpack.c.h.b16 %v1699
      %v1736 = vunpack.c.l.b16 %v1700
      %v1737 = vunpack.c.h.b16 %v1700
      %v1738 = vunpack.c.l.b16 %v1701
      %v1739 = vunpack.c.h.b16 %v1701
      %v1740 = vunpack.c.l.b16 %v1702
      %v1741 = vunpack.c.h.b16 %v1702
      %v1742 = vunpack.c.l.b16 %v1703
      %v1743 = vunpack.c.h.b16 %v1703
      %v1744 = vunpack.c.l.b16 %v1704
      %v1745 = vunpack.c.h.b16 %v1704
      %v1746 = vunpack.c.l.b16 %v1705
      %v1747 = vunpack.c.h.b16 %v1705
      %v1748 = vunpack.c.l.b16 %v1706
      %v1749 = vunpack.c.h.b16 %v1706
      %v1750 = vunpack.c.l.b16 %v1707
      %v1751 = vunpack.c.h.b16 %v1707
      %v1752 = vunpack.c.l.b16 %v1708
      %v1753 = vunpack.c.h.b16 %v1708
      %v1754 = vunpack.c.l.b16 %v1709
      %v1755 = vunpack.c.h.b16 %v1709
      %v1756 = vunpack.c.l.b16 %v1710
      %v1757 = vunpack.c.h.b16 %v1710
      %v1758 = vunpack.c.l.b16 %v1711
      %v1759 = vunpack.c.h.b16 %v1711
      %v1760 = vpack.c.b16 %v1728, %v1728
      %v1761 = vpack.c.b16 %v1729, %v1729
      %v1762 = vpack.c.b16 %v1730, %v1730
      %v1763 = vpack.c.b16 %v1731, %v1731
      %v1764 = vpack.c.b16 %v1732, %v1732
      %v1765 = vpack.c.b16 %v1733, %v1733
      %v1766 = vpack.c.b16 %v1734, %v1734
      %v1767 = vpack.c.b16 %v1735, %v1735
      %v1768 = vpack.c.b16 %v1736, %v1736
      %v1769 = vpack.c.b16 %v1737, %v1737
      %v1770 = vpack.c.b16 %v1738, %v1738
      %v1771 = vpack.c.b16 %v1739, %v1739
      %v1772 = vpack.c.b16 %v1740, %v1740
      %v1773 = vpack.c.b16 %v1741, %v1741
      %v1774 = vpack.c.b16 %v1742, %v1742
      %v1775 = vpack.c.b16 %v1743, %v1743
      %v1776 = vpack.c.b16 %v1744, %v1744
      %v1777 = vpack.c.b16 %v1745, %v1745
      %v1778 = vpack.c.b16 %v1746, %v1746
      %v1779 = vpack.c.b16 %v1747, %v1747
      %v1780 = vpack.c.b16 %v1748, %v1748
      %v1781 = vpack.c.b16 %v1749, %v1749
      %v1782 = vpack.c.b16 %v1750, %v1750
      %v1783 = vpack.c.b16 %v1751, %v1751
      %v1784 = vpack.c.b16 %v1752, %v1752
      %v1785 = vpack.c.b16 %v1753, %v1753
      %v1786 = vpack.c.b16 %v1754, %v1754
      %v1787 = vpack.c.b16 %v1755, %v1755
      %v1788 = vpack.c.b16 %v1756, %v1756
      %v1789 = vpack.c.b16 %v1757, %v1757
      %v1790 = vpack.c.b16 %v1758, %v1758
      %v1791 = vpack.c.b16 %v1759, %v1759
      %1792 = vrot.lane.b32.xlu0 %v1760, 96
      %v1793 = vpop.permute.xlu0 %1792
      %1794 = vrot.lane.b32.xlu0 %v1761, 96
      %v1795 = vpop.permute.xlu0 %1794
      %1796 = vrot.lane.b32.xlu0 %v1762, 96
      %v1797 = vpop.permute.xlu0 %1796
      %1798 = vrot.lane.b32.xlu0 %v1763, 96
      %v1799 = vpop.permute.xlu0 %1798
      %1800 = vrot.lane.b32.xlu0 %v1764, 96
      %v1801 = vpop.permute.xlu0 %1800
      %1802 = vrot.lane.b32.xlu0 %v1765, 96
      %v1803 = vpop.permute.xlu0 %1802
      %1804 = vrot.lane.b32.xlu0 %v1766, 96
      %v1805 = vpop.permute.xlu0 %1804
      %1806 = vrot.lane.b32.xlu0 %v1767, 96
      %v1807 = vpop.permute.xlu0 %1806
      %1808 = vrot.lane.b32.xlu0 %v1768, 96
      %v1809 = vpop.permute.xlu0 %1808
      %1810 = vrot.lane.b32.xlu0 %v1769, 96
      %v1811 = vpop.permute.xlu0 %1810
      %1812 = vrot.lane.b32.xlu0 %v1770, 96
      %v1813 = vpop.permute.xlu0 %1812
      %1814 = vrot.lane.b32.xlu0 %v1771, 96
      %v1815 = vpop.permute.xlu0 %1814
      %1816 = vrot.lane.b32.xlu0 %v1772, 96
      %v1817 = vpop.permute.xlu0 %1816
      %1818 = vrot.lane.b32.xlu0 %v1773, 96
      %v1819 = vpop.permute.xlu0 %1818
      %1820 = vrot.lane.b32.xlu0 %v1774, 96
      %v1821 = vpop.permute.xlu0 %1820
      %1822 = vrot.lane.b32.xlu0 %v1775, 96
      %v1823 = vpop.permute.xlu0 %1822
      %1824 = vrot.lane.b32.xlu0 %v1776, 96
      %v1825 = vpop.permute.xlu0 %1824
      %1826 = vrot.lane.b32.xlu0 %v1777, 96
      %v1827 = vpop.permute.xlu0 %1826
      %1828 = vrot.lane.b32.xlu0 %v1778, 96
      %v1829 = vpop.permute.xlu0 %1828
      %1830 = vrot.lane.b32.xlu0 %v1779, 96
      %v1831 = vpop.permute.xlu0 %1830
      %1832 = vrot.lane.b32.xlu0 %v1780, 96
      %v1833 = vpop.permute.xlu0 %1832
      %1834 = vrot.lane.b32.xlu0 %v1781, 96
      %v1835 = vpop.permute.xlu0 %1834
      %1836 = vrot.lane.b32.xlu0 %v1782, 96
      %v1837 = vpop.permute.xlu0 %1836
      %1838 = vrot.lane.b32.xlu0 %v1783, 96
      %v1839 = vpop.permute.xlu0 %1838
      %1840 = vrot.lane.b32.xlu0 %v1784, 96
      %v1841 = vpop.permute.xlu0 %1840
      %1842 = vrot.lane.b32.xlu0 %v1785, 96
      %v1843 = vpop.permute.xlu0 %1842
      %1844 = vrot.lane.b32.xlu0 %v1786, 96
      %v1845 = vpop.permute.xlu0 %1844
      %1846 = vrot.lane.b32.xlu0 %v1787, 96
      %v1847 = vpop.permute.xlu0 %1846
      %1848 = vrot.lane.b32.xlu0 %v1788, 96
      %v1849 = vpop.permute.xlu0 %1848
      %1850 = vrot.lane.b32.xlu0 %v1789, 96
      %v1851 = vpop.permute.xlu0 %1850
      %1852 = vrot.lane.b32.xlu0 %v1790, 96
      %v1853 = vpop.permute.xlu0 %1852
      %1854 = vrot.lane.b32.xlu0 %v1791, 96
      %v1855 = vpop.permute.xlu0 %1854
      %vm1888 = vcmask 978688
      %1889 = vst.msk [vmem:[#allocation3] sm:$0xf] %vm1888, %v1793
      %1890 = vst.msk [vmem:[#allocation3 + $0x8] sm:$0xf] %vm1888, %v1795
      %1891 = vst.msk [vmem:[#allocation3 + $0x10] sm:$0xf] %vm1888, %v1797
      %1892 = vst.msk [vmem:[#allocation3 + $0x18] sm:$0xf] %vm1888, %v1799
      %1893 = vst.msk [vmem:[#allocation3 + $0x20] sm:$0xf] %vm1888, %v1801
      %1894 = vst.msk [vmem:[#allocation3 + $0x28] sm:$0xf] %vm1888, %v1803
      %1895 = vst.msk [vmem:[#allocation3 + $0x30] sm:$0xf] %vm1888, %v1805
      %1896 = vst.msk [vmem:[#allocation3 + $0x38] sm:$0xf] %vm1888, %v1807
      %1897 = vst.msk [vmem:[#allocation3 + $0x40] sm:$0xf] %vm1888, %v1809
      %1898 = vst.msk [vmem:[#allocation3 + $0x48] sm:$0xf] %vm1888, %v1811
      %1899 = vst.msk [vmem:[#allocation3 + $0x50] sm:$0xf] %vm1888, %v1813
      %1900 = vst.msk [vmem:[#allocation3 + $0x58] sm:$0xf] %vm1888, %v1815
      %1901 = vst.msk [vmem:[#allocation3 + $0x60] sm:$0xf] %vm1888, %v1817
      %1902 = vst.msk [vmem:[#allocation3 + $0x68] sm:$0xf] %vm1888, %v1819
      %1903 = vst.msk [vmem:[#allocation3 + $0x70] sm:$0xf] %vm1888, %v1821
      %1904 = vst.msk [vmem:[#allocation3 + $0x78] sm:$0xf] %vm1888, %v1823
      %1905 = vst.msk [vmem:[#allocation3 + $0x80] sm:$0xf] %vm1888, %v1825
      %1906 = vst.msk [vmem:[#allocation3 + $0x88] sm:$0xf] %vm1888, %v1827
      %1907 = vst.msk [vmem:[#allocation3 + $0x90] sm:$0xf] %vm1888, %v1829
      %1908 = vst.msk [vmem:[#allocation3 + $0x98] sm:$0xf] %vm1888, %v1831
      %1909 = vst.msk [vmem:[#allocation3 + $0xa0] sm:$0xf] %vm1888, %v1833
      %1910 = vst.msk [vmem:[#allocation3 + $0xa8] sm:$0xf] %vm1888, %v1835
      %1911 = vst.msk [vmem:[#allocation3 + $0xb0] sm:$0xf] %vm1888, %v1837
      %1912 = vst.msk [vmem:[#allocation3 + $0xb8] sm:$0xf] %vm1888, %v1839
      %1913 = vst.msk [vmem:[#allocation3 + $0xc0] sm:$0xf] %vm1888, %v1841
      %1914 = vst.msk [vmem:[#allocation3 + $0xc8] sm:$0xf] %vm1888, %v1843
      %1915 = vst.msk [vmem:[#allocation3 + $0xd0] sm:$0xf] %vm1888, %v1845
      %1916 = vst.msk [vmem:[#allocation3 + $0xd8] sm:$0xf] %vm1888, %v1847
      %1917 = vst.msk [vmem:[#allocation3 + $0xe0] sm:$0xf] %vm1888, %v1849
      %1918 = vst.msk [vmem:[#allocation3 + $0xe8] sm:$0xf] %vm1888, %v1851
      %1919 = vst.msk [vmem:[#allocation3 + $0xf0] sm:$0xf] %vm1888, %v1853
      %1920 = vst.msk [vmem:[#allocation3 + $0xf8] sm:$0xf] %vm1888, %v1855
      %v1921 = vld [vmem:[#allocation2 + $0x9] sm:$0xff]
      %v1922 = vld [vmem:[#allocation2 + $0x11] sm:$0xff]
      %v1923 = vld [vmem:[#allocation2 + $0x19] sm:$0xff]
      %v1924 = vld [vmem:[#allocation2 + $0x21] sm:$0xff]
      %v1925 = vld [vmem:[#allocation2 + $0x29] sm:$0xff]
      %v1926 = vld [vmem:[#allocation2 + $0x31] sm:$0xff]
      %v1927 = vld [vmem:[#allocation2 + $0x39] sm:$0xff]
      %v1928 = vld [vmem:[#allocation2 + $0x41] sm:$0xff]
      %v1929 = vld [vmem:[#allocation2 + $0x49] sm:$0xff]
      %v1930 = vld [vmem:[#allocation2 + $0x51] sm:$0xff]
      %v1931 = vld [vmem:[#allocation2 + $0x59] sm:$0xff]
      %v1932 = vld [vmem:[#allocation2 + $0x61] sm:$0xff]
      %v1933 = vld [vmem:[#allocation2 + $0x69] sm:$0xff]
      %v1934 = vld [vmem:[#allocation2 + $0x71] sm:$0xff]
      %v1935 = vld [vmem:[#allocation2 + $0x79] sm:$0xff]
      %v1936 = vld [vmem:[#allocation2 + $0x81] sm:$0xff]
      %v1937 = vld [vmem:[#allocation2 + $0x89] sm:$0xff]
      %v1938 = vld [vmem:[#allocation2 + $0x91] sm:$0xff]
      %v1939 = vld [vmem:[#allocation2 + $0x99] sm:$0xff]
      %v1940 = vld [vmem:[#allocation2 + $0xa1] sm:$0xff]
      %v1941 = vld [vmem:[#allocation2 + $0xa9] sm:$0xff]
      %v1942 = vld [vmem:[#allocation2 + $0xb1] sm:$0xff]
      %v1943 = vld [vmem:[#allocation2 + $0xb9] sm:$0xff]
      %v1944 = vld [vmem:[#allocation2 + $0xc1] sm:$0xff]
      %v1945 = vld [vmem:[#allocation2 + $0xc9] sm:$0xff]
      %v1946 = vld [vmem:[#allocation2 + $0xd1] sm:$0xff]
      %v1947 = vld [vmem:[#allocation2 + $0xd9] sm:$0xff]
      %v1948 = vld [vmem:[#allocation2 + $0xe1] sm:$0xff]
      %v1949 = vld [vmem:[#allocation2 + $0xe9] sm:$0xff]
      %v1950 = vld [vmem:[#allocation2 + $0xf1] sm:$0xff]
      %v1951 = vld [vmem:[#allocation2 + $0xf9] sm:$0xff]
      %v1952 = vld [vmem:[#allocation2 + $0x101] sm:$0xff]
      %v1953 = vpack.c.bf16 %v1922, %v1921
      %v1954 = vpack.c.bf16 %v1924, %v1923
      %v1955 = vpack.c.bf16 %v1926, %v1925
      %v1956 = vpack.c.bf16 %v1928, %v1927
      %v1957 = vpack.c.bf16 %v1930, %v1929
      %v1958 = vpack.c.bf16 %v1932, %v1931
      %v1959 = vpack.c.bf16 %v1934, %v1933
      %v1960 = vpack.c.bf16 %v1936, %v1935
      %v1961 = vpack.c.bf16 %v1938, %v1937
      %v1962 = vpack.c.bf16 %v1940, %v1939
      %v1963 = vpack.c.bf16 %v1942, %v1941
      %v1964 = vpack.c.bf16 %v1944, %v1943
      %v1965 = vpack.c.bf16 %v1946, %v1945
      %v1966 = vpack.c.bf16 %v1948, %v1947
      %v1967 = vpack.c.bf16 %v1950, %v1949
      %v1968 = vpack.c.bf16 %v1952, %v1951
      %v1985 = vunpack.c.l.b16 %v1953
      %v1986 = vunpack.c.h.b16 %v1953
      %v1987 = vunpack.c.l.b16 %v1954
      %v1988 = vunpack.c.h.b16 %v1954
      %v1989 = vunpack.c.l.b16 %v1955
      %v1990 = vunpack.c.h.b16 %v1955
      %v1991 = vunpack.c.l.b16 %v1956
      %v1992 = vunpack.c.h.b16 %v1956
      %v1993 = vunpack.c.l.b16 %v1957
      %v1994 = vunpack.c.h.b16 %v1957
      %v1995 = vunpack.c.l.b16 %v1958
      %v1996 = vunpack.c.h.b16 %v1958
      %v1997 = vunpack.c.l.b16 %v1959
      %v1998 = vunpack.c.h.b16 %v1959
      %v1999 = vunpack.c.l.b16 %v1960
      %v2000 = vunpack.c.h.b16 %v1960
      %v2001 = vunpack.c.l.b16 %v1961
      %v2002 = vunpack.c.h.b16 %v1961
      %v2003 = vunpack.c.l.b16 %v1962
      %v2004 = vunpack.c.h.b16 %v1962
      %v2005 = vunpack.c.l.b16 %v1963
      %v2006 = vunpack.c.h.b16 %v1963
      %v2007 = vunpack.c.l.b16 %v1964
      %v2008 = vunpack.c.h.b16 %v1964
      %v2009 = vunpack.c.l.b16 %v1965
      %v2010 = vunpack.c.h.b16 %v1965
      %v2011 = vunpack.c.l.b16 %v1966
      %v2012 = vunpack.c.h.b16 %v1966
      %v2013 = vunpack.c.l.b16 %v1967
      %v2014 = vunpack.c.h.b16 %v1967
      %v2015 = vunpack.c.l.b16 %v1968
      %v2016 = vunpack.c.h.b16 %v1968
      %v2017 = vpack.c.b16 %v1985, %v1985
      %v2018 = vpack.c.b16 %v1986, %v1986
      %v2019 = vpack.c.b16 %v1987, %v1987
      %v2020 = vpack.c.b16 %v1988, %v1988
      %v2021 = vpack.c.b16 %v1989, %v1989
      %v2022 = vpack.c.b16 %v1990, %v1990
      %v2023 = vpack.c.b16 %v1991, %v1991
      %v2024 = vpack.c.b16 %v1992, %v1992
      %v2025 = vpack.c.b16 %v1993, %v1993
      %v2026 = vpack.c.b16 %v1994, %v1994
      %v2027 = vpack.c.b16 %v1995, %v1995
      %v2028 = vpack.c.b16 %v1996, %v1996
      %v2029 = vpack.c.b16 %v1997, %v1997
      %v2030 = vpack.c.b16 %v1998, %v1998
      %v2031 = vpack.c.b16 %v1999, %v1999
      %v2032 = vpack.c.b16 %v2000, %v2000
      %v2033 = vpack.c.b16 %v2001, %v2001
      %v2034 = vpack.c.b16 %v2002, %v2002
      %v2035 = vpack.c.b16 %v2003, %v2003
      %v2036 = vpack.c.b16 %v2004, %v2004
      %v2037 = vpack.c.b16 %v2005, %v2005
      %v2038 = vpack.c.b16 %v2006, %v2006
      %v2039 = vpack.c.b16 %v2007, %v2007
      %v2040 = vpack.c.b16 %v2008, %v2008
      %v2041 = vpack.c.b16 %v2009, %v2009
      %v2042 = vpack.c.b16 %v2010, %v2010
      %v2043 = vpack.c.b16 %v2011, %v2011
      %v2044 = vpack.c.b16 %v2012, %v2012
      %v2045 = vpack.c.b16 %v2013, %v2013
      %v2046 = vpack.c.b16 %v2014, %v2014
      %v2047 = vpack.c.b16 %v2015, %v2015
      %v2048 = vpack.c.b16 %v2016, %v2016
      %2049 = vrot.lane.b32.xlu0 %v2017, 120
      %v2050 = vpop.permute.xlu0 %2049
      %2051 = vrot.lane.b32.xlu0 %v2018, 120
      %v2052 = vpop.permute.xlu0 %2051
      %2053 = vrot.lane.b32.xlu0 %v2019, 120
      %v2054 = vpop.permute.xlu0 %2053
      %2055 = vrot.lane.b32.xlu0 %v2020, 120
      %v2056 = vpop.permute.xlu0 %2055
      %2057 = vrot.lane.b32.xlu0 %v2021, 120
      %v2058 = vpop.permute.xlu0 %2057
      %2059 = vrot.lane.b32.xlu0 %v2022, 120
      %v2060 = vpop.permute.xlu0 %2059
      %2061 = vrot.lane.b32.xlu0 %v2023, 120
      %v2062 = vpop.permute.xlu0 %2061
      %2063 = vrot.lane.b32.xlu0 %v2024, 120
      %v2064 = vpop.permute.xlu0 %2063
      %2065 = vrot.lane.b32.xlu0 %v2025, 120
      %v2066 = vpop.permute.xlu0 %2065
      %2067 = vrot.lane.b32.xlu0 %v2026, 120
      %v2068 = vpop.permute.xlu0 %2067
      %2069 = vrot.lane.b32.xlu0 %v2027, 120
      %v2070 = vpop.permute.xlu0 %2069
      %2071 = vrot.lane.b32.xlu0 %v2028, 120
      %v2072 = vpop.permute.xlu0 %2071
      %2073 = vrot.lane.b32.xlu0 %v2029, 120
      %v2074 = vpop.permute.xlu0 %2073
      %2075 = vrot.lane.b32.xlu0 %v2030, 120
      %v2076 = vpop.permute.xlu0 %2075
      %2077 = vrot.lane.b32.xlu0 %v2031, 120
      %v2078 = vpop.permute.xlu0 %2077
      %2079 = vrot.lane.b32.xlu0 %v2032, 120
      %v2080 = vpop.permute.xlu0 %2079
      %2081 = vrot.lane.b32.xlu0 %v2033, 120
      %v2082 = vpop.permute.xlu0 %2081
      %2083 = vrot.lane.b32.xlu0 %v2034, 120
      %v2084 = vpop.permute.xlu0 %2083
      %2085 = vrot.lane.b32.xlu0 %v2035, 120
      %v2086 = vpop.permute.xlu0 %2085
      %2087 = vrot.lane.b32.xlu0 %v2036, 120
      %v2088 = vpop.permute.xlu0 %2087
      %2089 = vrot.lane.b32.xlu0 %v2037, 120
      %v2090 = vpop.permute.xlu0 %2089
      %2091 = vrot.lane.b32.xlu0 %v2038, 120
      %v2092 = vpop.permute.xlu0 %2091
      %2093 = vrot.lane.b32.xlu0 %v2039, 120
      %v2094 = vpop.permute.xlu0 %2093
      %2095 = vrot.lane.b32.xlu0 %v2040, 120
      %v2096 = vpop.permute.xlu0 %2095
      %2097 = vrot.lane.b32.xlu0 %v2041, 120
      %v2098 = vpop.permute.xlu0 %2097
      %2099 = vrot.lane.b32.xlu0 %v2042, 120
      %v2100 = vpop.permute.xlu0 %2099
      %2101 = vrot.lane.b32.xlu0 %v2043, 120
      %v2102 = vpop.permute.xlu0 %2101
      %2103 = vrot.lane.b32.xlu0 %v2044, 120
      %v2104 = vpop.permute.xlu0 %2103
      %2105 = vrot.lane.b32.xlu0 %v2045, 120
      %v2106 = vpop.permute.xlu0 %2105
      %2107 = vrot.lane.b32.xlu0 %v2046, 120
      %v2108 = vpop.permute.xlu0 %2107
      %2109 = vrot.lane.b32.xlu0 %v2047, 120
      %v2110 = vpop.permute.xlu0 %2109
      %2111 = vrot.lane.b32.xlu0 %v2048, 120
      %v2112 = vpop.permute.xlu0 %2111
      %v2113 = vrot.slane %v2050, 4
      %v2114 = vrot.slane %v2052, 4
      %v2115 = vrot.slane %v2054, 4
      %v2116 = vrot.slane %v2056, 4
      %v2117 = vrot.slane %v2058, 4
      %v2118 = vrot.slane %v2060, 4
      %v2119 = vrot.slane %v2062, 4
      %v2120 = vrot.slane %v2064, 4
      %v2121 = vrot.slane %v2066, 4
      %v2122 = vrot.slane %v2068, 4
      %v2123 = vrot.slane %v2070, 4
      %v2124 = vrot.slane %v2072, 4
      %v2125 = vrot.slane %v2074, 4
      %v2126 = vrot.slane %v2076, 4
      %v2127 = vrot.slane %v2078, 4
      %v2128 = vrot.slane %v2080, 4
      %v2129 = vrot.slane %v2082, 4
      %v2130 = vrot.slane %v2084, 4
      %v2131 = vrot.slane %v2086, 4
      %v2132 = vrot.slane %v2088, 4
      %v2133 = vrot.slane %v2090, 4
      %v2134 = vrot.slane %v2092, 4
      %v2135 = vrot.slane %v2094, 4
      %v2136 = vrot.slane %v2096, 4
      %v2137 = vrot.slane %v2098, 4
      %v2138 = vrot.slane %v2100, 4
      %v2139 = vrot.slane %v2102, 4
      %v2140 = vrot.slane %v2104, 4
      %v2141 = vrot.slane %v2106, 4
      %v2142 = vrot.slane %v2108, 4
      %v2143 = vrot.slane %v2110, 4
      %v2144 = vrot.slane %v2112, 4
      %vm2145 = vcmask 982016
      %v2146 = vsel %vm2145, %v2113, %v2050
      %v2147 = vsel %vm2145, %v2114, %v2052
      %v2148 = vsel %vm2145, %v2115, %v2054
      %v2149 = vsel %vm2145, %v2116, %v2056
      %v2150 = vsel %vm2145, %v2117, %v2058
      %v2151 = vsel %vm2145, %v2118, %v2060
      %v2152 = vsel %vm2145, %v2119, %v2062
      %v2153 = vsel %vm2145, %v2120, %v2064
      %v2154 = vsel %vm2145, %v2121, %v2066
      %v2155 = vsel %vm2145, %v2122, %v2068
      %v2156 = vsel %vm2145, %v2123, %v2070
      %v2157 = vsel %vm2145, %v2124, %v2072
      %v2158 = vsel %vm2145, %v2125, %v2074
      %v2159 = vsel %vm2145, %v2126, %v2076
      %v2160 = vsel %vm2145, %v2127, %v2078
      %v2161 = vsel %vm2145, %v2128, %v2080
      %v2162 = vsel %vm2145, %v2129, %v2082
      %v2163 = vsel %vm2145, %v2130, %v2084
      %v2164 = vsel %vm2145, %v2131, %v2086
      %v2165 = vsel %vm2145, %v2132, %v2088
      %v2166 = vsel %vm2145, %v2133, %v2090
      %v2167 = vsel %vm2145, %v2134, %v2092
      %v2168 = vsel %vm2145, %v2135, %v2094
      %v2169 = vsel %vm2145, %v2136, %v2096
      %v2170 = vsel %vm2145, %v2137, %v2098
      %v2171 = vsel %vm2145, %v2138, %v2100
      %v2172 = vsel %vm2145, %v2139, %v2102
      %v2173 = vsel %vm2145, %v2140, %v2104
      %v2174 = vsel %vm2145, %v2141, %v2106
      %v2175 = vsel %vm2145, %v2142, %v2108
      %v2176 = vsel %vm2145, %v2143, %v2110
      %v2177 = vsel %vm2145, %v2144, %v2112
      %vm2210 = vcmask 1044416
      %vm2211 = vcmask 130052
      %vm2212 = vmor %vm2211, %vm2210
      %2213 = vst.msk [vmem:[#allocation3] sm:$0xff] %vm2212, %v2146
      %2214 = vst.msk [vmem:[#allocation3 + $0x8] sm:$0xff] %vm2212, %v2147
      %2215 = vst.msk [vmem:[#allocation3 + $0x10] sm:$0xff] %vm2212, %v2148
      %2216 = vst.msk [vmem:[#allocation3 + $0x18] sm:$0xff] %vm2212, %v2149
      %2217 = vst.msk [vmem:[#allocation3 + $0x20] sm:$0xff] %vm2212, %v2150
      %2218 = vst.msk [vmem:[#allocation3 + $0x28] sm:$0xff] %vm2212, %v2151
      %2219 = vst.msk [vmem:[#allocation3 + $0x30] sm:$0xff] %vm2212, %v2152
      %2220 = vst.msk [vmem:[#allocation3 + $0x38] sm:$0xff] %vm2212, %v2153
      %2221 = vst.msk [vmem:[#allocation3 + $0x40] sm:$0xff] %vm2212, %v2154
      %2222 = vst.msk [vmem:[#allocation3 + $0x48] sm:$0xff] %vm2212, %v2155
      %2223 = vst.msk [vmem:[#allocation3 + $0x50] sm:$0xff] %vm2212, %v2156
      %2224 = vst.msk [vmem:[#allocation3 + $0x58] sm:$0xff] %vm2212, %v2157
      %2225 = vst.msk [vmem:[#allocation3 + $0x60] sm:$0xff] %vm2212, %v2158
      %2226 = vst.msk [vmem:[#allocation3 + $0x68] sm:$0xff] %vm2212, %v2159
      %2227 = vst.msk [vmem:[#allocation3 + $0x70] sm:$0xff] %vm2212, %v2160
      %2228 = vst.msk [vmem:[#allocation3 + $0x78] sm:$0xff] %vm2212, %v2161
      %2229 = vst.msk [vmem:[#allocation3 + $0x80] sm:$0xff] %vm2212, %v2162
      %2230 = vst.msk [vmem:[#allocation3 + $0x88] sm:$0xff] %vm2212, %v2163
      %2231 = vst.msk [vmem:[#allocation3 + $0x90] sm:$0xff] %vm2212, %v2164
      %2232 = vst.msk [vmem:[#allocation3 + $0x98] sm:$0xff] %vm2212, %v2165
      %2233 = vst.msk [vmem:[#allocation3 + $0xa0] sm:$0xff] %vm2212, %v2166
      %2234 = vst.msk [vmem:[#allocation3 + $0xa8] sm:$0xff] %vm2212, %v2167
      %2235 = vst.msk [vmem:[#allocation3 + $0xb0] sm:$0xff] %vm2212, %v2168
      %2236 = vst.msk [vmem:[#allocation3 + $0xb8] sm:$0xff] %vm2212, %v2169
      %2237 = vst.msk [vmem:[#allocation3 + $0xc0] sm:$0xff] %vm2212, %v2170
      %2238 = vst.msk [vmem:[#allocation3 + $0xc8] sm:$0xff] %vm2212, %v2171
      %2239 = vst.msk [vmem:[#allocation3 + $0xd0] sm:$0xff] %vm2212, %v2172
      %2240 = vst.msk [vmem:[#allocation3 + $0xd8] sm:$0xff] %vm2212, %v2173
      %2241 = vst.msk [vmem:[#allocation3 + $0xe0] sm:$0xff] %vm2212, %v2174
      %2242 = vst.msk [vmem:[#allocation3 + $0xe8] sm:$0xff] %vm2212, %v2175
      %2243 = vst.msk [vmem:[#allocation3 + $0xf0] sm:$0xff] %vm2212, %v2176
      %2244 = vst.msk [vmem:[#allocation3 + $0xf8] sm:$0xff] %vm2212, %v2177
      %v2245 = vld [vmem:[#allocation2 + $0xa] sm:$0xff]
      %v2246 = vld [vmem:[#allocation2 + $0x12] sm:$0xff]
      %v2247 = vld [vmem:[#allocation2 + $0x1a] sm:$0xff]
      %v2248 = vld [vmem:[#allocation2 + $0x22] sm:$0xff]
      %v2249 = vld [vmem:[#allocation2 + $0x2a] sm:$0xff]
      %v2250 = vld [vmem:[#allocation2 + $0x32] sm:$0xff]
      %v2251 = vld [vmem:[#allocation2 + $0x3a] sm:$0xff]
      %v2252 = vld [vmem:[#allocation2 + $0x42] sm:$0xff]
      %v2253 = vld [vmem:[#allocation2 + $0x4a] sm:$0xff]
      %v2254 = vld [vmem:[#allocation2 + $0x52] sm:$0xff]
      %v2255 = vld [vmem:[#allocation2 + $0x5a] sm:$0xff]
      %v2256 = vld [vmem:[#allocation2 + $0x62] sm:$0xff]
      %v2257 = vld [vmem:[#allocation2 + $0x6a] sm:$0xff]
      %v2258 = vld [vmem:[#allocation2 + $0x72] sm:$0xff]
      %v2259 = vld [vmem:[#allocation2 + $0x7a] sm:$0xff]
      %v2260 = vld [vmem:[#allocation2 + $0x82] sm:$0xff]
      %v2261 = vld [vmem:[#allocation2 + $0x8a] sm:$0xff]
      %v2262 = vld [vmem:[#allocation2 + $0x92] sm:$0xff]
      %v2263 = vld [vmem:[#allocation2 + $0x9a] sm:$0xff]
      %v2264 = vld [vmem:[#allocation2 + $0xa2] sm:$0xff]
      %v2265 = vld [vmem:[#allocation2 + $0xaa] sm:$0xff]
      %v2266 = vld [vmem:[#allocation2 + $0xb2] sm:$0xff]
      %v2267 = vld [vmem:[#allocation2 + $0xba] sm:$0xff]
      %v2268 = vld [vmem:[#allocation2 + $0xc2] sm:$0xff]
      %v2269 = vld [vmem:[#allocation2 + $0xca] sm:$0xff]
      %v2270 = vld [vmem:[#allocation2 + $0xd2] sm:$0xff]
      %v2271 = vld [vmem:[#allocation2 + $0xda] sm:$0xff]
      %v2272 = vld [vmem:[#allocation2 + $0xe2] sm:$0xff]
      %v2273 = vld [vmem:[#allocation2 + $0xea] sm:$0xff]
      %v2274 = vld [vmem:[#allocation2 + $0xf2] sm:$0xff]
      %v2275 = vld [vmem:[#allocation2 + $0xfa] sm:$0xff]
      %v2276 = vld [vmem:[#allocation2 + $0x102] sm:$0xff]
      %v2277 = vpack.c.bf16 %v2246, %v2245
      %v2278 = vpack.c.bf16 %v2248, %v2247
      %v2279 = vpack.c.bf16 %v2250, %v2249
      %v2280 = vpack.c.bf16 %v2252, %v2251
      %v2281 = vpack.c.bf16 %v2254, %v2253
      %v2282 = vpack.c.bf16 %v2256, %v2255
      %v2283 = vpack.c.bf16 %v2258, %v2257
      %v2284 = vpack.c.bf16 %v2260, %v2259
      %v2285 = vpack.c.bf16 %v2262, %v2261
      %v2286 = vpack.c.bf16 %v2264, %v2263
      %v2287 = vpack.c.bf16 %v2266, %v2265
      %v2288 = vpack.c.bf16 %v2268, %v2267
      %v2289 = vpack.c.bf16 %v2270, %v2269
      %v2290 = vpack.c.bf16 %v2272, %v2271
      %v2291 = vpack.c.bf16 %v2274, %v2273
      %v2292 = vpack.c.bf16 %v2276, %v2275
      %v2309 = vunpack.c.l.b16 %v2277
      %v2310 = vunpack.c.h.b16 %v2277
      %v2311 = vunpack.c.l.b16 %v2278
      %v2312 = vunpack.c.h.b16 %v2278
      %v2313 = vunpack.c.l.b16 %v2279
      %v2314 = vunpack.c.h.b16 %v2279
      %v2315 = vunpack.c.l.b16 %v2280
      %v2316 = vunpack.c.h.b16 %v2280
      %v2317 = vunpack.c.l.b16 %v2281
      %v2318 = vunpack.c.h.b16 %v2281
      %v2319 = vunpack.c.l.b16 %v2282
      %v2320 = vunpack.c.h.b16 %v2282
      %v2321 = vunpack.c.l.b16 %v2283
      %v2322 = vunpack.c.h.b16 %v2283
      %v2323 = vunpack.c.l.b16 %v2284
      %v2324 = vunpack.c.h.b16 %v2284
      %v2325 = vunpack.c.l.b16 %v2285
      %v2326 = vunpack.c.h.b16 %v2285
      %v2327 = vunpack.c.l.b16 %v2286
      %v2328 = vunpack.c.h.b16 %v2286
      %v2329 = vunpack.c.l.b16 %v2287
      %v2330 = vunpack.c.h.b16 %v2287
      %v2331 = vunpack.c.l.b16 %v2288
      %v2332 = vunpack.c.h.b16 %v2288
      %v2333 = vunpack.c.l.b16 %v2289
      %v2334 = vunpack.c.h.b16 %v2289
      %v2335 = vunpack.c.l.b16 %v2290
      %v2336 = vunpack.c.h.b16 %v2290
      %v2337 = vunpack.c.l.b16 %v2291
      %v2338 = vunpack.c.h.b16 %v2291
      %v2339 = vunpack.c.l.b16 %v2292
      %v2340 = vunpack.c.h.b16 %v2292
      %v2341 = vpack.c.b16 %v2309, %v2309
      %v2342 = vpack.c.b16 %v2310, %v2310
      %v2343 = vpack.c.b16 %v2311, %v2311
      %v2344 = vpack.c.b16 %v2312, %v2312
      %v2345 = vpack.c.b16 %v2313, %v2313
      %v2346 = vpack.c.b16 %v2314, %v2314
      %v2347 = vpack.c.b16 %v2315, %v2315
      %v2348 = vpack.c.b16 %v2316, %v2316
      %v2349 = vpack.c.b16 %v2317, %v2317
      %v2350 = vpack.c.b16 %v2318, %v2318
      %v2351 = vpack.c.b16 %v2319, %v2319
      %v2352 = vpack.c.b16 %v2320, %v2320
      %v2353 = vpack.c.b16 %v2321, %v2321
      %v2354 = vpack.c.b16 %v2322, %v2322
      %v2355 = vpack.c.b16 %v2323, %v2323
      %v2356 = vpack.c.b16 %v2324, %v2324
      %v2357 = vpack.c.b16 %v2325, %v2325
      %v2358 = vpack.c.b16 %v2326, %v2326
      %v2359 = vpack.c.b16 %v2327, %v2327
      %v2360 = vpack.c.b16 %v2328, %v2328
      %v2361 = vpack.c.b16 %v2329, %v2329
      %v2362 = vpack.c.b16 %v2330, %v2330
      %v2363 = vpack.c.b16 %v2331, %v2331
      %v2364 = vpack.c.b16 %v2332, %v2332
      %v2365 = vpack.c.b16 %v2333, %v2333
      %v2366 = vpack.c.b16 %v2334, %v2334
      %v2367 = vpack.c.b16 %v2335, %v2335
      %v2368 = vpack.c.b16 %v2336, %v2336
      %v2369 = vpack.c.b16 %v2337, %v2337
      %v2370 = vpack.c.b16 %v2338, %v2338
      %v2371 = vpack.c.b16 %v2339, %v2339
      %v2372 = vpack.c.b16 %v2340, %v2340
      %2373 = vrot.lane.b32.xlu0 %v2341, 16
      %v2374 = vpop.permute.xlu0 %2373
      %2375 = vrot.lane.b32.xlu0 %v2342, 16
      %v2376 = vpop.permute.xlu0 %2375
      %2377 = vrot.lane.b32.xlu0 %v2343, 16
      %v2378 = vpop.permute.xlu0 %2377
      %2379 = vrot.lane.b32.xlu0 %v2344, 16
      %v2380 = vpop.permute.xlu0 %2379
      %2381 = vrot.lane.b32.xlu0 %v2345, 16
      %v2382 = vpop.permute.xlu0 %2381
      %2383 = vrot.lane.b32.xlu0 %v2346, 16
      %v2384 = vpop.permute.xlu0 %2383
      %2385 = vrot.lane.b32.xlu0 %v2347, 16
      %v2386 = vpop.permute.xlu0 %2385
      %2387 = vrot.lane.b32.xlu0 %v2348, 16
      %v2388 = vpop.permute.xlu0 %2387
      %2389 = vrot.lane.b32.xlu0 %v2349, 16
      %v2390 = vpop.permute.xlu0 %2389
      %2391 = vrot.lane.b32.xlu0 %v2350, 16
      %v2392 = vpop.permute.xlu0 %2391
      %2393 = vrot.lane.b32.xlu0 %v2351, 16
      %v2394 = vpop.permute.xlu0 %2393
      %2395 = vrot.lane.b32.xlu0 %v2352, 16
      %v2396 = vpop.permute.xlu0 %2395
      %2397 = vrot.lane.b32.xlu0 %v2353, 16
      %v2398 = vpop.permute.xlu0 %2397
      %2399 = vrot.lane.b32.xlu0 %v2354, 16
      %v2400 = vpop.permute.xlu0 %2399
      %2401 = vrot.lane.b32.xlu0 %v2355, 16
      %v2402 = vpop.permute.xlu0 %2401
      %2403 = vrot.lane.b32.xlu0 %v2356, 16
      %v2404 = vpop.permute.xlu0 %2403
      %2405 = vrot.lane.b32.xlu0 %v2357, 16
      %v2406 = vpop.permute.xlu0 %2405
      %2407 = vrot.lane.b32.xlu0 %v2358, 16
      %v2408 = vpop.permute.xlu0 %2407
      %2409 = vrot.lane.b32.xlu0 %v2359, 16
      %v2410 = vpop.permute.xlu0 %2409
      %2411 = vrot.lane.b32.xlu0 %v2360, 16
      %v2412 = vpop.permute.xlu0 %2411
      %2413 = vrot.lane.b32.xlu0 %v2361, 16
      %v2414 = vpop.permute.xlu0 %2413
      %2415 = vrot.lane.b32.xlu0 %v2362, 16
      %v2416 = vpop.permute.xlu0 %2415
      %2417 = vrot.lane.b32.xlu0 %v2363, 16
      %v2418 = vpop.permute.xlu0 %2417
      %2419 = vrot.lane.b32.xlu0 %v2364, 16
      %v2420 = vpop.permute.xlu0 %2419
      %2421 = vrot.lane.b32.xlu0 %v2365, 16
      %v2422 = vpop.permute.xlu0 %2421
      %2423 = vrot.lane.b32.xlu0 %v2366, 16
      %v2424 = vpop.permute.xlu0 %2423
      %2425 = vrot.lane.b32.xlu0 %v2367, 16
      %v2426 = vpop.permute.xlu0 %2425
      %2427 = vrot.lane.b32.xlu0 %v2368, 16
      %v2428 = vpop.permute.xlu0 %2427
      %2429 = vrot.lane.b32.xlu0 %v2369, 16
      %v2430 = vpop.permute.xlu0 %2429
      %2431 = vrot.lane.b32.xlu0 %v2370, 16
      %v2432 = vpop.permute.xlu0 %2431
      %2433 = vrot.lane.b32.xlu0 %v2371, 16
      %v2434 = vpop.permute.xlu0 %2433
      %2435 = vrot.lane.b32.xlu0 %v2372, 16
      %v2436 = vpop.permute.xlu0 %2435
      %vm2469 = vcmask 322688
      %2470 = vst.msk [vmem:[#allocation3 + $0x4] sm:$0xf] %vm2469, %v2374
      %2471 = vst.msk [vmem:[#allocation3 + $0xc] sm:$0xf] %vm2469, %v2376
      %2472 = vst.msk [vmem:[#allocation3 + $0x14] sm:$0xf] %vm2469, %v2378
      %2473 = vst.msk [vmem:[#allocation3 + $0x1c] sm:$0xf] %vm2469, %v2380
      %2474 = vst.msk [vmem:[#allocation3 + $0x24] sm:$0xf] %vm2469, %v2382
      %2475 = vst.msk [vmem:[#allocation3 + $0x2c] sm:$0xf] %vm2469, %v2384
      %2476 = vst.msk [vmem:[#allocation3 + $0x34] sm:$0xf] %vm2469, %v2386
      %2477 = vst.msk [vmem:[#allocation3 + $0x3c] sm:$0xf] %vm2469, %v2388
      %2478 = vst.msk [vmem:[#allocation3 + $0x44] sm:$0xf] %vm2469, %v2390
      %2479 = vst.msk [vmem:[#allocation3 + $0x4c] sm:$0xf] %vm2469, %v2392
      %2480 = vst.msk [vmem:[#allocation3 + $0x54] sm:$0xf] %vm2469, %v2394
      %2481 = vst.msk [vmem:[#allocation3 + $0x5c] sm:$0xf] %vm2469, %v2396
      %2482 = vst.msk [vmem:[#allocation3 + $0x64] sm:$0xf] %vm2469, %v2398
      %2483 = vst.msk [vmem:[#allocation3 + $0x6c] sm:$0xf] %vm2469, %v2400
      %2484 = vst.msk [vmem:[#allocation3 + $0x74] sm:$0xf] %vm2469, %v2402
      %2485 = vst.msk [vmem:[#allocation3 + $0x7c] sm:$0xf] %vm2469, %v2404
      %2486 = vst.msk [vmem:[#allocation3 + $0x84] sm:$0xf] %vm2469, %v2406
      %2487 = vst.msk [vmem:[#allocation3 + $0x8c] sm:$0xf] %vm2469, %v2408
      %2488 = vst.msk [vmem:[#allocation3 + $0x94] sm:$0xf] %vm2469, %v2410
      %2489 = vst.msk [vmem:[#allocation3 + $0x9c] sm:$0xf] %vm2469, %v2412
      %2490 = vst.msk [vmem:[#allocation3 + $0xa4] sm:$0xf] %vm2469, %v2414
      %2491 = vst.msk [vmem:[#allocation3 + $0xac] sm:$0xf] %vm2469, %v2416
      %2492 = vst.msk [vmem:[#allocation3 + $0xb4] sm:$0xf] %vm2469, %v2418
      %2493 = vst.msk [vmem:[#allocation3 + $0xbc] sm:$0xf] %vm2469, %v2420
      %2494 = vst.msk [vmem:[#allocation3 + $0xc4] sm:$0xf] %vm2469, %v2422
      %2495 = vst.msk [vmem:[#allocation3 + $0xcc] sm:$0xf] %vm2469, %v2424
      %2496 = vst.msk [vmem:[#allocation3 + $0xd4] sm:$0xf] %vm2469, %v2426
      %2497 = vst.msk [vmem:[#allocation3 + $0xdc] sm:$0xf] %vm2469, %v2428
      %2498 = vst.msk [vmem:[#allocation3 + $0xe4] sm:$0xf] %vm2469, %v2430
      %2499 = vst.msk [vmem:[#allocation3 + $0xec] sm:$0xf] %vm2469, %v2432
      %2500 = vst.msk [vmem:[#allocation3 + $0xf4] sm:$0xf] %vm2469, %v2434
      %2501 = vst.msk [vmem:[#allocation3 + $0xfc] sm:$0xf] %vm2469, %v2436
      %v2502 = vld [vmem:[#allocation2 + $0xb] sm:$0xff]
      %v2503 = vld [vmem:[#allocation2 + $0x13] sm:$0xff]
      %v2504 = vld [vmem:[#allocation2 + $0x1b] sm:$0xff]
      %v2505 = vld [vmem:[#allocation2 + $0x23] sm:$0xff]
      %v2506 = vld [vmem:[#allocation2 + $0x2b] sm:$0xff]
      %v2507 = vld [vmem:[#allocation2 + $0x33] sm:$0xff]
      %v2508 = vld [vmem:[#allocation2 + $0x3b] sm:$0xff]
      %v2509 = vld [vmem:[#allocation2 + $0x43] sm:$0xff]
      %v2510 = vld [vmem:[#allocation2 + $0x4b] sm:$0xff]
      %v2511 = vld [vmem:[#allocation2 + $0x53] sm:$0xff]
      %v2512 = vld [vmem:[#allocation2 + $0x5b] sm:$0xff]
      %v2513 = vld [vmem:[#allocation2 + $0x63] sm:$0xff]
      %v2514 = vld [vmem:[#allocation2 + $0x6b] sm:$0xff]
      %v2515 = vld [vmem:[#allocation2 + $0x73] sm:$0xff]
      %v2516 = vld [vmem:[#allocation2 + $0x7b] sm:$0xff]
      %v2517 = vld [vmem:[#allocation2 + $0x83] sm:$0xff]
      %v2518 = vld [vmem:[#allocation2 + $0x8b] sm:$0xff]
      %v2519 = vld [vmem:[#allocation2 + $0x93] sm:$0xff]
      %v2520 = vld [vmem:[#allocation2 + $0x9b] sm:$0xff]
      %v2521 = vld [vmem:[#allocation2 + $0xa3] sm:$0xff]
      %v2522 = vld [vmem:[#allocation2 + $0xab] sm:$0xff]
      %v2523 = vld [vmem:[#allocation2 + $0xb3] sm:$0xff]
      %v2524 = vld [vmem:[#allocation2 + $0xbb] sm:$0xff]
      %v2525 = vld [vmem:[#allocation2 + $0xc3] sm:$0xff]
      %v2526 = vld [vmem:[#allocation2 + $0xcb] sm:$0xff]
      %v2527 = vld [vmem:[#allocation2 + $0xd3] sm:$0xff]
      %v2528 = vld [vmem:[#allocation2 + $0xdb] sm:$0xff]
      %v2529 = vld [vmem:[#allocation2 + $0xe3] sm:$0xff]
      %v2530 = vld [vmem:[#allocation2 + $0xeb] sm:$0xff]
      %v2531 = vld [vmem:[#allocation2 + $0xf3] sm:$0xff]
      %v2532 = vld [vmem:[#allocation2 + $0xfb] sm:$0xff]
      %v2533 = vld [vmem:[#allocation2 + $0x103] sm:$0xff]
      %v2534 = vpack.c.bf16 %v2503, %v2502
      %v2535 = vpack.c.bf16 %v2505, %v2504
      %v2536 = vpack.c.bf16 %v2507, %v2506
      %v2537 = vpack.c.bf16 %v2509, %v2508
      %v2538 = vpack.c.bf16 %v2511, %v2510
      %v2539 = vpack.c.bf16 %v2513, %v2512
      %v2540 = vpack.c.bf16 %v2515, %v2514
      %v2541 = vpack.c.bf16 %v2517, %v2516
      %v2542 = vpack.c.bf16 %v2519, %v2518
      %v2543 = vpack.c.bf16 %v2521, %v2520
      %v2544 = vpack.c.bf16 %v2523, %v2522
      %v2545 = vpack.c.bf16 %v2525, %v2524
      %v2546 = vpack.c.bf16 %v2527, %v2526
      %v2547 = vpack.c.bf16 %v2529, %v2528
      %v2548 = vpack.c.bf16 %v2531, %v2530
      %v2549 = vpack.c.bf16 %v2533, %v2532
      %v2566 = vunpack.c.l.b16 %v2534
      %v2567 = vunpack.c.h.b16 %v2534
      %v2568 = vunpack.c.l.b16 %v2535
      %v2569 = vunpack.c.h.b16 %v2535
      %v2570 = vunpack.c.l.b16 %v2536
      %v2571 = vunpack.c.h.b16 %v2536
      %v2572 = vunpack.c.l.b16 %v2537
      %v2573 = vunpack.c.h.b16 %v2537
      %v2574 = vunpack.c.l.b16 %v2538
      %v2575 = vunpack.c.h.b16 %v2538
      %v2576 = vunpack.c.l.b16 %v2539
      %v2577 = vunpack.c.h.b16 %v2539
      %v2578 = vunpack.c.l.b16 %v2540
      %v2579 = vunpack.c.h.b16 %v2540
      %v2580 = vunpack.c.l.b16 %v2541
      %v2581 = vunpack.c.h.b16 %v2541
      %v2582 = vunpack.c.l.b16 %v2542
      %v2583 = vunpack.c.h.b16 %v2542
      %v2584 = vunpack.c.l.b16 %v2543
      %v2585 = vunpack.c.h.b16 %v2543
      %v2586 = vunpack.c.l.b16 %v2544
      %v2587 = vunpack.c.h.b16 %v2544
      %v2588 = vunpack.c.l.b16 %v2545
      %v2589 = vunpack.c.h.b16 %v2545
      %v2590 = vunpack.c.l.b16 %v2546
      %v2591 = vunpack.c.h.b16 %v2546
      %v2592 = vunpack.c.l.b16 %v2547
      %v2593 = vunpack.c.h.b16 %v2547
      %v2594 = vunpack.c.l.b16 %v2548
      %v2595 = vunpack.c.h.b16 %v2548
      %v2596 = vunpack.c.l.b16 %v2549
      %v2597 = vunpack.c.h.b16 %v2549
      %v2598 = vpack.c.b16 %v2566, %v2566
      %v2599 = vpack.c.b16 %v2567, %v2567
      %v2600 = vpack.c.b16 %v2568, %v2568
      %v2601 = vpack.c.b16 %v2569, %v2569
      %v2602 = vpack.c.b16 %v2570, %v2570
      %v2603 = vpack.c.b16 %v2571, %v2571
      %v2604 = vpack.c.b16 %v2572, %v2572
      %v2605 = vpack.c.b16 %v2573, %v2573
      %v2606 = vpack.c.b16 %v2574, %v2574
      %v2607 = vpack.c.b16 %v2575, %v2575
      %v2608 = vpack.c.b16 %v2576, %v2576
      %v2609 = vpack.c.b16 %v2577, %v2577
      %v2610 = vpack.c.b16 %v2578, %v2578
      %v2611 = vpack.c.b16 %v2579, %v2579
      %v2612 = vpack.c.b16 %v2580, %v2580
      %v2613 = vpack.c.b16 %v2581, %v2581
      %v2614 = vpack.c.b16 %v2582, %v2582
      %v2615 = vpack.c.b16 %v2583, %v2583
      %v2616 = vpack.c.b16 %v2584, %v2584
      %v2617 = vpack.c.b16 %v2585, %v2585
      %v2618 = vpack.c.b16 %v2586, %v2586
      %v2619 = vpack.c.b16 %v2587, %v2587
      %v2620 = vpack.c.b16 %v2588, %v2588
      %v2621 = vpack.c.b16 %v2589, %v2589
      %v2622 = vpack.c.b16 %v2590, %v2590
      %v2623 = vpack.c.b16 %v2591, %v2591
      %v2624 = vpack.c.b16 %v2592, %v2592
      %v2625 = vpack.c.b16 %v2593, %v2593
      %v2626 = vpack.c.b16 %v2594, %v2594
      %v2627 = vpack.c.b16 %v2595, %v2595
      %v2628 = vpack.c.b16 %v2596, %v2596
      %v2629 = vpack.c.b16 %v2597, %v2597
      %2630 = vrot.lane.b32.xlu0 %v2598, 40
      %v2631 = vpop.permute.xlu0 %2630
      %2632 = vrot.lane.b32.xlu0 %v2599, 40
      %v2633 = vpop.permute.xlu0 %2632
      %2634 = vrot.lane.b32.xlu0 %v2600, 40
      %v2635 = vpop.permute.xlu0 %2634
      %2636 = vrot.lane.b32.xlu0 %v2601, 40
      %v2637 = vpop.permute.xlu0 %2636
      %2638 = vrot.lane.b32.xlu0 %v2602, 40
      %v2639 = vpop.permute.xlu0 %2638
      %2640 = vrot.lane.b32.xlu0 %v2603, 40
      %v2641 = vpop.permute.xlu0 %2640
      %2642 = vrot.lane.b32.xlu0 %v2604, 40
      %v2643 = vpop.permute.xlu0 %2642
      %2644 = vrot.lane.b32.xlu0 %v2605, 40
      %v2645 = vpop.permute.xlu0 %2644
      %2646 = vrot.lane.b32.xlu0 %v2606, 40
      %v2647 = vpop.permute.xlu0 %2646
      %2648 = vrot.lane.b32.xlu0 %v2607, 40
      %v2649 = vpop.permute.xlu0 %2648
      %2650 = vrot.lane.b32.xlu0 %v2608, 40
      %v2651 = vpop.permute.xlu0 %2650
      %2652 = vrot.lane.b32.xlu0 %v2609, 40
      %v2653 = vpop.permute.xlu0 %2652
      %2654 = vrot.lane.b32.xlu0 %v2610, 40
      %v2655 = vpop.permute.xlu0 %2654
      %2656 = vrot.lane.b32.xlu0 %v2611, 40
      %v2657 = vpop.permute.xlu0 %2656
      %2658 = vrot.lane.b32.xlu0 %v2612, 40
      %v2659 = vpop.permute.xlu0 %2658
      %2660 = vrot.lane.b32.xlu0 %v2613, 40
      %v2661 = vpop.permute.xlu0 %2660
      %2662 = vrot.lane.b32.xlu0 %v2614, 40
      %v2663 = vpop.permute.xlu0 %2662
      %2664 = vrot.lane.b32.xlu0 %v2615, 40
      %v2665 = vpop.permute.xlu0 %2664
      %2666 = vrot.lane.b32.xlu0 %v2616, 40
      %v2667 = vpop.permute.xlu0 %2666
      %2668 = vrot.lane.b32.xlu0 %v2617, 40
      %v2669 = vpop.permute.xlu0 %2668
      %2670 = vrot.lane.b32.xlu0 %v2618, 40
      %v2671 = vpop.permute.xlu0 %2670
      %2672 = vrot.lane.b32.xlu0 %v2619, 40
      %v2673 = vpop.permute.xlu0 %2672
      %2674 = vrot.lane.b32.xlu0 %v2620, 40
      %v2675 = vpop.permute.xlu0 %2674
      %2676 = vrot.lane.b32.xlu0 %v2621, 40
      %v2677 = vpop.permute.xlu0 %2676
      %2678 = vrot.lane.b32.xlu0 %v2622, 40
      %v2679 = vpop.permute.xlu0 %2678
      %2680 = vrot.lane.b32.xlu0 %v2623, 40
      %v2681 = vpop.permute.xlu0 %2680
      %2682 = vrot.lane.b32.xlu0 %v2624, 40
      %v2683 = vpop.permute.xlu0 %2682
      %2684 = vrot.lane.b32.xlu0 %v2625, 40
      %v2685 = vpop.permute.xlu0 %2684
      %2686 = vrot.lane.b32.xlu0 %v2626, 40
      %v2687 = vpop.permute.xlu0 %2686
      %2688 = vrot.lane.b32.xlu0 %v2627, 40
      %v2689 = vpop.permute.xlu0 %2688
      %2690 = vrot.lane.b32.xlu0 %v2628, 40
      %v2691 = vpop.permute.xlu0 %2690
      %2692 = vrot.lane.b32.xlu0 %v2629, 40
      %v2693 = vpop.permute.xlu0 %2692
      %vm2726 = vcmask 519488
      %2727 = vst.msk [vmem:[#allocation3 + $0x4] sm:$0xf] %vm2726, %v2631
      %2728 = vst.msk [vmem:[#allocation3 + $0xc] sm:$0xf] %vm2726, %v2633
      %2729 = vst.msk [vmem:[#allocation3 + $0x14] sm:$0xf] %vm2726, %v2635
      %2730 = vst.msk [vmem:[#allocation3 + $0x1c] sm:$0xf] %vm2726, %v2637
      %2731 = vst.msk [vmem:[#allocation3 + $0x24] sm:$0xf] %vm2726, %v2639
      %2732 = vst.msk [vmem:[#allocation3 + $0x2c] sm:$0xf] %vm2726, %v2641
      %2733 = vst.msk [vmem:[#allocation3 + $0x34] sm:$0xf] %vm2726, %v2643
      %2734 = vst.msk [vmem:[#allocation3 + $0x3c] sm:$0xf] %vm2726, %v2645
      %2735 = vst.msk [vmem:[#allocation3 + $0x44] sm:$0xf] %vm2726, %v2647
      %2736 = vst.msk [vmem:[#allocation3 + $0x4c] sm:$0xf] %vm2726, %v2649
      %2737 = vst.msk [vmem:[#allocation3 + $0x54] sm:$0xf] %vm2726, %v2651
      %2738 = vst.msk [vmem:[#allocation3 + $0x5c] sm:$0xf] %vm2726, %v2653
      %2739 = vst.msk [vmem:[#allocation3 + $0x64] sm:$0xf] %vm2726, %v2655
      %2740 = vst.msk [vmem:[#allocation3 + $0x6c] sm:$0xf] %vm2726, %v2657
      %2741 = vst.msk [vmem:[#allocation3 + $0x74] sm:$0xf] %vm2726, %v2659
      %2742 = vst.msk [vmem:[#allocation3 + $0x7c] sm:$0xf] %vm2726, %v2661
      %2743 = vst.msk [vmem:[#allocation3 + $0x84] sm:$0xf] %vm2726, %v2663
      %2744 = vst.msk [vmem:[#allocation3 + $0x8c] sm:$0xf] %vm2726, %v2665
      %2745 = vst.msk [vmem:[#allocation3 + $0x94] sm:$0xf] %vm2726, %v2667
      %2746 = vst.msk [vmem:[#allocation3 + $0x9c] sm:$0xf] %vm2726, %v2669
      %2747 = vst.msk [vmem:[#allocation3 + $0xa4] sm:$0xf] %vm2726, %v2671
      %2748 = vst.msk [vmem:[#allocation3 + $0xac] sm:$0xf] %vm2726, %v2673
      %2749 = vst.msk [vmem:[#allocation3 + $0xb4] sm:$0xf] %vm2726, %v2675
      %2750 = vst.msk [vmem:[#allocation3 + $0xbc] sm:$0xf] %vm2726, %v2677
      %2751 = vst.msk [vmem:[#allocation3 + $0xc4] sm:$0xf] %vm2726, %v2679
      %2752 = vst.msk [vmem:[#allocation3 + $0xcc] sm:$0xf] %vm2726, %v2681
      %2753 = vst.msk [vmem:[#allocation3 + $0xd4] sm:$0xf] %vm2726, %v2683
      %2754 = vst.msk [vmem:[#allocation3 + $0xdc] sm:$0xf] %vm2726, %v2685
      %2755 = vst.msk [vmem:[#allocation3 + $0xe4] sm:$0xf] %vm2726, %v2687
      %2756 = vst.msk [vmem:[#allocation3 + $0xec] sm:$0xf] %vm2726, %v2689
      %2757 = vst.msk [vmem:[#allocation3 + $0xf4] sm:$0xf] %vm2726, %v2691
      %2758 = vst.msk [vmem:[#allocation3 + $0xfc] sm:$0xf] %vm2726, %v2693
      %v2759 = vld [vmem:[#allocation2 + $0xc] sm:$0xff]
      %v2760 = vld [vmem:[#allocation2 + $0x14] sm:$0xff]
      %v2761 = vld [vmem:[#allocation2 + $0x1c] sm:$0xff]
      %v2762 = vld [vmem:[#allocation2 + $0x24] sm:$0xff]
      %v2763 = vld [vmem:[#allocation2 + $0x2c] sm:$0xff]
      %v2764 = vld [vmem:[#allocation2 + $0x34] sm:$0xff]
      %v2765 = vld [vmem:[#allocation2 + $0x3c] sm:$0xff]
      %v2766 = vld [vmem:[#allocation2 + $0x44] sm:$0xff]
      %v2767 = vld [vmem:[#allocation2 + $0x4c] sm:$0xff]
      %v2768 = vld [vmem:[#allocation2 + $0x54] sm:$0xff]
      %v2769 = vld [vmem:[#allocation2 + $0x5c] sm:$0xff]
      %v2770 = vld [vmem:[#allocation2 + $0x64] sm:$0xff]
      %v2771 = vld [vmem:[#allocation2 + $0x6c] sm:$0xff]
      %v2772 = vld [vmem:[#allocation2 + $0x74] sm:$0xff]
      %v2773 = vld [vmem:[#allocation2 + $0x7c] sm:$0xff]
      %v2774 = vld [vmem:[#allocation2 + $0x84] sm:$0xff]
      %v2775 = vld [vmem:[#allocation2 + $0x8c] sm:$0xff]
      %v2776 = vld [vmem:[#allocation2 + $0x94] sm:$0xff]
      %v2777 = vld [vmem:[#allocation2 + $0x9c] sm:$0xff]
      %v2778 = vld [vmem:[#allocation2 + $0xa4] sm:$0xff]
      %v2779 = vld [vmem:[#allocation2 + $0xac] sm:$0xff]
      %v2780 = vld [vmem:[#allocation2 + $0xb4] sm:$0xff]
      %v2781 = vld [vmem:[#allocation2 + $0xbc] sm:$0xff]
      %v2782 = vld [vmem:[#allocation2 + $0xc4] sm:$0xff]
      %v2783 = vld [vmem:[#allocation2 + $0xcc] sm:$0xff]
      %v2784 = vld [vmem:[#allocation2 + $0xd4] sm:$0xff]
      %v2785 = vld [vmem:[#allocation2 + $0xdc] sm:$0xff]
      %v2786 = vld [vmem:[#allocation2 + $0xe4] sm:$0xff]
      %v2787 = vld [vmem:[#allocation2 + $0xec] sm:$0xff]
      %v2788 = vld [vmem:[#allocation2 + $0xf4] sm:$0xff]
      %v2789 = vld [vmem:[#allocation2 + $0xfc] sm:$0xff]
      %v2790 = vld [vmem:[#allocation2 + $0x104] sm:$0xff]
      %v2791 = vpack.c.bf16 %v2760, %v2759
      %v2792 = vpack.c.bf16 %v2762, %v2761
      %v2793 = vpack.c.bf16 %v2764, %v2763
      %v2794 = vpack.c.bf16 %v2766, %v2765
      %v2795 = vpack.c.bf16 %v2768, %v2767
      %v2796 = vpack.c.bf16 %v2770, %v2769
      %v2797 = vpack.c.bf16 %v2772, %v2771
      %v2798 = vpack.c.bf16 %v2774, %v2773
      %v2799 = vpack.c.bf16 %v2776, %v2775
      %v2800 = vpack.c.bf16 %v2778, %v2777
      %v2801 = vpack.c.bf16 %v2780, %v2779
      %v2802 = vpack.c.bf16 %v2782, %v2781
      %v2803 = vpack.c.bf16 %v2784, %v2783
      %v2804 = vpack.c.bf16 %v2786, %v2785
      %v2805 = vpack.c.bf16 %v2788, %v2787
      %v2806 = vpack.c.bf16 %v2790, %v2789
      %v2823 = vunpack.c.l.b16 %v2791
      %v2824 = vunpack.c.h.b16 %v2791
      %v2825 = vunpack.c.l.b16 %v2792
      %v2826 = vunpack.c.h.b16 %v2792
      %v2827 = vunpack.c.l.b16 %v2793
      %v2828 = vunpack.c.h.b16 %v2793
      %v2829 = vunpack.c.l.b16 %v2794
      %v2830 = vunpack.c.h.b16 %v2794
      %v2831 = vunpack.c.l.b16 %v2795
      %v2832 = vunpack.c.h.b16 %v2795
      %v2833 = vunpack.c.l.b16 %v2796
      %v2834 = vunpack.c.h.b16 %v2796
      %v2835 = vunpack.c.l.b16 %v2797
      %v2836 = vunpack.c.h.b16 %v2797
      %v2837 = vunpack.c.l.b16 %v2798
      %v2838 = vunpack.c.h.b16 %v2798
      %v2839 = vunpack.c.l.b16 %v2799
      %v2840 = vunpack.c.h.b16 %v2799
      %v2841 = vunpack.c.l.b16 %v2800
      %v2842 = vunpack.c.h.b16 %v2800
      %v2843 = vunpack.c.l.b16 %v2801
      %v2844 = vunpack.c.h.b16 %v2801
      %v2845 = vunpack.c.l.b16 %v2802
      %v2846 = vunpack.c.h.b16 %v2802
      %v2847 = vunpack.c.l.b16 %v2803
      %v2848 = vunpack.c.h.b16 %v2803
      %v2849 = vunpack.c.l.b16 %v2804
      %v2850 = vunpack.c.h.b16 %v2804
      %v2851 = vunpack.c.l.b16 %v2805
      %v2852 = vunpack.c.h.b16 %v2805
      %v2853 = vunpack.c.l.b16 %v2806
      %v2854 = vunpack.c.h.b16 %v2806
      %v2855 = vpack.c.b16 %v2823, %v2823
      %v2856 = vpack.c.b16 %v2824, %v2824
      %v2857 = vpack.c.b16 %v2825, %v2825
      %v2858 = vpack.c.b16 %v2826, %v2826
      %v2859 = vpack.c.b16 %v2827, %v2827
      %v2860 = vpack.c.b16 %v2828, %v2828
      %v2861 = vpack.c.b16 %v2829, %v2829
      %v2862 = vpack.c.b16 %v2830, %v2830
      %v2863 = vpack.c.b16 %v2831, %v2831
      %v2864 = vpack.c.b16 %v2832, %v2832
      %v2865 = vpack.c.b16 %v2833, %v2833
      %v2866 = vpack.c.b16 %v2834, %v2834
      %v2867 = vpack.c.b16 %v2835, %v2835
      %v2868 = vpack.c.b16 %v2836, %v2836
      %v2869 = vpack.c.b16 %v2837, %v2837
      %v2870 = vpack.c.b16 %v2838, %v2838
      %v2871 = vpack.c.b16 %v2839, %v2839
      %v2872 = vpack.c.b16 %v2840, %v2840
      %v2873 = vpack.c.b16 %v2841, %v2841
      %v2874 = vpack.c.b16 %v2842, %v2842
      %v2875 = vpack.c.b16 %v2843, %v2843
      %v2876 = vpack.c.b16 %v2844, %v2844
      %v2877 = vpack.c.b16 %v2845, %v2845
      %v2878 = vpack.c.b16 %v2846, %v2846
      %v2879 = vpack.c.b16 %v2847, %v2847
      %v2880 = vpack.c.b16 %v2848, %v2848
      %v2881 = vpack.c.b16 %v2849, %v2849
      %v2882 = vpack.c.b16 %v2850, %v2850
      %v2883 = vpack.c.b16 %v2851, %v2851
      %v2884 = vpack.c.b16 %v2852, %v2852
      %v2885 = vpack.c.b16 %v2853, %v2853
      %v2886 = vpack.c.b16 %v2854, %v2854
      %2887 = vrot.lane.b32.xlu0 %v2855, 64
      %v2888 = vpop.permute.xlu0 %2887
      %2889 = vrot.lane.b32.xlu0 %v2856, 64
      %v2890 = vpop.permute.xlu0 %2889
      %2891 = vrot.lane.b32.xlu0 %v2857, 64
      %v2892 = vpop.permute.xlu0 %2891
      %2893 = vrot.lane.b32.xlu0 %v2858, 64
      %v2894 = vpop.permute.xlu0 %2893
      %2895 = vrot.lane.b32.xlu0 %v2859, 64
      %v2896 = vpop.permute.xlu0 %2895
      %2897 = vrot.lane.b32.xlu0 %v2860, 64
      %v2898 = vpop.permute.xlu0 %2897
      %2899 = vrot.lane.b32.xlu0 %v2861, 64
      %v2900 = vpop.permute.xlu0 %2899
      %2901 = vrot.lane.b32.xlu0 %v2862, 64
      %v2902 = vpop.permute.xlu0 %2901
      %2903 = vrot.lane.b32.xlu0 %v2863, 64
      %v2904 = vpop.permute.xlu0 %2903
      %2905 = vrot.lane.b32.xlu0 %v2864, 64
      %v2906 = vpop.permute.xlu0 %2905
      %2907 = vrot.lane.b32.xlu0 %v2865, 64
      %v2908 = vpop.permute.xlu0 %2907
      %2909 = vrot.lane.b32.xlu0 %v2866, 64
      %v2910 = vpop.permute.xlu0 %2909
      %2911 = vrot.lane.b32.xlu0 %v2867, 64
      %v2912 = vpop.permute.xlu0 %2911
      %2913 = vrot.lane.b32.xlu0 %v2868, 64
      %v2914 = vpop.permute.xlu0 %2913
      %2915 = vrot.lane.b32.xlu0 %v2869, 64
      %v2916 = vpop.permute.xlu0 %2915
      %2917 = vrot.lane.b32.xlu0 %v2870, 64
      %v2918 = vpop.permute.xlu0 %2917
      %2919 = vrot.lane.b32.xlu0 %v2871, 64
      %v2920 = vpop.permute.xlu0 %2919
      %2921 = vrot.lane.b32.xlu0 %v2872, 64
      %v2922 = vpop.permute.xlu0 %2921
      %2923 = vrot.lane.b32.xlu0 %v2873, 64
      %v2924 = vpop.permute.xlu0 %2923
      %2925 = vrot.lane.b32.xlu0 %v2874, 64
      %v2926 = vpop.permute.xlu0 %2925
      %2927 = vrot.lane.b32.xlu0 %v2875, 64
      %v2928 = vpop.permute.xlu0 %2927
      %2929 = vrot.lane.b32.xlu0 %v2876, 64
      %v2930 = vpop.permute.xlu0 %2929
      %2931 = vrot.lane.b32.xlu0 %v2877, 64
      %v2932 = vpop.permute.xlu0 %2931
      %2933 = vrot.lane.b32.xlu0 %v2878, 64
      %v2934 = vpop.permute.xlu0 %2933
      %2935 = vrot.lane.b32.xlu0 %v2879, 64
      %v2936 = vpop.permute.xlu0 %2935
      %2937 = vrot.lane.b32.xlu0 %v2880, 64
      %v2938 = vpop.permute.xlu0 %2937
      %2939 = vrot.lane.b32.xlu0 %v2881, 64
      %v2940 = vpop.permute.xlu0 %2939
      %2941 = vrot.lane.b32.xlu0 %v2882, 64
      %v2942 = vpop.permute.xlu0 %2941
      %2943 = vrot.lane.b32.xlu0 %v2883, 64
      %v2944 = vpop.permute.xlu0 %2943
      %2945 = vrot.lane.b32.xlu0 %v2884, 64
      %v2946 = vpop.permute.xlu0 %2945
      %2947 = vrot.lane.b32.xlu0 %v2885, 64
      %v2948 = vpop.permute.xlu0 %2947
      %2949 = vrot.lane.b32.xlu0 %v2886, 64
      %v2950 = vpop.permute.xlu0 %2949
      %vm2983 = vcmask 716288
      %2984 = vst.msk [vmem:[#allocation3 + $0x4] sm:$0xf] %vm2983, %v2888
      %2985 = vst.msk [vmem:[#allocation3 + $0xc] sm:$0xf] %vm2983, %v2890
      %2986 = vst.msk [vmem:[#allocation3 + $0x14] sm:$0xf] %vm2983, %v2892
      %2987 = vst.msk [vmem:[#allocation3 + $0x1c] sm:$0xf] %vm2983, %v2894
      %2988 = vst.msk [vmem:[#allocation3 + $0x24] sm:$0xf] %vm2983, %v2896
      %2989 = vst.msk [vmem:[#allocation3 + $0x2c] sm:$0xf] %vm2983, %v2898
      %2990 = vst.msk [vmem:[#allocation3 + $0x34] sm:$0xf] %vm2983, %v2900
      %2991 = vst.msk [vmem:[#allocation3 + $0x3c] sm:$0xf] %vm2983, %v2902
      %2992 = vst.msk [vmem:[#allocation3 + $0x44] sm:$0xf] %vm2983, %v2904
      %2993 = vst.msk [vmem:[#allocation3 + $0x4c] sm:$0xf] %vm2983, %v2906
      %2994 = vst.msk [vmem:[#allocation3 + $0x54] sm:$0xf] %vm2983, %v2908
      %2995 = vst.msk [vmem:[#allocation3 + $0x5c] sm:$0xf] %vm2983, %v2910
      %2996 = vst.msk [vmem:[#allocation3 + $0x64] sm:$0xf] %vm2983, %v2912
      %2997 = vst.msk [vmem:[#allocation3 + $0x6c] sm:$0xf] %vm2983, %v2914
      %2998 = vst.msk [vmem:[#allocation3 + $0x74] sm:$0xf] %vm2983, %v2916
      %2999 = vst.msk [vmem:[#allocation3 + $0x7c] sm:$0xf] %vm2983, %v2918
      %3000 = vst.msk [vmem:[#allocation3 + $0x84] sm:$0xf] %vm2983, %v2920
      %3001 = vst.msk [vmem:[#allocation3 + $0x8c] sm:$0xf] %vm2983, %v2922
      %3002 = vst.msk [vmem:[#allocation3 + $0x94] sm:$0xf] %vm2983, %v2924
      %3003 = vst.msk [vmem:[#allocation3 + $0x9c] sm:$0xf] %vm2983, %v2926
      %3004 = vst.msk [vmem:[#allocation3 + $0xa4] sm:$0xf] %vm2983, %v2928
      %3005 = vst.msk [vmem:[#allocation3 + $0xac] sm:$0xf] %vm2983, %v2930
      %3006 = vst.msk [vmem:[#allocation3 + $0xb4] sm:$0xf] %vm2983, %v2932
      %3007 = vst.msk [vmem:[#allocation3 + $0xbc] sm:$0xf] %vm2983, %v2934
      %3008 = vst.msk [vmem:[#allocation3 + $0xc4] sm:$0xf] %vm2983, %v2936
      %3009 = vst.msk [vmem:[#allocation3 + $0xcc] sm:$0xf] %vm2983, %v2938
      %3010 = vst.msk [vmem:[#allocation3 + $0xd4] sm:$0xf] %vm2983, %v2940
      %3011 = vst.msk [vmem:[#allocation3 + $0xdc] sm:$0xf] %vm2983, %v2942
      %3012 = vst.msk [vmem:[#allocation3 + $0xe4] sm:$0xf] %vm2983, %v2944
      %3013 = vst.msk [vmem:[#allocation3 + $0xec] sm:$0xf] %vm2983, %v2946
      %3014 = vst.msk [vmem:[#allocation3 + $0xf4] sm:$0xf] %vm2983, %v2948
      %3015 = vst.msk [vmem:[#allocation3 + $0xfc] sm:$0xf] %vm2983, %v2950
      %v3016 = vld [vmem:[#allocation3] sm:$0xff]
      %v3017 = vld [vmem:[#allocation3 + $0x8] sm:$0xff]
      %v3018 = vld [vmem:[#allocation3 + $0x10] sm:$0xff]
      %v3019 = vld [vmem:[#allocation3 + $0x18] sm:$0xff]
      %v3020 = vld [vmem:[#allocation3 + $0x20] sm:$0xff]
      %v3021 = vld [vmem:[#allocation3 + $0x28] sm:$0xff]
      %v3022 = vld [vmem:[#allocation3 + $0x30] sm:$0xff]
      %v3023 = vld [vmem:[#allocation3 + $0x38] sm:$0xff]
      %v3024 = vld [vmem:[#allocation3 + $0x40] sm:$0xff]
      %v3025 = vld [vmem:[#allocation3 + $0x48] sm:$0xff]
      %v3026 = vld [vmem:[#allocation3 + $0x50] sm:$0xff]
      %v3027 = vld [vmem:[#allocation3 + $0x58] sm:$0xff]
      %v3028 = vld [vmem:[#allocation3 + $0x60] sm:$0xff]
      %v3029 = vld [vmem:[#allocation3 + $0x68] sm:$0xff]
      %v3030 = vld [vmem:[#allocation3 + $0x70] sm:$0xff]
      %v3031 = vld [vmem:[#allocation3 + $0x78] sm:$0xff]
      %v3032 = vld [vmem:[#allocation3 + $0x80] sm:$0xff]
      %v3033 = vld [vmem:[#allocation3 + $0x88] sm:$0xff]
      %v3034 = vld [vmem:[#allocation3 + $0x90] sm:$0xff]
      %v3035 = vld [vmem:[#allocation3 + $0x98] sm:$0xff]
      %v3036 = vld [vmem:[#allocation3 + $0xa0] sm:$0xff]
      %v3037 = vld [vmem:[#allocation3 + $0xa8] sm:$0xff]
      %v3038 = vld [vmem:[#allocation3 + $0xb0] sm:$0xff]
      %v3039 = vld [vmem:[#allocation3 + $0xb8] sm:$0xff]
      %v3040 = vld [vmem:[#allocation3 + $0xc0] sm:$0xff]
      %v3041 = vld [vmem:[#allocation3 + $0xc8] sm:$0xff]
      %v3042 = vld [vmem:[#allocation3 + $0xd0] sm:$0xff]
      %v3043 = vld [vmem:[#allocation3 + $0xd8] sm:$0xff]
      %v3044 = vld [vmem:[#allocation3 + $0xe0] sm:$0xff]
      %v3045 = vld [vmem:[#allocation3 + $0xe8] sm:$0xff]
      %v3046 = vld [vmem:[#allocation3 + $0xf0] sm:$0xff]
      %v3047 = vld [vmem:[#allocation3 + $0xf8] sm:$0xff]
      %v3048 = vld [vmem:[%s3] sm:$0xf]
      %v3049 = vld [vmem:[%s3 + $0x4] sm:$0xf]
      %v3050 = vld [vmem:[%s3 + $0x8] sm:$0xf]
      %v3051 = vld [vmem:[%s3 + $0xc] sm:$0xf]
      %v3052 = vld [vmem:[%s3 + $0x10] sm:$0xf]
      %v3053 = vld [vmem:[%s3 + $0x14] sm:$0xf]
      %v3054 = vld [vmem:[%s3 + $0x18] sm:$0xf]
      %v3055 = vld [vmem:[%s3 + $0x1c] sm:$0xf]
      %v3056 = vld [vmem:[%s3 + $0x20] sm:$0xf]
      %v3057 = vld [vmem:[%s3 + $0x24] sm:$0xf]
      %v3058 = vld [vmem:[%s3 + $0x28] sm:$0xf]
      %v3059 = vld [vmem:[%s3 + $0x2c] sm:$0xf]
      %v3060 = vld [vmem:[%s3 + $0x30] sm:$0xf]
      %v3061 = vld [vmem:[%s3 + $0x34] sm:$0xf]
      %v3062 = vld [vmem:[%s3 + $0x38] sm:$0xf]
      %v3063 = vld [vmem:[%s3 + $0x3c] sm:$0xf]
      %v3064 = vld [vmem:[%s3 + $0x40] sm:$0xf]
      %v3065 = vld [vmem:[%s3 + $0x44] sm:$0xf]
      %v3066 = vld [vmem:[%s3 + $0x48] sm:$0xf]
      %v3067 = vld [vmem:[%s3 + $0x4c] sm:$0xf]
      %v3068 = vld [vmem:[%s3 + $0x50] sm:$0xf]
      %v3069 = vld [vmem:[%s3 + $0x54] sm:$0xf]
      %v3070 = vld [vmem:[%s3 + $0x58] sm:$0xf]
      %v3071 = vld [vmem:[%s3 + $0x5c] sm:$0xf]
      %v3072 = vld [vmem:[%s3 + $0x60] sm:$0xf]
      %v3073 = vld [vmem:[%s3 + $0x64] sm:$0xf]
      %v3074 = vld [vmem:[%s3 + $0x68] sm:$0xf]
      %v3076 = vlaneseq
      %v3077 = vshrl.u32 %v3076, 7
      %v3078 = vsub.s32 0, %v3077
      %v3079 = vrot.slane %v420, %v3078
      %v3113 = vunpack.c.l.b16 %v3016
      %v3114 = vunpack.c.h.b16 %v3016
      %v3115 = vunpack.c.l.b16 %v3017
      %v3116 = vunpack.c.h.b16 %v3017
      %v3117 = vunpack.c.l.b16 %v3018
      %v3118 = vunpack.c.h.b16 %v3018
      %v3119 = vunpack.c.l.b16 %v3019
      %v3120 = vunpack.c.h.b16 %v3019
      %v3121 = vunpack.c.l.b16 %v3020
      %v3122 = vunpack.c.h.b16 %v3020
      %v3123 = vunpack.c.l.b16 %v3021
      %v3124 = vunpack.c.h.b16 %v3021
      %v3125 = vunpack.c.l.b16 %v3022
      %v3126 = vunpack.c.h.b16 %v3022
      %v3127 = vunpack.c.l.b16 %v3023
      %v3128 = vunpack.c.h.b16 %v3023
      %v3129 = vunpack.c.l.b16 %v3024
      %v3130 = vunpack.c.h.b16 %v3024
      %v3131 = vunpack.c.l.b16 %v3025
      %v3132 = vunpack.c.h.b16 %v3025
      %v3133 = vunpack.c.l.b16 %v3026
      %v3134 = vunpack.c.h.b16 %v3026
      %v3135 = vunpack.c.l.b16 %v3027
      %v3136 = vunpack.c.h.b16 %v3027
      %v3137 = vunpack.c.l.b16 %v3028
      %v3138 = vunpack.c.h.b16 %v3028
      %v3139 = vunpack.c.l.b16 %v3029
      %v3140 = vunpack.c.h.b16 %v3029
      %v3141 = vunpack.c.l.b16 %v3030
      %v3142 = vunpack.c.h.b16 %v3030
      %v3143 = vunpack.c.l.b16 %v3031
      %v3144 = vunpack.c.h.b16 %v3031
      %v3145 = vunpack.c.l.b16 %v3032
      %v3146 = vunpack.c.h.b16 %v3032
      %v3147 = vunpack.c.l.b16 %v3033
      %v3148 = vunpack.c.h.b16 %v3033
      %v3149 = vunpack.c.l.b16 %v3034
      %v3150 = vunpack.c.h.b16 %v3034
      %v3151 = vunpack.c.l.b16 %v3035
      %v3152 = vunpack.c.h.b16 %v3035
      %v3153 = vunpack.c.l.b16 %v3036
      %v3154 = vunpack.c.h.b16 %v3036
      %v3155 = vunpack.c.l.b16 %v3037
      %v3156 = vunpack.c.h.b16 %v3037
      %v3157 = vunpack.c.l.b16 %v3038
      %v3158 = vunpack.c.h.b16 %v3038
      %v3159 = vunpack.c.l.b16 %v3039
      %v3160 = vunpack.c.h.b16 %v3039
      %v3161 = vunpack.c.l.b16 %v3040
      %v3162 = vunpack.c.h.b16 %v3040
      %v3163 = vunpack.c.l.b16 %v3041
      %v3164 = vunpack.c.h.b16 %v3041
      %v3165 = vunpack.c.l.b16 %v3042
      %v3166 = vunpack.c.h.b16 %v3042
      %v3167 = vunpack.c.l.b16 %v3043
      %v3168 = vunpack.c.h.b16 %v3043
      %v3169 = vunpack.c.l.b16 %v3044
      %v3170 = vunpack.c.h.b16 %v3044
      %v3171 = vunpack.c.l.b16 %v3045
      %v3172 = vunpack.c.h.b16 %v3045
      %v3173 = vunpack.c.l.b16 %v3046
      %v3174 = vunpack.c.h.b16 %v3046
      %v3175 = vunpack.c.l.b16 %v3047
      %v3176 = vunpack.c.h.b16 %v3047
      %v3177 = vpack.c.b16 %v3115, %v3113
      %v3178 = vpack.c.b16 %v3116, %v3114
      %v3179 = vpack.c.b16 %v3119, %v3117
      %v3180 = vpack.c.b16 %v3120, %v3118
      %v3181 = vpack.c.b16 %v3123, %v3121
      %v3182 = vpack.c.b16 %v3124, %v3122
      %v3183 = vpack.c.b16 %v3127, %v3125
      %v3184 = vpack.c.b16 %v3128, %v3126
      %v3185 = vpack.c.b16 %v3131, %v3129
      %v3186 = vpack.c.b16 %v3132, %v3130
      %v3187 = vpack.c.b16 %v3135, %v3133
      %v3188 = vpack.c.b16 %v3136, %v3134
      %v3189 = vpack.c.b16 %v3139, %v3137
      %v3190 = vpack.c.b16 %v3140, %v3138
      %v3191 = vpack.c.b16 %v3143, %v3141
      %v3192 = vpack.c.b16 %v3144, %v3142
      %v3193 = vpack.c.b16 %v3147, %v3145
      %v3194 = vpack.c.b16 %v3148, %v3146
      %v3195 = vpack.c.b16 %v3151, %v3149
      %v3196 = vpack.c.b16 %v3152, %v3150
      %v3197 = vpack.c.b16 %v3155, %v3153
      %v3198 = vpack.c.b16 %v3156, %v3154
      %v3199 = vpack.c.b16 %v3159, %v3157
      %v3200 = vpack.c.b16 %v3160, %v3158
      %v3201 = vpack.c.b16 %v3163, %v3161
      %v3202 = vpack.c.b16 %v3164, %v3162
      %v3203 = vpack.c.b16 %v3167, %v3165
      %v3204 = vpack.c.b16 %v3168, %v3166
      %v3205 = vpack.c.b16 %v3171, %v3169
      %v3206 = vpack.c.b16 %v3172, %v3170
      %v3207 = vpack.c.b16 %v3175, %v3173
      %v3208 = vpack.c.b16 %v3176, %v3174
      %v3252 = vunpack.c.l.b16 %v3048
      %v3253 = vunpack.c.l.b16 %v3049
      %v3254 = vunpack.c.l.b16 %v3050
      %v3255 = vunpack.c.l.b16 %v3051
      %v3256 = vunpack.c.l.b16 %v3052
      %v3257 = vunpack.c.l.b16 %v3053
      %v3258 = vunpack.c.l.b16 %v3054
      %v3259 = vunpack.c.l.b16 %v3055
      %v3260 = vunpack.c.l.b16 %v3056
      %v3261 = vunpack.c.l.b16 %v3057
      %v3262 = vunpack.c.l.b16 %v3058
      %v3263 = vunpack.c.l.b16 %v3059
      %v3264 = vunpack.c.l.b16 %v3060
      %v3265 = vunpack.c.l.b16 %v3061
      %v3266 = vunpack.c.l.b16 %v3062
      %v3267 = vunpack.c.l.b16 %v3063
      %v3268 = vunpack.c.l.b16 %v3064
      %v3269 = vunpack.c.l.b16 %v3065
      %v3270 = vunpack.c.l.b16 %v3066
      %v3271 = vunpack.c.l.b16 %v3067
      %v3272 = vunpack.c.l.b16 %v3068
      %v3273 = vunpack.c.l.b16 %v3069
      %v3274 = vunpack.c.l.b16 %v3070
      %v3275 = vunpack.c.l.b16 %v3071
      %v3276 = vunpack.c.l.b16 %v3072
      %v3277 = vunpack.c.l.b16 %v3073
      %v3278 = vunpack.c.l.b16 %v3074
      %v3279 = vpack.c.b16 %v3253, %v3252
      %v3280 = vpack.c.b16 %v3255, %v3254
      %v3281 = vpack.c.b16 %v3257, %v3256
      %v3282 = vpack.c.b16 %v3259, %v3258
      %v3283 = vpack.c.b16 %v3261, %v3260
      %v3284 = vpack.c.b16 %v3263, %v3262
      %v3285 = vpack.c.b16 %v3265, %v3264
      %v3286 = vpack.c.b16 %v3267, %v3266
      %v3287 = vpack.c.b16 %v3269, %v3268
      %v3288 = vpack.c.b16 %v3271, %v3270
      %v3289 = vpack.c.b16 %v3273, %v3272
      %v3290 = vpack.c.b16 %v3275, %v3274
      %v3291 = vpack.c.b16 %v3277, %v3276
      %v3292 = vpack.c.b16 %v3278, %v3278
      %vm3306 = vcmask 719872
      %v3308 = vsel %vm3306, %v3178, 0
      %v3311 = vsel %vm3306, %v3180, 0
      %v3314 = vsel %vm3306, %v3182, 0
      %v3317 = vsel %vm3306, %v3184, 0
      %v3320 = vsel %vm3306, %v3186, 0
      %v3323 = vsel %vm3306, %v3188, 0
      %v3326 = vsel %vm3306, %v3190, 0
      %v3329 = vsel %vm3306, %v3192, 0
      %v3332 = vsel %vm3306, %v3194, 0
      %v3335 = vsel %vm3306, %v3196, 0
      %v3338 = vsel %vm3306, %v3198, 0
      %v3341 = vsel %vm3306, %v3200, 0
      %v3344 = vsel %vm3306, %v3202, 0
      %v3347 = vsel %vm3306, %v3204, 0
      %v3350 = vsel %vm3306, %v3206, 0
      %v3353 = vsel %vm3306, %v3208, 0
      %vm3355 = vcmask 1043456
      %v3357 = vsel %vm3355, %v3292, 0
      %3359 = vmatprep.subr.bf16.mxu0 0
      %3360 = vmatpush1.bf16.msra.mxu0 %v3286
      %3361 = vmatprep.subr.bf16.mxu0 0
      %3362 = vmatpush1.bf16.msra.mxu0 %v3285
      %3363 = vmatprep.subr.bf16.mxu0 0
      %3364 = vmatpush1.bf16.msra.mxu0 %v3284
      %3365 = vmatprep.subr.bf16.mxu0 0
      %3366 = vmatpush1.bf16.msra.mxu0 %v3283
      %3367 = vmatprep.subr.bf16.mxu0 0
      %3368 = vmatpush1.bf16.msra.mxu0 %v3282
      %3369 = vmatprep.subr.bf16.mxu0 0
      %3370 = vmatpush1.bf16.msra.mxu0 %v3281
      %3371 = vmatprep.subr.bf16.mxu0 0
      %3372 = vmatpush1.bf16.msra.mxu0 %v3280
      %3373 = vmatprep.subr.bf16.mxu0 0
      %3374 = vmatpush1.bf16.msra.mxu0 %v3279
      %3375 = vmatprep.subr.bf16.mxu0 0
      %3376 = vmatpush2.bf16.msra.mxu0 0
      %3377 = vmatprep.subr.bf16.mxu0 0
      %3378 = vmatpush2.bf16.msra.mxu0 0
      %3379 = vmatprep.subr.bf16.mxu0 0
      %3380 = vmatpush2.bf16.msra.mxu0 %v3357
      %3381 = vmatprep.subr.bf16.mxu0 0
      %3382 = vmatpush2.bf16.msra.mxu0 %v3291
      %3383 = vmatprep.subr.bf16.mxu0 0
      %3384 = vmatpush2.bf16.msra.mxu0 %v3290
      %3385 = vmatprep.subr.bf16.mxu0 0
      %3386 = vmatpush2.bf16.msra.mxu0 %v3289
      %3387 = vmatprep.subr.bf16.mxu0 0
      %3388 = vmatpush2.bf16.msra.mxu0 %v3288
      %3389 = vmatprep.subr.bf16.mxu0 0
      %3390 = vmatpush2.bf16.msra.mxu0 %v3287
      %3391 = vmatprep.mubr.bf16.mxu0 %v3308
      %3392 = vmatmul.mubr.bf16.gmra.mxu0 %v3177
      %v3393 = vpop.f32.mrf.mxu0
      %v3394 = vadd.f32 %v3079, %v3393
      %v3395 = vpop.f32.mrf.mxu0
      %v3396 = vpop.f32.mrf.mxu0
      %v3397 = vadd.f32 %v3079, %v3396
      %v3398 = vpop.f32.mrf.mxu0
      %3399 = vmatprep.mubr.bf16.mxu0 %v3311
      %3400 = vmatmul.mubr.bf16.gmra.mxu0 %v3179
      %v3401 = vpop.f32.mrf.mxu0
      %v3402 = vadd.f32 %v3079, %v3401
      %v3403 = vpop.f32.mrf.mxu0
      %v3404 = vpop.f32.mrf.mxu0
      %v3405 = vadd.f32 %v3079, %v3404
      %v3406 = vpop.f32.mrf.mxu0
      %3407 = vmatprep.mubr.bf16.mxu0 %v3314
      %3408 = vmatmul.mubr.bf16.gmra.mxu0 %v3181
      %v3409 = vpop.f32.mrf.mxu0
      %v3410 = vadd.f32 %v3079, %v3409
      %v3411 = vpop.f32.mrf.mxu0
      %v3412 = vpop.f32.mrf.mxu0
      %v3413 = vadd.f32 %v3079, %v3412
      %v3414 = vpop.f32.mrf.mxu0
      %3415 = vmatprep.mubr.bf16.mxu0 %v3317
      %3416 = vmatmul.mubr.bf16.gmra.mxu0 %v3183
      %v3417 = vpop.f32.mrf.mxu0
      %v3418 = vadd.f32 %v3079, %v3417
      %v3419 = vpop.f32.mrf.mxu0
      %v3420 = vpop.f32.mrf.mxu0
      %v3421 = vadd.f32 %v3079, %v3420
      %v3422 = vpop.f32.mrf.mxu0
      %3423 = vmatprep.mubr.bf16.mxu0 %v3320
      %3424 = vmatmul.mubr.bf16.gmra.mxu0 %v3185
      %v3425 = vpop.f32.mrf.mxu0
      %v3426 = vadd.f32 %v3079, %v3425
      %v3427 = vpop.f32.mrf.mxu0
      %v3428 = vpop.f32.mrf.mxu0
      %v3429 = vadd.f32 %v3079, %v3428
      %v3430 = vpop.f32.mrf.mxu0
      %3431 = vmatprep.mubr.bf16.mxu0 %v3323
      %3432 = vmatmul.mubr.bf16.gmra.mxu0 %v3187
      %v3433 = vpop.f32.mrf.mxu0
      %v3434 = vadd.f32 %v3079, %v3433
      %v3435 = vpop.f32.mrf.mxu0
      %v3436 = vpop.f32.mrf.mxu0
      %v3437 = vadd.f32 %v3079, %v3436
      %v3438 = vpop.f32.mrf.mxu0
      %3439 = vmatprep.mubr.bf16.mxu0 %v3326
      %3440 = vmatmul.mubr.bf16.gmra.mxu0 %v3189
      %v3441 = vpop.f32.mrf.mxu0
      %v3442 = vadd.f32 %v3079, %v3441
      %v3443 = vpop.f32.mrf.mxu0
      %v3444 = vpop.f32.mrf.mxu0
      %v3445 = vadd.f32 %v3079, %v3444
      %v3446 = vpop.f32.mrf.mxu0
      %3447 = vmatprep.mubr.bf16.mxu0 %v3329
      %3448 = vmatmul.mubr.bf16.gmra.mxu0 %v3191
      %v3449 = vpop.f32.mrf.mxu0
      %v3450 = vadd.f32 %v3079, %v3449
      %v3451 = vpop.f32.mrf.mxu0
      %v3452 = vpop.f32.mrf.mxu0
      %v3453 = vadd.f32 %v3079, %v3452
      %v3454 = vpop.f32.mrf.mxu0
      %3455 = vmatprep.mubr.bf16.mxu0 %v3332
      %3456 = vmatmul.mubr.bf16.gmra.mxu0 %v3193
      %v3457 = vpop.f32.mrf.mxu0
      %v3458 = vadd.f32 %v3079, %v3457
      %v3459 = vpop.f32.mrf.mxu0
      %v3460 = vpop.f32.mrf.mxu0
      %v3461 = vadd.f32 %v3079, %v3460
      %v3462 = vpop.f32.mrf.mxu0
      %3463 = vmatprep.mubr.bf16.mxu0 %v3335
      %3464 = vmatmul.mubr.bf16.gmra.mxu0 %v3195
      %v3465 = vpop.f32.mrf.mxu0
      %v3466 = vadd.f32 %v3079, %v3465
      %v3467 = vpop.f32.mrf.mxu0
      %v3468 = vpop.f32.mrf.mxu0
      %v3469 = vadd.f32 %v3079, %v3468
      %v3470 = vpop.f32.mrf.mxu0
      %3471 = vmatprep.mubr.bf16.mxu0 %v3338
      %3472 = vmatmul.mubr.bf16.gmra.mxu0 %v3197
      %v3473 = vpop.f32.mrf.mxu0
      %v3474 = vadd.f32 %v3079, %v3473
      %v3475 = vpop.f32.mrf.mxu0
      %v3476 = vpop.f32.mrf.mxu0
      %v3477 = vadd.f32 %v3079, %v3476
      %v3478 = vpop.f32.mrf.mxu0
      %3479 = vmatprep.mubr.bf16.mxu0 %v3341
      %3480 = vmatmul.mubr.bf16.gmra.mxu0 %v3199
      %v3481 = vpop.f32.mrf.mxu0
      %v3482 = vadd.f32 %v3079, %v3481
      %v3483 = vpop.f32.mrf.mxu0
      %v3484 = vpop.f32.mrf.mxu0
      %v3485 = vadd.f32 %v3079, %v3484
      %v3486 = vpop.f32.mrf.mxu0
      %3487 = vmatprep.mubr.bf16.mxu0 %v3344
      %3488 = vmatmul.mubr.bf16.gmra.mxu0 %v3201
      %v3489 = vpop.f32.mrf.mxu0
      %v3490 = vadd.f32 %v3079, %v3489
      %v3491 = vpop.f32.mrf.mxu0
      %v3492 = vpop.f32.mrf.mxu0
      %v3493 = vadd.f32 %v3079, %v3492
      %v3494 = vpop.f32.mrf.mxu0
      %3495 = vmatprep.mubr.bf16.mxu0 %v3347
      %3496 = vmatmul.mubr.bf16.gmra.mxu0 %v3203
      %v3497 = vpop.f32.mrf.mxu0
      %v3498 = vadd.f32 %v3079, %v3497
      %v3499 = vpop.f32.mrf.mxu0
      %v3500 = vpop.f32.mrf.mxu0
      %v3501 = vadd.f32 %v3079, %v3500
      %v3502 = vpop.f32.mrf.mxu0
      %3503 = vmatprep.mubr.bf16.mxu0 %v3350
      %3504 = vmatmul.mubr.bf16.gmra.mxu0 %v3205
      %v3505 = vpop.f32.mrf.mxu0
      %v3506 = vadd.f32 %v3079, %v3505
      %v3507 = vpop.f32.mrf.mxu0
      %v3508 = vpop.f32.mrf.mxu0
      %v3509 = vadd.f32 %v3079, %v3508
      %v3510 = vpop.f32.mrf.mxu0
      %3511 = vmatprep.mubr.bf16.mxu0 %v3353
      %3512 = vmatmul.mubr.bf16.gmra.mxu0 %v3207
      %v3513 = vpop.f32.mrf.mxu0
      %v3514 = vadd.f32 %v3079, %v3513
      %v3515 = vpop.f32.mrf.mxu0
      %v3516 = vpop.f32.mrf.mxu0
      %v3517 = vadd.f32 %v3079, %v3516
      %v3518 = vpop.f32.mrf.mxu0
      %3519 = vdwg.mxu0
      %v3520 = vld [vmem:[%s394] sm:$0xff]
      %v3521 = vld [vmem:[%s394 + $0x8] sm:$0xff]
      %v3522 = vld [vmem:[%s394 + $0x10] sm:$0xff]
      %v3523 = vld [vmem:[%s394 + $0x18] sm:$0xff]
      %v3524 = vld [vmem:[%s394 + $0x20] sm:$0xff]
      %v3525 = vld [vmem:[%s394 + $0x28] sm:$0xff]
      %v3526 = vld [vmem:[%s394 + $0x30] sm:$0xff]
      %v3527 = vld [vmem:[%s394 + $0x38] sm:$0xff]
      %v3528 = vld [vmem:[%s394 + $0x40] sm:$0xff]
      %v3529 = vld [vmem:[%s394 + $0x48] sm:$0xff]
      %v3530 = vld [vmem:[%s394 + $0x50] sm:$0xff]
      %v3531 = vld [vmem:[%s394 + $0x58] sm:$0xff]
      %v3532 = vld [vmem:[%s394 + $0x60] sm:$0xff]
      %v3533 = vld [vmem:[%s394 + $0x68] sm:$0xff]
      %v3534 = vld [vmem:[%s394 + $0x70] sm:$0xff]
      %v3535 = vld [vmem:[%s394 + $0x78] sm:$0xff]
      %v3536 = vld [vmem:[%s394 + $0x80] sm:$0xff]
      %v3537 = vld [vmem:[%s394 + $0x88] sm:$0xff]
      %v3538 = vld [vmem:[%s394 + $0x90] sm:$0xff]
      %v3539 = vld [vmem:[%s394 + $0x98] sm:$0xff]
      %v3540 = vld [vmem:[%s394 + $0xa0] sm:$0xff]
      %v3541 = vld [vmem:[%s394 + $0xa8] sm:$0xff]
      %v3542 = vld [vmem:[%s394 + $0xb0] sm:$0xff]
      %v3543 = vld [vmem:[%s394 + $0xb8] sm:$0xff]
      %v3544 = vld [vmem:[%s394 + $0xc0] sm:$0xff]
      %v3545 = vld [vmem:[%s394 + $0xc8] sm:$0xff]
      %v3546 = vld [vmem:[%s394 + $0xd0] sm:$0xff]
      %v3547 = vld [vmem:[%s394 + $0xd8] sm:$0xff]
      %v3548 = vld [vmem:[%s394 + $0xe0] sm:$0xff]
      %v3549 = vld [vmem:[%s394 + $0xe8] sm:$0xff]
      %v3550 = vld [vmem:[%s394 + $0xf0] sm:$0xff]
      %v3551 = vld [vmem:[%s394 + $0xf8] sm:$0xff]
      %v3552 = vadd.f32 %v3394, %v3520
      %v3553 = vadd.f32 %v3397, %v3521
      %v3554 = vadd.f32 %v3402, %v3522
      %v3555 = vadd.f32 %v3405, %v3523
      %v3556 = vadd.f32 %v3410, %v3524
      %v3557 = vadd.f32 %v3413, %v3525
      %v3558 = vadd.f32 %v3418, %v3526
      %v3559 = vadd.f32 %v3421, %v3527
      %v3560 = vadd.f32 %v3426, %v3528
      %v3561 = vadd.f32 %v3429, %v3529
      %v3562 = vadd.f32 %v3434, %v3530
      %v3563 = vadd.f32 %v3437, %v3531
      %v3564 = vadd.f32 %v3442, %v3532
      %v3565 = vadd.f32 %v3445, %v3533
      %v3566 = vadd.f32 %v3450, %v3534
      %v3567 = vadd.f32 %v3453, %v3535
      %v3568 = vadd.f32 %v3458, %v3536
      %v3569 = vadd.f32 %v3461, %v3537
      %v3570 = vadd.f32 %v3466, %v3538
      %v3571 = vadd.f32 %v3469, %v3539
      %v3572 = vadd.f32 %v3474, %v3540
      %v3573 = vadd.f32 %v3477, %v3541
      %v3574 = vadd.f32 %v3482, %v3542
      %v3575 = vadd.f32 %v3485, %v3543
      %v3576 = vadd.f32 %v3490, %v3544
      %v3577 = vadd.f32 %v3493, %v3545
      %v3578 = vadd.f32 %v3498, %v3546
      %v3579 = vadd.f32 %v3501, %v3547
      %v3580 = vadd.f32 %v3506, %v3548
      %v3581 = vadd.f32 %v3509, %v3549
      %v3582 = vadd.f32 %v3514, %v3550
      %v3583 = vadd.f32 %v3517, %v3551
      %vm3584 = vcmask 392192
      %3585 = vst.msk [vmem:[%s404] sm:$0xff] %vm3584, %v3552
      %3586 = vst.msk [vmem:[%s404 + $0x8] sm:$0xff] %vm3584, %v3553
      %3587 = vst.msk [vmem:[%s404 + $0x10] sm:$0xff] %vm3584, %v3554
      %3588 = vst.msk [vmem:[%s404 + $0x18] sm:$0xff] %vm3584, %v3555
      %3589 = vst.msk [vmem:[%s404 + $0x20] sm:$0xff] %vm3584, %v3556
      %3590 = vst.msk [vmem:[%s404 + $0x28] sm:$0xff] %vm3584, %v3557
      %3591 = vst.msk [vmem:[%s404 + $0x30] sm:$0xff] %vm3584, %v3558
      %3592 = vst.msk [vmem:[%s404 + $0x38] sm:$0xff] %vm3584, %v3559
      %3593 = vst.msk [vmem:[%s404 + $0x40] sm:$0xff] %vm3584, %v3560
      %3594 = vst.msk [vmem:[%s404 + $0x48] sm:$0xff] %vm3584, %v3561
      %3595 = vst.msk [vmem:[%s404 + $0x50] sm:$0xff] %vm3584, %v3562
      %3596 = vst.msk [vmem:[%s404 + $0x58] sm:$0xff] %vm3584, %v3563
      %3597 = vst.msk [vmem:[%s404 + $0x60] sm:$0xff] %vm3584, %v3564
      %3598 = vst.msk [vmem:[%s404 + $0x68] sm:$0xff] %vm3584, %v3565
      %3599 = vst.msk [vmem:[%s404 + $0x70] sm:$0xff] %vm3584, %v3566
      %3600 = vst.msk [vmem:[%s404 + $0x78] sm:$0xff] %vm3584, %v3567
      %3601 = vst.msk [vmem:[%s404 + $0x80] sm:$0xff] %vm3584, %v3568
      %3602 = vst.msk [vmem:[%s404 + $0x88] sm:$0xff] %vm3584, %v3569
      %3603 = vst.msk [vmem:[%s404 + $0x90] sm:$0xff] %vm3584, %v3570
      %3604 = vst.msk [vmem:[%s404 + $0x98] sm:$0xff] %vm3584, %v3571
      %3605 = vst.msk [vmem:[%s404 + $0xa0] sm:$0xff] %vm3584, %v3572
      %3606 = vst.msk [vmem:[%s404 + $0xa8] sm:$0xff] %vm3584, %v3573
      %3607 = vst.msk [vmem:[%s404 + $0xb0] sm:$0xff] %vm3584, %v3574
      %3608 = vst.msk [vmem:[%s404 + $0xb8] sm:$0xff] %vm3584, %v3575
      %3609 = vst.msk [vmem:[%s404 + $0xc0] sm:$0xff] %vm3584, %v3576
      %3610 = vst.msk [vmem:[%s404 + $0xc8] sm:$0xff] %vm3584, %v3577
      %3611 = vst.msk [vmem:[%s404 + $0xd0] sm:$0xff] %vm3584, %v3578
      %3612 = vst.msk [vmem:[%s404 + $0xd8] sm:$0xff] %vm3584, %v3579
      %3613 = vst.msk [vmem:[%s404 + $0xe0] sm:$0xff] %vm3584, %v3580
      %3614 = vst.msk [vmem:[%s404 + $0xe8] sm:$0xff] %vm3584, %v3581
      %3615 = vst.msk [vmem:[%s404 + $0xf0] sm:$0xff] %vm3584, %v3582
      %3616 = vst.msk [vmem:[%s404 + $0xf8] sm:$0xff] %vm3584, %v3583
      %v3617 = vld [vmem:[#allocation2 + $0x8] sm:$0xff]
      %v3618 = vld [vmem:[#allocation2 + $0x10] sm:$0xff]
      %v3619 = vld [vmem:[#allocation2 + $0x18] sm:$0xff]
      %v3620 = vld [vmem:[#allocation2 + $0x20] sm:$0xff]
      %v3621 = vld [vmem:[#allocation2 + $0x28] sm:$0xff]
      %v3622 = vld [vmem:[#allocation2 + $0x30] sm:$0xff]
      %v3623 = vld [vmem:[#allocation2 + $0x38] sm:$0xff]
      %v3624 = vld [vmem:[#allocation2 + $0x40] sm:$0xff]
      %v3625 = vld [vmem:[#allocation2 + $0x48] sm:$0xff]
      %v3626 = vld [vmem:[#allocation2 + $0x50] sm:$0xff]
      %v3627 = vld [vmem:[#allocation2 + $0x58] sm:$0xff]
      %v3628 = vld [vmem:[#allocation2 + $0x60] sm:$0xff]
      %v3629 = vld [vmem:[#allocation2 + $0x68] sm:$0xff]
      %v3630 = vld [vmem:[#allocation2 + $0x70] sm:$0xff]
      %v3631 = vld [vmem:[#allocation2 + $0x78] sm:$0xff]
      %v3632 = vld [vmem:[#allocation2 + $0x80] sm:$0xff]
      %v3633 = vld [vmem:[#allocation2 + $0x88] sm:$0xff]
      %v3634 = vld [vmem:[#allocation2 + $0x90] sm:$0xff]
      %v3635 = vld [vmem:[#allocation2 + $0x98] sm:$0xff]
      %v3636 = vld [vmem:[#allocation2 + $0xa0] sm:$0xff]
      %v3637 = vld [vmem:[#allocation2 + $0xa8] sm:$0xff]
      %v3638 = vld [vmem:[#allocation2 + $0xb0] sm:$0xff]
      %v3639 = vld [vmem:[#allocation2 + $0xb8] sm:$0xff]
      %v3640 = vld [vmem:[#allocation2 + $0xc0] sm:$0xff]
      %v3641 = vld [vmem:[#allocation2 + $0xc8] sm:$0xff]
      %v3642 = vld [vmem:[#allocation2 + $0xd0] sm:$0xff]
      %v3643 = vld [vmem:[#allocation2 + $0xd8] sm:$0xff]
      %v3644 = vld [vmem:[#allocation2 + $0xe0] sm:$0xff]
      %v3645 = vld [vmem:[#allocation2 + $0xe8] sm:$0xff]
      %v3646 = vld [vmem:[#allocation2 + $0xf0] sm:$0xff]
      %v3647 = vld [vmem:[#allocation2 + $0xf8] sm:$0xff]
      %v3648 = vld [vmem:[#allocation2 + $0x100] sm:$0xff]
      %v3649 = vpack.c.bf16 %v3618, %v3617
      %v3650 = vpack.c.bf16 %v3620, %v3619
      %v3651 = vpack.c.bf16 %v3622, %v3621
      %v3652 = vpack.c.bf16 %v3624, %v3623
      %v3653 = vpack.c.bf16 %v3626, %v3625
      %v3654 = vpack.c.bf16 %v3628, %v3627
      %v3655 = vpack.c.bf16 %v3630, %v3629
      %v3656 = vpack.c.bf16 %v3632, %v3631
      %v3657 = vpack.c.bf16 %v3634, %v3633
      %v3658 = vpack.c.bf16 %v3636, %v3635
      %v3659 = vpack.c.bf16 %v3638, %v3637
      %v3660 = vpack.c.bf16 %v3640, %v3639
      %v3661 = vpack.c.bf16 %v3642, %v3641
      %v3662 = vpack.c.bf16 %v3644, %v3643
      %v3663 = vpack.c.bf16 %v3646, %v3645
      %v3664 = vpack.c.bf16 %v3648, %v3647
      %v3665 = vld [vmem:[%s6] sm:$0xf]
      %v3666 = vld [vmem:[%s6 + $0x4] sm:$0xf]
      %v3667 = vld [vmem:[%s6 + $0x8] sm:$0xf]
      %v3669 = vlaneseq
      %v3670 = vshrl.u32 %v3669, 7
      %v3671 = vsub.s32 0, %v3670
      %v3672 = vrot.slane %v421, %v3671
      %v3677 = vunpack.c.l.b16 %v3665
      %v3678 = vunpack.c.l.b16 %v3666
      %v3679 = vunpack.c.l.b16 %v3667
      %v3680 = vpack.c.b16 %v3678, %v3677
      %v3681 = vpack.c.b16 %v3679, %v3679
      %v3684 = vsel %vm627, %v3649, 0
      %v3687 = vsel %vm627, %v3650, 0
      %v3690 = vsel %vm627, %v3651, 0
      %v3693 = vsel %vm627, %v3652, 0
      %v3696 = vsel %vm627, %v3653, 0
      %v3699 = vsel %vm627, %v3654, 0
      %v3702 = vsel %vm627, %v3655, 0
      %v3705 = vsel %vm627, %v3656, 0
      %v3708 = vsel %vm627, %v3657, 0
      %v3711 = vsel %vm627, %v3658, 0
      %v3714 = vsel %vm627, %v3659, 0
      %v3717 = vsel %vm627, %v3660, 0
      %v3720 = vsel %vm627, %v3661, 0
      %v3723 = vsel %vm627, %v3662, 0
      %v3726 = vsel %vm627, %v3663, 0
      %v3729 = vsel %vm627, %v3664, 0
      %v3732 = vsel %vm3355, %v3681, 0
      %3734 = vmatprep.subr.bf16.mxu0 0
      %3735 = vmatpush1.bf16.msra.mxu0 0
      %3736 = vmatprep.subr.bf16.mxu0 0
      %3737 = vmatpush1.bf16.msra.mxu0 0
      %3738 = vmatprep.subr.bf16.mxu0 0
      %3739 = vmatpush1.bf16.msra.mxu0 0
      %3740 = vmatprep.subr.bf16.mxu0 0
      %3741 = vmatpush1.bf16.msra.mxu0 0
      %3742 = vmatprep.subr.bf16.mxu0 0
      %3743 = vmatpush1.bf16.msra.mxu0 0
      %3744 = vmatprep.subr.bf16.mxu0 0
      %3745 = vmatpush1.bf16.msra.mxu0 0
      %3746 = vmatprep.subr.bf16.mxu0 0
      %3747 = vmatpush1.bf16.msra.mxu0 %v3732
      %3748 = vmatprep.subr.bf16.mxu0 0
      %3749 = vmatpush1.bf16.msra.mxu0 %v3680
      %3750 = vmatprep.subr.bf16.mxu0 0
      %3751 = vmatpush2.bf16.msra.mxu0 0
      %3752 = vmatprep.subr.bf16.mxu0 0
      %3753 = vmatpush2.bf16.msra.mxu0 0
      %3754 = vmatprep.subr.bf16.mxu0 0
      %3755 = vmatpush2.bf16.msra.mxu0 0
      %3756 = vmatprep.subr.bf16.mxu0 0
      %3757 = vmatpush2.bf16.msra.mxu0 0
      %3758 = vmatprep.subr.bf16.mxu0 0
      %3759 = vmatpush2.bf16.msra.mxu0 0
      %3760 = vmatprep.subr.bf16.mxu0 0
      %3761 = vmatpush2.bf16.msra.mxu0 0
      %3762 = vmatprep.subr.bf16.mxu0 0
      %3763 = vmatpush2.bf16.msra.mxu0 0
      %3764 = vmatprep.subr.bf16.mxu0 0
      %3765 = vmatpush2.bf16.msra.mxu0 0
      %3766 = vmatprep.mubr.bf16.mxu0 0
      %3767 = vmatmul.mubr.bf16.gmra.mxu0 %v3684
      %v3768 = vpop.f32.mrf.mxu0
      %v3769 = vadd.f32 %v3672, %v3768
      %v3770 = vpop.f32.mrf.mxu0
      %v3771 = vpop.f32.mrf.mxu0
      %v3772 = vadd.f32 %v3672, %v3771
      %v3773 = vpop.f32.mrf.mxu0
      %3774 = vmatprep.mubr.bf16.mxu0 0
      %3775 = vmatmul.mubr.bf16.gmra.mxu0 %v3687
      %v3776 = vpop.f32.mrf.mxu0
      %v3777 = vadd.f32 %v3672, %v3776
      %v3778 = vpop.f32.mrf.mxu0
      %v3779 = vpop.f32.mrf.mxu0
      %v3780 = vadd.f32 %v3672, %v3779
      %v3781 = vpop.f32.mrf.mxu0
      %3782 = vmatprep.mubr.bf16.mxu0 0
      %3783 = vmatmul.mubr.bf16.gmra.mxu0 %v3690
      %v3784 = vpop.f32.mrf.mxu0
      %v3785 = vadd.f32 %v3672, %v3784
      %v3786 = vpop.f32.mrf.mxu0
      %v3787 = vpop.f32.mrf.mxu0
      %v3788 = vadd.f32 %v3672, %v3787
      %v3789 = vpop.f32.mrf.mxu0
      %3790 = vmatprep.mubr.bf16.mxu0 0
      %3791 = vmatmul.mubr.bf16.gmra.mxu0 %v3693
      %v3792 = vpop.f32.mrf.mxu0
      %v3793 = vadd.f32 %v3672, %v3792
      %v3794 = vpop.f32.mrf.mxu0
      %v3795 = vpop.f32.mrf.mxu0
      %v3796 = vadd.f32 %v3672, %v3795
      %v3797 = vpop.f32.mrf.mxu0
      %3798 = vmatprep.mubr.bf16.mxu0 0
      %3799 = vmatmul.mubr.bf16.gmra.mxu0 %v3696
      %v3800 = vpop.f32.mrf.mxu0
      %v3801 = vadd.f32 %v3672, %v3800
      %v3802 = vpop.f32.mrf.mxu0
      %v3803 = vpop.f32.mrf.mxu0
      %v3804 = vadd.f32 %v3672, %v3803
      %v3805 = vpop.f32.mrf.mxu0
      %3806 = vmatprep.mubr.bf16.mxu0 0
      %3807 = vmatmul.mubr.bf16.gmra.mxu0 %v3699
      %v3808 = vpop.f32.mrf.mxu0
      %v3809 = vadd.f32 %v3672, %v3808
      %v3810 = vpop.f32.mrf.mxu0
      %v3811 = vpop.f32.mrf.mxu0
      %v3812 = vadd.f32 %v3672, %v3811
      %v3813 = vpop.f32.mrf.mxu0
      %3814 = vmatprep.mubr.bf16.mxu0 0
      %3815 = vmatmul.mubr.bf16.gmra.mxu0 %v3702
      %v3816 = vpop.f32.mrf.mxu0
      %v3817 = vadd.f32 %v3672, %v3816
      %v3818 = vpop.f32.mrf.mxu0
      %v3819 = vpop.f32.mrf.mxu0
      %v3820 = vadd.f32 %v3672, %v3819
      %v3821 = vpop.f32.mrf.mxu0
      %3822 = vmatprep.mubr.bf16.mxu0 0
      %3823 = vmatmul.mubr.bf16.gmra.mxu0 %v3705
      %v3824 = vpop.f32.mrf.mxu0
      %v3825 = vadd.f32 %v3672, %v3824
      %v3826 = vpop.f32.mrf.mxu0
      %v3827 = vpop.f32.mrf.mxu0
      %v3828 = vadd.f32 %v3672, %v3827
      %v3829 = vpop.f32.mrf.mxu0
      %3830 = vmatprep.mubr.bf16.mxu0 0
      %3831 = vmatmul.mubr.bf16.gmra.mxu0 %v3708
      %v3832 = vpop.f32.mrf.mxu0
      %v3833 = vadd.f32 %v3672, %v3832
      %v3834 = vpop.f32.mrf.mxu0
      %v3835 = vpop.f32.mrf.mxu0
      %v3836 = vadd.f32 %v3672, %v3835
      %v3837 = vpop.f32.mrf.mxu0
      %3838 = vmatprep.mubr.bf16.mxu0 0
      %3839 = vmatmul.mubr.bf16.gmra.mxu0 %v3711
      %v3840 = vpop.f32.mrf.mxu0
      %v3841 = vadd.f32 %v3672, %v3840
      %v3842 = vpop.f32.mrf.mxu0
      %v3843 = vpop.f32.mrf.mxu0
      %v3844 = vadd.f32 %v3672, %v3843
      %v3845 = vpop.f32.mrf.mxu0
      %3846 = vmatprep.mubr.bf16.mxu0 0
      %3847 = vmatmul.mubr.bf16.gmra.mxu0 %v3714
      %v3848 = vpop.f32.mrf.mxu0
      %v3849 = vadd.f32 %v3672, %v3848
      %v3850 = vpop.f32.mrf.mxu0
      %v3851 = vpop.f32.mrf.mxu0
      %v3852 = vadd.f32 %v3672, %v3851
      %v3853 = vpop.f32.mrf.mxu0
      %3854 = vmatprep.mubr.bf16.mxu0 0
      %3855 = vmatmul.mubr.bf16.gmra.mxu0 %v3717
      %v3856 = vpop.f32.mrf.mxu0
      %v3857 = vadd.f32 %v3672, %v3856
      %v3858 = vpop.f32.mrf.mxu0
      %v3859 = vpop.f32.mrf.mxu0
      %v3860 = vadd.f32 %v3672, %v3859
      %v3861 = vpop.f32.mrf.mxu0
      %3862 = vmatprep.mubr.bf16.mxu0 0
      %3863 = vmatmul.mubr.bf16.gmra.mxu0 %v3720
      %v3864 = vpop.f32.mrf.mxu0
      %v3865 = vadd.f32 %v3672, %v3864
      %v3866 = vpop.f32.mrf.mxu0
      %v3867 = vpop.f32.mrf.mxu0
      %v3868 = vadd.f32 %v3672, %v3867
      %v3869 = vpop.f32.mrf.mxu0
      %3870 = vmatprep.mubr.bf16.mxu0 0
      %3871 = vmatmul.mubr.bf16.gmra.mxu0 %v3723
      %v3872 = vpop.f32.mrf.mxu0
      %v3873 = vadd.f32 %v3672, %v3872
      %v3874 = vpop.f32.mrf.mxu0
      %v3875 = vpop.f32.mrf.mxu0
      %v3876 = vadd.f32 %v3672, %v3875
      %v3877 = vpop.f32.mrf.mxu0
      %3878 = vmatprep.mubr.bf16.mxu0 0
      %3879 = vmatmul.mubr.bf16.gmra.mxu0 %v3726
      %v3880 = vpop.f32.mrf.mxu0
      %v3881 = vadd.f32 %v3672, %v3880
      %v3882 = vpop.f32.mrf.mxu0
      %v3883 = vpop.f32.mrf.mxu0
      %v3884 = vadd.f32 %v3672, %v3883
      %v3885 = vpop.f32.mrf.mxu0
      %3886 = vmatprep.mubr.bf16.mxu0 0
      %3887 = vmatmul.mubr.bf16.gmra.mxu0 %v3729
      %v3888 = vpop.f32.mrf.mxu0
      %v3889 = vadd.f32 %v3672, %v3888
      %v3890 = vpop.f32.mrf.mxu0
      %v3891 = vpop.f32.mrf.mxu0
      %v3892 = vadd.f32 %v3672, %v3891
      %v3893 = vpop.f32.mrf.mxu0
      %3894 = vdwg.mxu0
      %3895 = vst.msk [vmem:[%s414] sm:$0xff] %vm3584, %v3769
      %3896 = vst.msk [vmem:[%s414 + $0x8] sm:$0xff] %vm3584, %v3772
      %3897 = vst.msk [vmem:[%s414 + $0x10] sm:$0xff] %vm3584, %v3777
      %3898 = vst.msk [vmem:[%s414 + $0x18] sm:$0xff] %vm3584, %v3780
      %3899 = vst.msk [vmem:[%s414 + $0x20] sm:$0xff] %vm3584, %v3785
      %3900 = vst.msk [vmem:[%s414 + $0x28] sm:$0xff] %vm3584, %v3788
      %3901 = vst.msk [vmem:[%s414 + $0x30] sm:$0xff] %vm3584, %v3793
      %3902 = vst.msk [vmem:[%s414 + $0x38] sm:$0xff] %vm3584, %v3796
      %3903 = vst.msk [vmem:[%s414 + $0x40] sm:$0xff] %vm3584, %v3801
      %3904 = vst.msk [vmem:[%s414 + $0x48] sm:$0xff] %vm3584, %v3804
      %3905 = vst.msk [vmem:[%s414 + $0x50] sm:$0xff] %vm3584, %v3809
      %3906 = vst.msk [vmem:[%s414 + $0x58] sm:$0xff] %vm3584, %v3812
      %3907 = vst.msk [vmem:[%s414 + $0x60] sm:$0xff] %vm3584, %v3817
      %3908 = vst.msk [vmem:[%s414 + $0x68] sm:$0xff] %vm3584, %v3820
      %3909 = vst.msk [vmem:[%s414 + $0x70] sm:$0xff] %vm3584, %v3825
      %3910 = vst.msk [vmem:[%s414 + $0x78] sm:$0xff] %vm3584, %v3828
      %3911 = vst.msk [vmem:[%s414 + $0x80] sm:$0xff] %vm3584, %v3833
      %3912 = vst.msk [vmem:[%s414 + $0x88] sm:$0xff] %vm3584, %v3836
      %3913 = vst.msk [vmem:[%s414 + $0x90] sm:$0xff] %vm3584, %v3841
      %3914 = vst.msk [vmem:[%s414 + $0x98] sm:$0xff] %vm3584, %v3844
      %3915 = vst.msk [vmem:[%s414 + $0xa0] sm:$0xff] %vm3584, %v3849
      %3916 = vst.msk [vmem:[%s414 + $0xa8] sm:$0xff] %vm3584, %v3852
      %3917 = vst.msk [vmem:[%s414 + $0xb0] sm:$0xff] %vm3584, %v3857
      %3918 = vst.msk [vmem:[%s414 + $0xb8] sm:$0xff] %vm3584, %v3860
      %3919 = vst.msk [vmem:[%s414 + $0xc0] sm:$0xff] %vm3584, %v3865
      %3920 = vst.msk [vmem:[%s414 + $0xc8] sm:$0xff] %vm3584, %v3868
      %3921 = vst.msk [vmem:[%s414 + $0xd0] sm:$0xff] %vm3584, %v3873
      %3922 = vst.msk [vmem:[%s414 + $0xd8] sm:$0xff] %vm3584, %v3876
      %3923 = vst.msk [vmem:[%s414 + $0xe0] sm:$0xff] %vm3584, %v3881
      %3924 = vst.msk [vmem:[%s414 + $0xe8] sm:$0xff] %vm3584, %v3884
      %3925 = vst.msk [vmem:[%s414 + $0xf0] sm:$0xff] %vm3584, %v3889
      %3926 = vst.msk [vmem:[%s414 + $0xf8] sm:$0xff] %vm3584, %v3892
      %s3927 = smul.u32 32, %s26
      %p3928 = scmp.lt.s32.totalorder %s25, 1
      %s3929 = scalar_select %p3928, %s25, 1
      %p3930 = scmp.lt.s32.totalorder %s3927, 63
      %s3931 = scalar_select %p3930, %s3927, 63
      %s3932 = smul.addr %s3929, 64
      %s3933 = sadd.s32 %s3931, %s3932
      %s3934 = smul.addr %s3933, 8
      %s3935 = scalar_lea.vmem %s8, %s3934
      %s3936 = smul.u32 32, %s26
      %p3937 = scmp.lt.s32.totalorder %s25, 1
      %s3938 = scalar_select %p3937, %s25, 1
      %p3939 = scmp.lt.s32.totalorder %s3936, 63
      %s3940 = scalar_select %p3939, %s3936, 63
      %s3941 = smul.addr %s3938, 64
      %s3942 = sadd.s32 %s3940, %s3941
      %s3943 = smul.addr %s3942, 8
      %s3944 = scalar_lea.vmem %s9, %s3943
      // Predicated region
      $region69: #{tpu_custom_call.1} parent=51 // pred_check
        %p3945 = pneg %p233
      $region70: #{tpu_custom_call.1} parent=51 // pred_check_branch
        %3947 = sbr.rel (%p3945) target = $region72
      $region71: #{tpu_custom_call.1} parent=51 // pred_region
        %s3948 = smul.u32 32, %s26
      $region72: #{tpu_custom_call.1} parent=51 // pred_fallthru
        _
      // Predicated region
      $region73: #{tpu_custom_call.1} parent=51 // pred_check
        %p3949 = pneg %p261
      $region74: #{tpu_custom_call.1} parent=51 // pred_check_branch
        %3951 = sbr.rel (%p3949) target = $region76
      $region75: #{tpu_custom_call.1} parent=51 // pred_region
        %s3952 = smul.u32 32, %s26
      $region76: #{tpu_custom_call.1} parent=51 // pred_fallthru
        _
    $region52: #{tpu_custom_call.1} parent=5 // pred_fallthru
      _
    %p3953 = scmp.le.s32.totalorder 2, %s16
    // Predicated region
    $region77: #{tpu_custom_call.1} parent=5 // pred_check
      %p3954 = pneg %p3953
    $region78: #{tpu_custom_call.1} parent=5 // pred_check_branch
      %3956 = sbr.rel (%p3954) target = $region80
    $region79: #{tpu_custom_call.1} parent=5 // pred_region
      %s3957 = ssub.s32 %s16, 2
      // Predicated region
      $region81: #{tpu_custom_call.1} parent=79 // pred_check
        %p3958 = pneg %p239
      $region82: #{tpu_custom_call.1} parent=79 // pred_check_branch
        %3960 = sbr.rel (%p3958) target = $region84
      $region83: #{tpu_custom_call.1} parent=79 // pred_region
        %s3961 = smul.u32 32, %s28
        %p3962 = scmp.lt.s32.totalorder %s27, 1
        %s3963 = scalar_select %p3962, %s27, 1
        %p3964 = scmp.lt.s32.totalorder %s3961, 63
        %s3965 = scalar_select %p3964, %s3961, 63
        %s3966 = smul.addr %s3963, 64
        %s3967 = sadd.s32 %s3965, %s3966
        %s3968 = smul.addr %s3967, 8
        %s3969 = scalar_lea.vmem %s8, %s3968
      $region84: #{tpu_custom_call.1} parent=79 // pred_fallthru
        _
      // Predicated region
      $region85: #{tpu_custom_call.1} parent=79 // pred_check
        %p3970 = pneg %p267
      $region86: #{tpu_custom_call.1} parent=79 // pred_check_branch
        %3972 = sbr.rel (%p3970) target = $region88
      $region87: #{tpu_custom_call.1} parent=79 // pred_region
        %s3973 = smul.u32 32, %s28
        %p3974 = scmp.lt.s32.totalorder %s27, 1
        %s3975 = scalar_select %p3974, %s27, 1
        %p3976 = scmp.lt.s32.totalorder %s3973, 63
        %s3977 = scalar_select %p3976, %s3973, 63
        %s3978 = smul.addr %s3975, 64
        %s3979 = sadd.s32 %s3977, %s3978
        %s3980 = smul.addr %s3979, 8
        %s3981 = scalar_lea.vmem %s9, %s3980
      $region88: #{tpu_custom_call.1} parent=79 // pred_fallthru
        _
    $region80: #{tpu_custom_call.1} parent=5 // pred_fallthru
      _
  $region6: #{tpu_custom_call.1} parent=0 // loop_footer
    %s20 = sadd.s32 1, %s16
  $region7: #{tpu_custom_call.1} parent=0 // loop_footer_branch
    %15 = sbr.rel target = $region3
  $region8: #{tpu_custom_call.1} parent=0 // loop_exit
    _

</llo_original>
